<compile_context>
chip_gen: v6e
topology: v6e:2x2x1
jax: 0.10.0
libtpu: 0.0.40
codegen_flags: <defaults>
</compile_context>

<pallas_src>
import functools

import jax
import jax.numpy as jnp
import numpy as np
from jax import lax
from jax.experimental import pallas as pl
from jax.experimental.pallas import tpu as pltpu


def _round_up(x, m):
    return ((x + m - 1) // m) * m


# ---------------------------------------------------------------------------
# Fused Pallas kernel (whole DenseASPP block, one batch image per grid step)
# ---------------------------------------------------------------------------

def _dense_aspp_kernel(x_ref, mask_ref, *rest, cfg):
    """rest = [packed_w_0..packed_w_{L-1}, shifts_all, w1, out, slab_scratch]

    x_ref      : (in_ch, L)       input image already laid out in slab columns
                                  (shared-gap rows + zero halos), channels first.
    packed_w_i : (growth, n_taps_i*cin_i)  tap-stacked, BN-scale-folded weights.
    shifts_all : (num_layers*growth + out_ch, 1) folded-BN shifts (1x1 bias too).
    w1         : (out_ch, c_total)         BN-scale-folded 1x1 weights.
    out        : (out_ch, HWp)             lane-dense flat output.
    slab       : (c_total, L)              persistent VMEM dense-concat slab.
    """
    (q0, HWp, L, in_ch, growth, num_layers, out_ch,
     layer_shifts, needs_mask) = cfg
    c_total = in_ch + num_layers * growth

    layer_w_refs = rest[:num_layers]
    shifts_ref = rest[num_layers]
    w1_ref = rest[num_layers + 1]
    o_ref = rest[num_layers + 2]
    slab = rest[num_layers + 3]

    # Zero ONLY the top/bottom halo columns of the growth bands: they are the
    # conv zero-padding for every layer's vertical taps.  Rows 0:in_ch are
    # fully overwritten by the pre-padded input below; each growth band's
    # interior [q0, q0+HWp) is fully overwritten before any later layer reads
    # it.  (Do not gate behind program_id==0 — batch axis is core-parallel.)
    if q0 > 0:
        slab[in_ch:c_total, 0:q0] = jnp.zeros((c_total - in_ch, q0), slab.dtype)
    if L > q0 + HWp:
        slab[in_ch:c_total, q0 + HWp:L] = jnp.zeros(
            (c_total - in_ch, L - (q0 + HWp)), slab.dtype)

    # Drop the pre-padded input channels in with one wide aligned store.
    slab[0:in_ch, :] = x_ref[...].astype(slab.dtype)

    col_mask = mask_ref[...]                 # (1, HWp): 1.0 on real image cols

    cin = in_ch
    for i in range(num_layers):
        shifts = layer_shifts[i]             # static flat offsets of live taps
        # Stack all live-tap shifted views of the slab along K and do ONE
        # large-K matmul per layer (dilated 3x3 conv == (growth, K) @ (K, HWp)).
        if len(shifts) == 1 and shifts[0] == 0:
            k_op = slab[0:cin, q0:q0 + HWp]                 # aligned centre tap
        else:
            k_op = jnp.concatenate(
                [slab[0:cin, q0 + sh:q0 + sh + HWp] for sh in shifts], axis=0)
        acc = jnp.dot(layer_w_refs[i][...], k_op,
                      preferred_element_type=jnp.float32)
        # BN scale is folded into the weights; only the shift add remains.
        b = shifts_ref[i * growth:(i + 1) * growth, :]
        y = jnp.maximum(acc + b, 0.0)
        if needs_mask[i]:
            # Zero the gap columns only when a later layer's dc!=0 tap reads
            # this band; otherwise the garbage stays in cropped pad columns.
            y = y * col_mask
        # Lane-aligned, sublane-aligned 8-row band store into the slab.
        slab[cin:cin + growth, q0:q0 + HWp] = y
        cin += growth

    # Final 1x1 conv (+ folded bias/BN scale) + ReLU over the full concat slab.
    b1 = shifts_ref[num_layers * growth:num_layers * growth + out_ch, :]
    y = jnp.dot(w1_ref[...], slab[0:c_total, q0:q0 + HWp],
                preferred_element_type=jnp.float32)
    o_ref[...] = jnp.maximum(y + b1, 0.0).astype(o_ref.dtype)


# ---------------------------------------------------------------------------
# Wrapper: static tap planning, slab layout, weight packing, grid over batch
# ---------------------------------------------------------------------------

def dense_aspp_forward(x_nchw, params):
    """Equivalent of DenseASPP.forward (BatchNorm in eval mode). NCHW in/out."""
    N, in_ch, H, W = x_nchw.shape
    layers = params["layers"]                       # (w_oihw, scale, shift, d)
    num_layers = len(layers)
    growth = layers[0][0].shape[0]
    out_ch = params["w1x1"].shape[0]
    c_total = in_ch + num_layers * growth
    dils = [l[3] for l in layers]

    # ---- static live-tap planning (taps entirely inside the zero padding are
    # dropped exactly: for d >= H and d >= W only the centre tap survives) ----
    live_taps = []
    for d in dils:
        taps = [(kh, kw) for kh in range(3) for kw in range(3)
                if abs((kh - 1) * d) < H and abs((kw - 1) * d) < W]
        live_taps.append(tuple(taps))
    dr_max = max((abs((kh - 1) * d) for taps, d in zip(live_taps, dils)
                  for kh, _ in taps), default=0)
    dc_max = max((abs((kw - 1) * d) for taps, d in zip(live_taps, dils)
                  for _, kw in taps), default=0)

    # ---- shared-gap, lane-aligned slab layout ------------------------------
    # Each image row is [dc_max zero gap | W real | small round-up margin];
    # adjacent rows share the gap (positive-dc edge reads wrap into the next
    # row's gap).  q0 (start of the image band) is rounded up to a lane
    # boundary so band stores / centre reads / the 1x1 read are aligned.
    off_c = dc_max
    Wp = _round_up(W + off_c, 8)                    # row pitch
    HWp = H * Wp                                    # flat image-band extent
    q0 = _round_up(dr_max * Wp + dc_max, 128)       # aligned band start
    L = _round_up(q0 + HWp + dr_max * Wp + dc_max, 128)   # total slab columns

    layer_shifts = tuple(
        tuple((kh - 1) * d * Wp + (kw - 1) * d for kh, kw in taps)
        for taps, d in zip(live_taps, dils))
    # A band needs its gap columns zeroed only if a LATER layer reads it with a
    # horizontally shifted (dc != 0) tap; the 1x1 only reads real columns that
    # survive the wrapper crop.
    needs_mask = tuple(
        any((kw - 1) * dils[j] != 0 for j in range(i + 1, num_layers)
            for _, kw in live_taps[j])
        for i in range(num_layers))

    # ---- weight packing: fold BN scale, stack live taps along K ------------
    packed_w = []
    for (w, scale, _shift, _d), taps in zip(layers, live_taps):
        w_s = w * scale[:, None, None, None]        # fold BN scale into weights
        packed_w.append(jnp.concatenate(
            [w_s[:, :, kh, kw] for kh, kw in taps], axis=1))  # (growth, taps*cin)
    w1s = params["w1x1"] * params["scale1x1"][:, None]        # (out_ch, c_total)
    # One stacked shift vector: per-layer BN shifts then the 1x1 shift (bias
    # already folded into it in make_params).
    shifts_all = jnp.concatenate(
        [l[2] for l in layers] + [params["shift1x1"]]).reshape(-1, 1)

    # ---- input laid out directly in slab columns (zeros are the conv pad) ---
    xr = jnp.pad(x_nchw, ((0, 0), (0, 0), (0, 0), (off_c, Wp - off_c - W)))
    x_slab = jnp.pad(xr.reshape(N, in_ch, HWp),
                     ((0, 0), (0, 0), (q0, L - q0 - HWp)))    # (N, in_ch, L)

    # Static 0/1 mask over the flat image band: 1 on real image columns.
    colmask = np.zeros((1, HWp), np.float32)
    for r in range(H):
        colmask[0, r * Wp + off_c:r * Wp + off_c + W] = 1.0
    colmask = jnp.asarray(colmask)

    cfg = (q0, HWp, L, in_ch, growth, num_layers, out_ch,
           layer_shifts, needs_mask)
    kernel = functools.partial(_dense_aspp_kernel, cfg=cfg)

    inputs = [x_slab, colmask] + packed_w + [shifts_all, w1s]
    in_specs = [
        pl.BlockSpec((None, in_ch, L), lambda n: (n, 0, 0)),
        pl.BlockSpec((1, HWp), lambda n: (0, 0)),
    ]
    for wt in packed_w:
        in_specs.append(pl.BlockSpec(wt.shape, lambda n: (0, 0)))
    in_specs.append(pl.BlockSpec(shifts_all.shape, lambda n: (0, 0)))
    in_specs.append(pl.BlockSpec(w1s.shape, lambda n: (0, 0)))

    out_flat = pl.pallas_call(
        kernel,
        out_shape=jax.ShapeDtypeStruct((N, out_ch, HWp), x_nchw.dtype),
        grid=(N,),
        in_specs=in_specs,
        out_specs=pl.BlockSpec((None, out_ch, HWp), lambda n: (n, 0, 0)),
        scratch_shapes=[pltpu.VMEM((c_total, L), jnp.float32)],
        compiler_params=pltpu.CompilerParams(
            dimension_semantics=("parallel",)),
    )(*inputs)

    # Crop the shared-gap columns (layout plumbing on a tiny tensor).
    out = out_flat.reshape(N, out_ch, H, Wp)[:, :, :, off_c:off_c + W]
    return out


# ---------------------------------------------------------------------------
# Plain-JAX reference (for correctness check)
# ---------------------------------------------------------------------------

def dense_aspp_reference(x_nchw, params):
    feats = [x_nchw]
    for (w, scale, shift, d) in params["layers"]:
        xin = jnp.concatenate(feats, axis=1)
        y = lax.conv_general_dilated(
            xin, w, window_strides=(1, 1), padding=((d, d), (d, d)),
            rhs_dilation=(d, d),
            dimension_numbers=("NCHW", "OIHW", "NCHW"))
        y = jnp.maximum(y * scale[None, :, None, None]
                        + shift[None, :, None, None], 0.0)
        feats.append(y)
    xcat = jnp.concatenate(feats, axis=1)
    y = jnp.einsum("oc,nchw->nohw", params["w1x1"], xcat)
    y = jnp.maximum(y * params["scale1x1"][None, :, None, None]
                    + params["shift1x1"][None, :, None, None], 0.0)
    return y


# ---------------------------------------------------------------------------
# Deterministic synthetic parameters (shapes per DenseASPP.__init__)
# ---------------------------------------------------------------------------

def make_params(key, in_channels, growth_rate, num_layers, dilation_rates,
                eps=1e-5):
    keys = iter(jax.random.split(key, 8 * num_layers + 8))
    layers = []
    for i in range(num_layers):
        cin = in_channels + i * growth_rate
        # PyTorch-layout (Cout, Cin, 3, 3), no bias.
        w = 0.1 * jax.random.normal(next(keys), (growth_rate, cin, 3, 3),
                                    jnp.float32)
        gamma = jax.random.uniform(next(keys), (growth_rate,), jnp.float32,
                                   0.5, 1.5)
        beta = 0.1 * jax.random.normal(next(keys), (growth_rate,), jnp.float32)
        mean = 0.1 * jax.random.normal(next(keys), (growth_rate,), jnp.float32)
        var = jax.random.uniform(next(keys), (growth_rate,), jnp.float32,
                                 0.5, 1.5)
        scale = gamma / jnp.sqrt(var + eps)
        shift = beta - mean * scale
        layers.append((w, scale, shift, dilation_rates[i]))

    cin_total = in_channels + num_layers * growth_rate
    w1 = 0.1 * jax.random.normal(next(keys), (in_channels, cin_total),
                                 jnp.float32)                  # (out, in)
    bias1 = 0.1 * jax.random.normal(next(keys), (in_channels,), jnp.float32)
    gamma = jax.random.uniform(next(keys), (in_channels,), jnp.float32,
                               0.5, 1.5)
    beta = 0.1 * jax.random.normal(next(keys), (in_channels,), jnp.float32)
    mean = 0.1 * jax.random.normal(next(keys), (in_channels,), jnp.float32)
    var = jax.random.uniform(next(keys), (in_channels,), jnp.float32, 0.5, 1.5)
    scale1 = gamma / jnp.sqrt(var + eps)
    # fold conv bias into the BN shift: (x@w + b)*s + sh == x@w*s + (b*s + sh)
    shift1 = (beta - mean * scale1) + bias1 * scale1
    return {"layers": layers, "w1x1": w1,
            "scale1x1": scale1, "shift1x1": shift1}


# ---------------------------------------------------------------------------
# Main
# ---------------------------------------------------------------------------

if __name__ == "__main__":
    # Small shapes consistent with the module's forward (NCHW like torch).
    N, IN_CH, H, W = 2, 16, 16, 16
    GROWTH, NUM_LAYERS = 8, 5
    DILATIONS = (3, 6, 12, 18, 30)

    key = jax.random.PRNGKey(0)
    kx, kp = jax.random.split(key)
    x = jax.random.uniform(kx, (N, IN_CH, H, W), jnp.float32)
    params = make_params(kp, IN_CH, GROWTH, NUM_LAYERS, DILATIONS)

    out = jax.block_until_ready(dense_aspp_forward(x, params))
    assert out.shape == (N, IN_CH, H, W), out.shape

    ref = jax.block_until_ready(dense_aspp_reference(x, params))
    np.testing.assert_allclose(np.asarray(out), np.asarray(ref),
                               atol=1e-3, rtol=1e-3)

    print("KERNEL_OK")
</pallas_src>

<mosaic_0001>
module attributes {stable_mosaic.version = 11 : i64} {
  func.func @_dense_aspp_kernel(%arg0: i32, %arg1: memref<1x16x1536xf32, #tpu.memory_space<vmem>>, %arg2: memref<1x512xf32, #tpu.memory_space<vmem>>, %arg3: memref<8x144xf32, #tpu.memory_space<vmem>>, %arg4: memref<8x216xf32, #tpu.memory_space<vmem>>, %arg5: memref<8x288xf32, #tpu.memory_space<vmem>>, %arg6: memref<8x40xf32, #tpu.memory_space<vmem>>, %arg7: memref<8x48xf32, #tpu.memory_space<vmem>>, %arg8: memref<56x1xf32, #tpu.memory_space<vmem>>, %arg9: memref<16x56xf32, #tpu.memory_space<vmem>>, %arg10: memref<1x16x512xf32, #tpu.memory_space<vmem>>, %arg11: memref<56x1536xf32, #tpu.memory_space<vmem>>) attributes {dimension_semantics = [#tpu.dimension_semantics<parallel>], iteration_bounds = array<i64: 2>, scalar_prefetch = 0 : i64, scratch_operands = 1 : i64, tpu.core_type = #tpu.core_type<tc>, window_params = [{transform_indices = @transform_0, window_bounds = array<i64: 1, 16, 1536>}, {pipeline_mode = #tpu.pipeline_mode<synchronous>, transform_indices = @transform_1, window_bounds = array<i64: 1, 512>}, {pipeline_mode = #tpu.pipeline_mode<synchronous>, transform_indices = @transform_2, window_bounds = array<i64: 8, 144>}, {pipeline_mode = #tpu.pipeline_mode<synchronous>, transform_indices = @transform_3, window_bounds = array<i64: 8, 216>}, {pipeline_mode = #tpu.pipeline_mode<synchronous>, transform_indices = @transform_4, window_bounds = array<i64: 8, 288>}, {pipeline_mode = #tpu.pipeline_mode<synchronous>, transform_indices = @transform_5, window_bounds = array<i64: 8, 40>}, {pipeline_mode = #tpu.pipeline_mode<synchronous>, transform_indices = @transform_6, window_bounds = array<i64: 8, 48>}, {pipeline_mode = #tpu.pipeline_mode<synchronous>, transform_indices = @transform_7, window_bounds = array<i64: 56, 1>}, {pipeline_mode = #tpu.pipeline_mode<synchronous>, transform_indices = @transform_8, window_bounds = array<i64: 16, 56>}, {transform_indices = @transform_9, window_bounds = array<i64: 1, 16, 512>}]} {
    %cst = arith.constant 0.000000e+00 : f32
    %0 = vector.broadcast %cst : f32 to vector<40x512xf32>
    %c16 = arith.constant 16 : index
    %c0 = arith.constant 0 : index
    %1 = vector.load %arg11[%c16, %c0] : memref<56x1536xf32, #tpu.memory_space<vmem>>, vector<40x512xf32>
    tpu.vector_store %arg11[%c16, %c0], %0 {strides = array<i32>} : memref<56x1536xf32, #tpu.memory_space<vmem>>, vector<40x512xf32>,
    %cst_0 = arith.constant 0.000000e+00 : f32
    %2 = vector.broadcast %cst_0 : f32 to vector<40x512xf32>
    %c16_1 = arith.constant 16 : index
    %c1024 = arith.constant 1024 : index
    %3 = vector.load %arg11[%c16_1, %c1024] : memref<56x1536xf32, #tpu.memory_space<vmem>>, vector<40x512xf32>
    tpu.vector_store %arg11[%c16_1, %c1024], %2 {strides = array<i32>} : memref<56x1536xf32, #tpu.memory_space<vmem>>, vector<40x512xf32>,
    %c0_2 = arith.constant 0 : index
    %c0_3 = arith.constant 0 : index
    %c0_4 = arith.constant 0 : index
    %4 = vector.load %arg1[%c0_2, %c0_3, %c0_4] : memref<1x16x1536xf32, #tpu.memory_space<vmem>>, vector<1x16x1536xf32>
    %5 = vector.shape_cast %4 : vector<1x16x1536xf32> to vector<16x1536xf32>
    %c0_5 = arith.constant 0 : index
    %c0_6 = arith.constant 0 : index
    %6 = vector.load %arg11[%c0_5, %c0_6] : memref<56x1536xf32, #tpu.memory_space<vmem>>, vector<16x1536xf32>
    tpu.vector_store %arg11[%c0_5, %c0_6], %5 {strides = array<i32>} : memref<56x1536xf32, #tpu.memory_space<vmem>>, vector<16x1536xf32>,
    %c0_7 = arith.constant 0 : index
    %c0_8 = arith.constant 0 : index
    %7 = vector.load %arg2[%c0_7, %c0_8] : memref<1x512xf32, #tpu.memory_space<vmem>>, vector<1x512xf32>
    %c0_9 = arith.constant 0 : index
    %c413 = arith.constant 413 : index
    %8 = vector.load %arg11[%c0_9, %c413] : memref<56x1536xf32, #tpu.memory_space<vmem>>, vector<16x512xf32>
    %c0_10 = arith.constant 0 : index
    %c416 = arith.constant 416 : index
    %9 = vector.load %arg11[%c0_10, %c416] : memref<56x1536xf32, #tpu.memory_space<vmem>>, vector<16x512xf32>
    %c0_11 = arith.constant 0 : index
    %c419 = arith.constant 419 : index
    %10 = vector.load %arg11[%c0_11, %c419] : memref<56x1536xf32, #tpu.memory_space<vmem>>, vector<16x512xf32>
    %c0_12 = arith.constant 0 : index
    %c509 = arith.constant 509 : index
    %11 = vector.load %arg11[%c0_12, %c509] : memref<56x1536xf32, #tpu.memory_space<vmem>>, vector<16x512xf32>
    %c0_13 = arith.constant 0 : index
    %c512 = arith.constant 512 : index
    %12 = vector.load %arg11[%c0_13, %c512] : memref<56x1536xf32, #tpu.memory_space<vmem>>, vector<16x512xf32>
    %c0_14 = arith.constant 0 : index
    %c515 = arith.constant 515 : index
    %13 = vector.load %arg11[%c0_14, %c515] : memref<56x1536xf32, #tpu.memory_space<vmem>>, vector<16x512xf32>
    %c0_15 = arith.constant 0 : index
    %c605 = arith.constant 605 : index
    %14 = vector.load %arg11[%c0_15, %c605] : memref<56x1536xf32, #tpu.memory_space<vmem>>, vector<16x512xf32>
    %c0_16 = arith.constant 0 : index
    %c608 = arith.constant 608 : index
    %15 = vector.load %arg11[%c0_16, %c608] : memref<56x1536xf32, #tpu.memory_space<vmem>>, vector<16x512xf32>
    %c0_17 = arith.constant 0 : index
    %c611 = arith.constant 611 : index
    %16 = vector.load %arg11[%c0_17, %c611] : memref<56x1536xf32, #tpu.memory_space<vmem>>, vector<16x512xf32>
    %17 = tpu.concatenate %8, %9, %10, %11, %12, %13, %14, %15, %16 in 0 : vector<16x512xf32>, vector<16x512xf32>, vector<16x512xf32>, vector<16x512xf32>, vector<16x512xf32>, vector<16x512xf32>, vector<16x512xf32>, vector<16x512xf32>, vector<16x512xf32> -> vector<144x512xf32>
    %c0_18 = arith.constant 0 : index
    %c0_19 = arith.constant 0 : index
    %18 = vector.load %arg3[%c0_18, %c0_19] : memref<8x144xf32, #tpu.memory_space<vmem>>, vector<8x144xf32>
    %cst_20 = arith.constant dense<0.000000e+00> : vector<8x512xf32>
    %19 = tpu.matmul %18, %17, %cst_20 {dimension_numbers = #tpu.dot_dimension_numbers<[1], [0], [0], [1], [0, 0, 1, 1], [], []>} : vector<8x144xf32>, vector<144x512xf32>, vector<8x512xf32> -> vector<8x512xf32>
    %c0_21 = arith.constant 0 : index
    %c0_22 = arith.constant 0 : index
    %20 = vector.load %arg8[%c0_21, %c0_22] : memref<56x1xf32, #tpu.memory_space<vmem>>, vector<8x1xf32>
    %21 = vector.broadcast %20 : vector<8x1xf32> to vector<8x512xf32>
    %22 = arith.addf %19, %21 : vector<8x512xf32>
    %cst_23 = arith.constant 0.000000e+00 : f32
    %23 = vector.broadcast %cst_23 : f32 to vector<8x512xf32>
    %24 = arith.maximumf %22, %23 : vector<8x512xf32>
    %25 = vector.broadcast %7 : vector<1x512xf32> to vector<8x512xf32>
    %26 = arith.mulf %24, %25 : vector<8x512xf32>
    %c16_24 = arith.constant 16 : index
    %c512_25 = arith.constant 512 : index
    %27 = vector.load %arg11[%c16_24, %c512_25] : memref<56x1536xf32, #tpu.memory_space<vmem>>, vector<8x512xf32>
    tpu.vector_store %arg11[%c16_24, %c512_25], %26 {strides = array<i32>} : memref<56x1536xf32, #tpu.memory_space<vmem>>, vector<8x512xf32>,
    %c0_26 = arith.constant 0 : index
    %c314 = arith.constant 314 : index
    %28 = vector.load %arg11[%c0_26, %c314] : memref<56x1536xf32, #tpu.memory_space<vmem>>, vector<24x512xf32>
    %c0_27 = arith.constant 0 : index
    %c320 = arith.constant 320 : index
    %29 = vector.load %arg11[%c0_27, %c320] : memref<56x1536xf32, #tpu.memory_space<vmem>>, vector<24x512xf32>
    %c0_28 = arith.constant 0 : index
    %c326 = arith.constant 326 : index
    %30 = vector.load %arg11[%c0_28, %c326] : memref<56x1536xf32, #tpu.memory_space<vmem>>, vector<24x512xf32>
    %c0_29 = arith.constant 0 : index
    %c506 = arith.constant 506 : index
    %31 = vector.load %arg11[%c0_29, %c506] : memref<56x1536xf32, #tpu.memory_space<vmem>>, vector<24x512xf32>
    %c0_30 = arith.constant 0 : index
    %c512_31 = arith.constant 512 : index
    %32 = vector.load %arg11[%c0_30, %c512_31] : memref<56x1536xf32, #tpu.memory_space<vmem>>, vector<24x512xf32>
    %c0_32 = arith.constant 0 : index
    %c518 = arith.constant 518 : index
    %33 = vector.load %arg11[%c0_32, %c518] : memref<56x1536xf32, #tpu.memory_space<vmem>>, vector<24x512xf32>
    %c0_33 = arith.constant 0 : index
    %c698 = arith.constant 698 : index
    %34 = vector.load %arg11[%c0_33, %c698] : memref<56x1536xf32, #tpu.memory_space<vmem>>, vector<24x512xf32>
    %c0_34 = arith.constant 0 : index
    %c704 = arith.constant 704 : index
    %35 = vector.load %arg11[%c0_34, %c704] : memref<56x1536xf32, #tpu.memory_space<vmem>>, vector<24x512xf32>
    %c0_35 = arith.constant 0 : index
    %c710 = arith.constant 710 : index
    %36 = vector.load %arg11[%c0_35, %c710] : memref<56x1536xf32, #tpu.memory_space<vmem>>, vector<24x512xf32>
    %37 = tpu.concatenate %28, %29, %30, %31, %32, %33, %34, %35, %36 in 0 : vector<24x512xf32>, vector<24x512xf32>, vector<24x512xf32>, vector<24x512xf32>, vector<24x512xf32>, vector<24x512xf32>, vector<24x512xf32>, vector<24x512xf32>, vector<24x512xf32> -> vector<216x512xf32>
    %c0_36 = arith.constant 0 : index
    %c0_37 = arith.constant 0 : index
    %38 = vector.load %arg4[%c0_36, %c0_37] : memref<8x216xf32, #tpu.memory_space<vmem>>, vector<8x216xf32>
    %cst_38 = arith.constant dense<0.000000e+00> : vector<8x512xf32>
    %39 = tpu.matmul %38, %37, %cst_38 {dimension_numbers = #tpu.dot_dimension_numbers<[1], [0], [0], [1], [0, 0, 1, 1], [], []>} : vector<8x216xf32>, vector<216x512xf32>, vector<8x512xf32> -> vector<8x512xf32>
    %c8 = arith.constant 8 : index
    %c0_39 = arith.constant 0 : index
    %40 = vector.load %arg8[%c8, %c0_39] : memref<56x1xf32, #tpu.memory_space<vmem>>, vector<8x1xf32>
    %41 = vector.broadcast %40 : vector<8x1xf32> to vector<8x512xf32>
    %42 = arith.addf %39, %41 : vector<8x512xf32>
    %cst_40 = arith.constant 0.000000e+00 : f32
    %43 = vector.broadcast %cst_40 : f32 to vector<8x512xf32>
    %44 = arith.maximumf %42, %43 : vector<8x512xf32>
    %45 = vector.broadcast %7 : vector<1x512xf32> to vector<8x512xf32>
    %46 = arith.mulf %44, %45 : vector<8x512xf32>
    %c24 = arith.constant 24 : index
    %c512_41 = arith.constant 512 : index
    %47 = vector.load %arg11[%c24, %c512_41] : memref<56x1536xf32, #tpu.memory_space<vmem>>, vector<8x512xf32>
    tpu.vector_store %arg11[%c24, %c512_41], %46 {strides = array<i32>} : memref<56x1536xf32, #tpu.memory_space<vmem>>, vector<8x512xf32>,
    %c0_42 = arith.constant 0 : index
    %c116 = arith.constant 116 : index
    %48 = vector.load %arg11[%c0_42, %c116] : memref<56x1536xf32, #tpu.memory_space<vmem>>, vector<32x512xf32>
    %c0_43 = arith.constant 0 : index
    %c128 = arith.constant 128 : index
    %49 = vector.load %arg11[%c0_43, %c128] : memref<56x1536xf32, #tpu.memory_space<vmem>>, vector<32x512xf32>
    %c0_44 = arith.constant 0 : index
    %c140 = arith.constant 140 : index
    %50 = vector.load %arg11[%c0_44, %c140] : memref<56x1536xf32, #tpu.memory_space<vmem>>, vector<32x512xf32>
    %c0_45 = arith.constant 0 : index
    %c500 = arith.constant 500 : index
    %51 = vector.load %arg11[%c0_45, %c500] : memref<56x1536xf32, #tpu.memory_space<vmem>>, vector<32x512xf32>
    %c0_46 = arith.constant 0 : index
    %c512_47 = arith.constant 512 : index
    %52 = vector.load %arg11[%c0_46, %c512_47] : memref<56x1536xf32, #tpu.memory_space<vmem>>, vector<32x512xf32>
    %c0_48 = arith.constant 0 : index
    %c524 = arith.constant 524 : index
    %53 = vector.load %arg11[%c0_48, %c524] : memref<56x1536xf32, #tpu.memory_space<vmem>>, vector<32x512xf32>
    %c0_49 = arith.constant 0 : index
    %c884 = arith.constant 884 : index
    %54 = vector.load %arg11[%c0_49, %c884] : memref<56x1536xf32, #tpu.memory_space<vmem>>, vector<32x512xf32>
    %c0_50 = arith.constant 0 : index
    %c896 = arith.constant 896 : index
    %55 = vector.load %arg11[%c0_50, %c896] : memref<56x1536xf32, #tpu.memory_space<vmem>>, vector<32x512xf32>
    %c0_51 = arith.constant 0 : index
    %c908 = arith.constant 908 : index
    %56 = vector.load %arg11[%c0_51, %c908] : memref<56x1536xf32, #tpu.memory_space<vmem>>, vector<32x512xf32>
    %57 = tpu.concatenate %48, %49, %50, %51, %52, %53, %54, %55, %56 in 0 : vector<32x512xf32>, vector<32x512xf32>, vector<32x512xf32>, vector<32x512xf32>, vector<32x512xf32>, vector<32x512xf32>, vector<32x512xf32>, vector<32x512xf32>, vector<32x512xf32> -> vector<288x512xf32>
    %c0_52 = arith.constant 0 : index
    %c0_53 = arith.constant 0 : index
    %58 = vector.load %arg5[%c0_52, %c0_53] : memref<8x288xf32, #tpu.memory_space<vmem>>, vector<8x288xf32>
    %cst_54 = arith.constant dense<0.000000e+00> : vector<8x512xf32>
    %59 = tpu.matmul %58, %57, %cst_54 {dimension_numbers = #tpu.dot_dimension_numbers<[1], [0], [0], [1], [0, 0, 1, 1], [], []>} : vector<8x288xf32>, vector<288x512xf32>, vector<8x512xf32> -> vector<8x512xf32>
    %c16_55 = arith.constant 16 : index
    %c0_56 = arith.constant 0 : index
    %60 = vector.load %arg8[%c16_55, %c0_56] : memref<56x1xf32, #tpu.memory_space<vmem>>, vector<8x1xf32>
    %61 = vector.broadcast %60 : vector<8x1xf32> to vector<8x512xf32>
    %62 = arith.addf %59, %61 : vector<8x512xf32>
    %cst_57 = arith.constant 0.000000e+00 : f32
    %63 = vector.broadcast %cst_57 : f32 to vector<8x512xf32>
    %64 = arith.maximumf %62, %63 : vector<8x512xf32>
    %c32 = arith.constant 32 : index
    %c512_58 = arith.constant 512 : index
    %65 = vector.load %arg11[%c32, %c512_58] : memref<56x1536xf32, #tpu.memory_space<vmem>>, vector<8x512xf32>
    tpu.vector_store %arg11[%c32, %c512_58], %64 {strides = array<i32>} : memref<56x1536xf32, #tpu.memory_space<vmem>>, vector<8x512xf32>,
    %c0_59 = arith.constant 0 : index
    %c512_60 = arith.constant 512 : index
    %66 = vector.load %arg11[%c0_59, %c512_60] : memref<56x1536xf32, #tpu.memory_space<vmem>>, vector<40x512xf32>
    %c0_61 = arith.constant 0 : index
    %c0_62 = arith.constant 0 : index
    %67 = vector.load %arg6[%c0_61, %c0_62] : memref<8x40xf32, #tpu.memory_space<vmem>>, vector<8x40xf32>
    %cst_63 = arith.constant dense<0.000000e+00> : vector<8x512xf32>
    %68 = tpu.matmul %67, %66, %cst_63 {dimension_numbers = #tpu.dot_dimension_numbers<[1], [0], [0], [1], [0, 0, 1, 1], [], []>} : vector<8x40xf32>, vector<40x512xf32>, vector<8x512xf32> -> vector<8x512xf32>
    %c24_64 = arith.constant 24 : index
    %c0_65 = arith.constant 0 : index
    %69 = vector.load %arg8[%c24_64, %c0_65] : memref<56x1xf32, #tpu.memory_space<vmem>>, vector<8x1xf32>
    %70 = vector.broadcast %69 : vector<8x1xf32> to vector<8x512xf32>
    %71 = arith.addf %68, %70 : vector<8x512xf32>
    %cst_66 = arith.constant 0.000000e+00 : f32
    %72 = vector.broadcast %cst_66 : f32 to vector<8x512xf32>
    %73 = arith.maximumf %71, %72 : vector<8x512xf32>
    %c40 = arith.constant 40 : index
    %c512_67 = arith.constant 512 : index
    %74 = vector.load %arg11[%c40, %c512_67] : memref<56x1536xf32, #tpu.memory_space<vmem>>, vector<8x512xf32>
    tpu.vector_store %arg11[%c40, %c512_67], %73 {strides = array<i32>} : memref<56x1536xf32, #tpu.memory_space<vmem>>, vector<8x512xf32>,
    %c0_68 = arith.constant 0 : index
    %c512_69 = arith.constant 512 : index
    %75 = vector.load %arg11[%c0_68, %c512_69] : memref<56x1536xf32, #tpu.memory_space<vmem>>, vector<48x512xf32>
    %c0_70 = arith.constant 0 : index
    %c0_71 = arith.constant 0 : index
    %76 = vector.load %arg7[%c0_70, %c0_71] : memref<8x48xf32, #tpu.memory_space<vmem>>, vector<8x48xf32>
    %cst_72 = arith.constant dense<0.000000e+00> : vector<8x512xf32>
    %77 = tpu.matmul %76, %75, %cst_72 {dimension_numbers = #tpu.dot_dimension_numbers<[1], [0], [0], [1], [0, 0, 1, 1], [], []>} : vector<8x48xf32>, vector<48x512xf32>, vector<8x512xf32> -> vector<8x512xf32>
    %c32_73 = arith.constant 32 : index
    %c0_74 = arith.constant 0 : index
    %78 = vector.load %arg8[%c32_73, %c0_74] : memref<56x1xf32, #tpu.memory_space<vmem>>, vector<8x1xf32>
    %79 = vector.broadcast %78 : vector<8x1xf32> to vector<8x512xf32>
    %80 = arith.addf %77, %79 : vector<8x512xf32>
    %cst_75 = arith.constant 0.000000e+00 : f32
    %81 = vector.broadcast %cst_75 : f32 to vector<8x512xf32>
    %82 = arith.maximumf %80, %81 : vector<8x512xf32>
    %c48 = arith.constant 48 : index
    %c512_76 = arith.constant 512 : index
    %83 = vector.load %arg11[%c48, %c512_76] : memref<56x1536xf32, #tpu.memory_space<vmem>>, vector<8x512xf32>
    tpu.vector_store %arg11[%c48, %c512_76], %82 {strides = array<i32>} : memref<56x1536xf32, #tpu.memory_space<vmem>>, vector<8x512xf32>,
    %c40_77 = arith.constant 40 : index
    %c0_78 = arith.constant 0 : index
    %84 = vector.load %arg8[%c40_77, %c0_78] : memref<56x1xf32, #tpu.memory_space<vmem>>, vector<16x1xf32>
    %c0_79 = arith.constant 0 : index
    %c0_80 = arith.constant 0 : index
    %85 = vector.load %arg9[%c0_79, %c0_80] : memref<16x56xf32, #tpu.memory_space<vmem>>, vector<16x56xf32>
    %c0_81 = arith.constant 0 : index
    %c512_82 = arith.constant 512 : index
    %86 = vector.load %arg11[%c0_81, %c512_82] : memref<56x1536xf32, #tpu.memory_space<vmem>>, vector<56x512xf32>
    %cst_83 = arith.constant dense<0.000000e+00> : vector<16x512xf32>
    %87 = tpu.matmul %85, %86, %cst_83 {dimension_numbers = #tpu.dot_dimension_numbers<[1], [0], [0], [1], [0, 0, 1, 1], [], []>} : vector<16x56xf32>, vector<56x512xf32>, vector<16x512xf32> -> vector<16x512xf32>
    %88 = vector.broadcast %84 : vector<16x1xf32> to vector<16x512xf32>
    %89 = arith.addf %87, %88 : vector<16x512xf32>
    %cst_84 = arith.constant 0.000000e+00 : f32
    %90 = vector.broadcast %cst_84 : f32 to vector<16x512xf32>
    %91 = arith.maximumf %89, %90 : vector<16x512xf32>
    %c0_85 = arith.constant 0 : index
    %c0_86 = arith.constant 0 : index
    %c0_87 = arith.constant 0 : index
    %92 = vector.load %arg10[%c0_85, %c0_86, %c0_87] : memref<1x16x512xf32, #tpu.memory_space<vmem>>, vector<1x16x512xf32>
    %93 = vector.shape_cast %92 : vector<1x16x512xf32> to vector<16x512xf32>
    %94 = vector.shape_cast %91 : vector<16x512xf32> to vector<1x16x512xf32>
    tpu.vector_store %arg10[%c0_85, %c0_86, %c0_87], %94 {strides = array<i32>} : memref<1x16x512xf32, #tpu.memory_space<vmem>>, vector<1x16x512xf32>,
    return
  }
  func.func @transform_0(%arg0: i32) -> (i32, i32, i32) {
    %c0_i32 = arith.constant 0 : i32
    %c0_i32_0 = arith.constant 0 : i32
    %c0_i32_1 = arith.constant 0 : i32
    return %arg0, %c0_i32, %c0_i32_0 : i32, i32, i32
  }
  func.func @transform_1(%arg0: i32) -> (i32, i32) {
    %c0_i32 = arith.constant 0 : i32
    %c0_i32_0 = arith.constant 0 : i32
    %c0_i32_1 = arith.constant 0 : i32
    return %c0_i32, %c0_i32_0 : i32, i32
  }
  func.func @transform_2(%arg0: i32) -> (i32, i32) {
    %c0_i32 = arith.constant 0 : i32
    %c0_i32_0 = arith.constant 0 : i32
    %c0_i32_1 = arith.constant 0 : i32
    return %c0_i32, %c0_i32_0 : i32, i32
  }
  func.func @transform_3(%arg0: i32) -> (i32, i32) {
    %c0_i32 = arith.constant 0 : i32
    %c0_i32_0 = arith.constant 0 : i32
    %c0_i32_1 = arith.constant 0 : i32
    return %c0_i32, %c0_i32_0 : i32, i32
  }
  func.func @transform_4(%arg0: i32) -> (i32, i32) {
    %c0_i32 = arith.constant 0 : i32
    %c0_i32_0 = arith.constant 0 : i32
    %c0_i32_1 = arith.constant 0 : i32
    return %c0_i32, %c0_i32_0 : i32, i32
  }
  func.func @transform_5(%arg0: i32) -> (i32, i32) {
    %c0_i32 = arith.constant 0 : i32
    %c0_i32_0 = arith.constant 0 : i32
    %c0_i32_1 = arith.constant 0 : i32
    return %c0_i32, %c0_i32_0 : i32, i32
  }
  func.func @transform_6(%arg0: i32) -> (i32, i32) {
    %c0_i32 = arith.constant 0 : i32
    %c0_i32_0 = arith.constant 0 : i32
    %c0_i32_1 = arith.constant 0 : i32
    return %c0_i32, %c0_i32_0 : i32, i32
  }
  func.func @transform_7(%arg0: i32) -> (i32, i32) {
    %c0_i32 = arith.constant 0 : i32
    %c0_i32_0 = arith.constant 0 : i32
    %c0_i32_1 = arith.constant 0 : i32
    return %c0_i32, %c0_i32_0 : i32, i32
  }
  func.func @transform_8(%arg0: i32) -> (i32, i32) {
    %c0_i32 = arith.constant 0 : i32
    %c0_i32_0 = arith.constant 0 : i32
    %c0_i32_1 = arith.constant 0 : i32
    return %c0_i32, %c0_i32_0 : i32, i32
  }
  func.func @transform_9(%arg0: i32) -> (i32, i32, i32) {
    %c0_i32 = arith.constant 0 : i32
    %c0_i32_0 = arith.constant 0 : i32
    %c0_i32_1 = arith.constant 0 : i32
    return %arg0, %c0_i32, %c0_i32_0 : i32, i32, i32
  }
}

</mosaic_0001>

<llo_original>
// kernel: tpu_custom_call.1
$region0: #{tpu_custom_call.1}
  #allocation0 [shape = 'u32[]', space=smem, size = 0x4, offset = 0x4, fixed_abs, tag = 'smem constant byte address 0x4 - core index']
  #allocation1 [shape = 'u32[144,128]{1,0:T(1,128)}', space=vmem, size = 0x12000, scoped, tag = 'internal scratch']
  #allocation2 [shape = 'f32[56,1536]{1,0:T(8,128)}', space=vmem, size = 0x54000, scoped, tag = 'scratch operand']
  %s0 = inlined_call_operand.hbm [shape: f32[2,16,1536], index: 0, kind: input, shape index: {}]
  %s1 = inlined_call_operand.hbm [shape: f32[1,512], index: 1, kind: input, shape index: {}]
  %s2 = inlined_call_operand.vmem [shape: f32[8,144], index: 2, kind: input, shape index: {}]
  %s3 = inlined_call_operand.vmem [shape: f32[8,216], index: 3, kind: input, shape index: {}]
  %s4 = inlined_call_operand.vmem [shape: f32[8,288], index: 4, kind: input, shape index: {}]
  %s5 = inlined_call_operand.vmem [shape: f32[8,40], index: 5, kind: input, shape index: {}]
  %s6 = inlined_call_operand.hbm [shape: f32[8,48], index: 6, kind: input, shape index: {}]
  %s7 = inlined_call_operand.vmem [shape: f32[56,1], index: 7, kind: input, shape index: {}]
  %s8 = inlined_call_operand.hbm [shape: f32[16,56], index: 8, kind: input, shape index: {}]
  %s9 = inlined_call_operand.hbm [shape: f32[2,16,512], index: 9, kind: output, shape index: {}]
  %s10 = sld [smem:[#allocation0]]
  $region85: #{tpu_custom_call.1} parent=0
    _
  %s12 = ssub.s32 1, %s10
  %s13 = scalar_select 0, %s12, %s10
  $region1: #{tpu_custom_call.1} parent=0
    #allocation3 [shape = 'u8[196608]{0}', space=vmem, size = 0x30000, scoped, tag = 'input window, operand 0']
    #allocation4 [shape = 's32[2]{0}', space=sflag, size = 0x8, scoped, tag = 'scoped memory for tpu_custom_call.1']
    #allocation5 [shape = 's32[2]{0}', space=sflag, size = 0x8, scoped, tag = 'scoped memory for tpu_custom_call.1']
    #allocation6 [shape = 'u8[2048]{0}', space=vmem, size = 0x800, scoped, tag = 'input window, operand 1, single buffered']
    #allocation7 [shape = 's32[1]{0}', space=sflag, size = 0x4, scoped, tag = 'scoped memory for tpu_custom_call.1']
    #allocation8 [shape = 'u8[4096]{0}', space=vmem, size = 0x1000, scoped, tag = 'input window, operand 6, single buffered']
    #allocation9 [shape = 'u8[8192]{0}', space=vmem, size = 0x2000, scoped, tag = 'input window, operand 8, single buffered']
    #allocation10 [shape = 's32[1]{0}', space=sflag, size = 0x4, scoped, tag = 'scoped memory for tpu_custom_call.1']
    #allocation11 [shape = 'u8[65536]{0}', space=vmem, size = 0x10000, scoped, tag = 'output window, operand 0']
    %14 = vsyncpa [#allocation4], 0
    %s15 = scalar_lea.sflag [#allocation4], 1
    %16 = vsyncpa %s15, 0
    %17 = vsyncpa [#allocation7], 0
    %18 = vsyncpa [#allocation10], 0
    %19 = vsyncpa [#allocation5], 0
    %s20 = scalar_lea.sflag [#allocation5], 1
    %21 = vsyncpa %s20, 0
    loop: start=0, step=1, limit=4
    $region2: #{tpu_custom_call.1} parent=1 // loop_pre_header
      _
    $region3: #{tpu_custom_call.1} parent=1 // loop_header
      %s23 = sphi 0, %s27
      %p24 = scmp.ge.s32.totalorder %s23, 4
      %s33 = sphi 0, %s35
      %s36 = sphi 0, %s33
      %s37 = sphi 0, %s36
      %s53 = sphi 0, %s37
      %s57 = sphi 0, %s57
      %s59 = sphi 0, %s57
      %s60 = sphi 0, %s59
      %s74 = sphi 0, %s60
      %s78 = sphi 0, %s78
      %s80 = sphi 0, %s78
      %s81 = sphi 0, %s80
      %s95 = sphi 0, %s81
      %s99 = sphi 0, %s99
      %s101 = sphi 0, %s99
      %s102 = sphi 0, %s101
      %s116 = sphi 0, %s102
      %s120 = sphi 0, %s120
      %s122 = sphi 0, %s120
      %s123 = sphi 0, %s122
      %s137 = sphi 0, %s123
      %s141 = sphi 0, %s141
      %s143 = sphi 0, %s141
      %s144 = sphi 0, %s143
      %s158 = sphi 0, %s144
      %s162 = sphi 0, %s162
      %s164 = sphi 0, %s162
      %s165 = sphi 0, %s164
      %s179 = sphi 0, %s165
      %s183 = sphi 0, %s183
      %s185 = sphi 0, %s183
      %s186 = sphi 0, %s185
      %s200 = sphi 0, %s186
      %s204 = sphi 0, %s204
      %s206 = sphi 0, %s204
      %s207 = sphi 0, %s206
      %s221 = sphi 0, %s207
      %s227 = sphi 0, %s229
      %s230 = sphi 0, %s227
      %s231 = sphi 0, %s230
      %s247 = sphi 0, %s231
    $region4: #{tpu_custom_call.1} parent=1 // loop_header_branch
      %26 = sbr.rel (%p24) target = $region8
    $region5: #{tpu_custom_call.1} parent=1 // loop_body
      %s28 = ssub.s32 %s23, 1
      %s29 = ssub.s32 %s23, 2
      %s30 = sadd.s32 %s23, 1
      %s31 = ssub.s32 %s23, %s30
      %p32 = scmp.eq.s32.totalorder %s31, 0
      %s34 = sadd.s32 %s33, 1
      %s35 = scalar_select %p32, %s33, %s34
      %p38 = pneg %p32
      %p39 = scmp.eq.s32.totalorder %s23, 1
      %p40 = por %p38, %p39
      %p41 = scmp.ne.s32.totalorder %s33, %s36
      %p42 = scmp.eq.s32.totalorder %s23, 0
      %p43 = por %p41, %p42
      %p44 = scmp.ne.s32.totalorder %s33, %s36
      %p45 = scmp.eq.s32.totalorder %s28, 1
      %p46 = por %p44, %p45
      %p47 = scmp.ne.s32.totalorder %s36, %s37
      %p48 = scmp.eq.s32.totalorder %s28, 0
      %p49 = por %p47, %p48
      %p50 = scmp.ne.s32.totalorder %s36, %s37
      %p51 = scmp.eq.s32.totalorder %s29, 1
      %p52 = por %p50, %p51
      %p54 = scmp.ne.s32.totalorder %s37, %s53
      %p55 = scmp.eq.s32.totalorder %s29, 0
      %p56 = por %p54, %p55
      %s58 = sadd.s32 %s57, 1
      %p61 = scmp.eq.s32.totalorder %s23, 1
      %p62 = scmp.ne.s32.totalorder %s57, %s59
      %p63 = scmp.eq.s32.totalorder %s23, 0
      %p64 = por %p62, %p63
      %p65 = scmp.ne.s32.totalorder %s57, %s59
      %p66 = scmp.eq.s32.totalorder %s28, 1
      %p67 = por %p65, %p66
      %p68 = scmp.ne.s32.totalorder %s59, %s60
      %p69 = scmp.eq.s32.totalorder %s28, 0
      %p70 = por %p68, %p69
      %p71 = scmp.ne.s32.totalorder %s59, %s60
      %p72 = scmp.eq.s32.totalorder %s29, 1
      %p73 = por %p71, %p72
      %p75 = scmp.ne.s32.totalorder %s60, %s74
      %p76 = scmp.eq.s32.totalorder %s29, 0
      %p77 = por %p75, %p76
      %s79 = sadd.s32 %s78, 1
      %p82 = scmp.eq.s32.totalorder %s23, 1
      %p83 = scmp.ne.s32.totalorder %s78, %s80
      %p84 = scmp.eq.s32.totalorder %s23, 0
      %p85 = por %p83, %p84
      %p86 = scmp.ne.s32.totalorder %s78, %s80
      %p87 = scmp.eq.s32.totalorder %s28, 1
      %p88 = por %p86, %p87
      %p89 = scmp.ne.s32.totalorder %s80, %s81
      %p90 = scmp.eq.s32.totalorder %s28, 0
      %p91 = por %p89, %p90
      %p92 = scmp.ne.s32.totalorder %s80, %s81
      %p93 = scmp.eq.s32.totalorder %s29, 1
      %p94 = por %p92, %p93
      %p96 = scmp.ne.s32.totalorder %s81, %s95
      %p97 = scmp.eq.s32.totalorder %s29, 0
      %p98 = por %p96, %p97
      %s100 = sadd.s32 %s99, 1
      %p103 = scmp.eq.s32.totalorder %s23, 1
      %p104 = scmp.ne.s32.totalorder %s99, %s101
      %p105 = scmp.eq.s32.totalorder %s23, 0
      %p106 = por %p104, %p105
      %p107 = scmp.ne.s32.totalorder %s99, %s101
      %p108 = scmp.eq.s32.totalorder %s28, 1
      %p109 = por %p107, %p108
      %p110 = scmp.ne.s32.totalorder %s101, %s102
      %p111 = scmp.eq.s32.totalorder %s28, 0
      %p112 = por %p110, %p111
      %p113 = scmp.ne.s32.totalorder %s101, %s102
      %p114 = scmp.eq.s32.totalorder %s29, 1
      %p115 = por %p113, %p114
      %p117 = scmp.ne.s32.totalorder %s102, %s116
      %p118 = scmp.eq.s32.totalorder %s29, 0
      %p119 = por %p117, %p118
      %s121 = sadd.s32 %s120, 1
      %p124 = scmp.eq.s32.totalorder %s23, 1
      %p125 = scmp.ne.s32.totalorder %s120, %s122
      %p126 = scmp.eq.s32.totalorder %s23, 0
      %p127 = por %p125, %p126
      %p128 = scmp.ne.s32.totalorder %s120, %s122
      %p129 = scmp.eq.s32.totalorder %s28, 1
      %p130 = por %p128, %p129
      %p131 = scmp.ne.s32.totalorder %s122, %s123
      %p132 = scmp.eq.s32.totalorder %s28, 0
      %p133 = por %p131, %p132
      %p134 = scmp.ne.s32.totalorder %s122, %s123
      %p135 = scmp.eq.s32.totalorder %s29, 1
      %p136 = por %p134, %p135
      %p138 = scmp.ne.s32.totalorder %s123, %s137
      %p139 = scmp.eq.s32.totalorder %s29, 0
      %p140 = por %p138, %p139
      %s142 = sadd.s32 %s141, 1
      %p145 = scmp.eq.s32.totalorder %s23, 1
      %p146 = scmp.ne.s32.totalorder %s141, %s143
      %p147 = scmp.eq.s32.totalorder %s23, 0
      %p148 = por %p146, %p147
      %p149 = scmp.ne.s32.totalorder %s141, %s143
      %p150 = scmp.eq.s32.totalorder %s28, 1
      %p151 = por %p149, %p150
      %p152 = scmp.ne.s32.totalorder %s143, %s144
      %p153 = scmp.eq.s32.totalorder %s28, 0
      %p154 = por %p152, %p153
      %p155 = scmp.ne.s32.totalorder %s143, %s144
      %p156 = scmp.eq.s32.totalorder %s29, 1
      %p157 = por %p155, %p156
      %p159 = scmp.ne.s32.totalorder %s144, %s158
      %p160 = scmp.eq.s32.totalorder %s29, 0
      %p161 = por %p159, %p160
      %s163 = sadd.s32 %s162, 1
      %p166 = scmp.eq.s32.totalorder %s23, 1
      %p167 = scmp.ne.s32.totalorder %s162, %s164
      %p168 = scmp.eq.s32.totalorder %s23, 0
      %p169 = por %p167, %p168
      %p170 = scmp.ne.s32.totalorder %s162, %s164
      %p171 = scmp.eq.s32.totalorder %s28, 1
      %p172 = por %p170, %p171
      %p173 = scmp.ne.s32.totalorder %s164, %s165
      %p174 = scmp.eq.s32.totalorder %s28, 0
      %p175 = por %p173, %p174
      %p176 = scmp.ne.s32.totalorder %s164, %s165
      %p177 = scmp.eq.s32.totalorder %s29, 1
      %p178 = por %p176, %p177
      %p180 = scmp.ne.s32.totalorder %s165, %s179
      %p181 = scmp.eq.s32.totalorder %s29, 0
      %p182 = por %p180, %p181
      %s184 = sadd.s32 %s183, 1
      %p187 = scmp.eq.s32.totalorder %s23, 1
      %p188 = scmp.ne.s32.totalorder %s183, %s185
      %p189 = scmp.eq.s32.totalorder %s23, 0
      %p190 = por %p188, %p189
      %p191 = scmp.ne.s32.totalorder %s183, %s185
      %p192 = scmp.eq.s32.totalorder %s28, 1
      %p193 = por %p191, %p192
      %p194 = scmp.ne.s32.totalorder %s185, %s186
      %p195 = scmp.eq.s32.totalorder %s28, 0
      %p196 = por %p194, %p195
      %p197 = scmp.ne.s32.totalorder %s185, %s186
      %p198 = scmp.eq.s32.totalorder %s29, 1
      %p199 = por %p197, %p198
      %p201 = scmp.ne.s32.totalorder %s186, %s200
      %p202 = scmp.eq.s32.totalorder %s29, 0
      %p203 = por %p201, %p202
      %s205 = sadd.s32 %s204, 1
      %p208 = scmp.eq.s32.totalorder %s23, 1
      %p209 = scmp.ne.s32.totalorder %s204, %s206
      %p210 = scmp.eq.s32.totalorder %s23, 0
      %p211 = por %p209, %p210
      %p212 = scmp.ne.s32.totalorder %s204, %s206
      %p213 = scmp.eq.s32.totalorder %s28, 1
      %p214 = por %p212, %p213
      %p215 = scmp.ne.s32.totalorder %s206, %s207
      %p216 = scmp.eq.s32.totalorder %s28, 0
      %p217 = por %p215, %p216
      %p218 = scmp.ne.s32.totalorder %s206, %s207
      %p219 = scmp.eq.s32.totalorder %s29, 1
      %p220 = por %p218, %p219
      %p222 = scmp.ne.s32.totalorder %s207, %s221
      %p223 = scmp.eq.s32.totalorder %s29, 0
      %p224 = por %p222, %p223
      %s225 = ssub.s32 %s23, %s30
      %p226 = scmp.eq.s32.totalorder %s225, 0
      %s228 = sadd.s32 %s227, 1
      %s229 = scalar_select %p226, %s227, %s228
      %p232 = pneg %p226
      %p233 = scmp.eq.s32.totalorder %s23, 1
      %p234 = por %p232, %p233
      %p235 = scmp.ne.s32.totalorder %s227, %s230
      %p236 = scmp.eq.s32.totalorder %s23, 0
      %p237 = por %p235, %p236
      %p238 = scmp.ne.s32.totalorder %s227, %s230
      %p239 = scmp.eq.s32.totalorder %s28, 1
      %p240 = por %p238, %p239
      %p241 = scmp.ne.s32.totalorder %s230, %s231
      %p242 = scmp.eq.s32.totalorder %s28, 0
      %p243 = por %p241, %p242
      %p244 = scmp.ne.s32.totalorder %s230, %s231
      %p245 = scmp.eq.s32.totalorder %s29, 1
      %p246 = por %p244, %p245
      %p248 = scmp.ne.s32.totalorder %s231, %s247
      %p249 = scmp.eq.s32.totalorder %s29, 0
      %p250 = por %p248, %p249
      %p251 = scmp.le.s32.totalorder 1, %s23
      %p252 = scmp.lt.s32.totalorder %s23, 3
      %p253 = pnand %p251, %p252
      %p254 = pneg %p253
      // Predicated region
      $region9: #{tpu_custom_call.1} parent=5 // pred_check
        _
      $region10: #{tpu_custom_call.1} parent=5 // pred_check_branch
        %256 = sbr.rel (%p253) target = $region12
      $region11: #{tpu_custom_call.1} parent=5 // pred_region
        %s257 = ssub.s32 %s23, 1
        // Predicated region
        $region13: #{tpu_custom_call.1} parent=11 // pred_check
          %p258 = pneg %p70
        $region14: #{tpu_custom_call.1} parent=11 // pred_check_branch
          %260 = sbr.rel (%p258) target = $region16
        $region15: #{tpu_custom_call.1} parent=11 // pred_region
          %s262 = ssub.s32 64, 64
          %263 = vsyncadd [#allocation7], %s262
          %s265 = sshll.u32 [#allocation6], 4
          %s266 = int_to_ptr.vmem [resolvable:$true] %s265
          %268 = dma.hbm_to_vmem [thread:$0]  %s1, 64, %s266, [#allocation7]
        $region16: #{tpu_custom_call.1} parent=11 // pred_fallthru
          _
        // Predicated region
        $region17: #{tpu_custom_call.1} parent=11 // pred_check
          %p269 = pneg %p91
        $region18: #{tpu_custom_call.1} parent=11 // pred_check_branch
          %271 = sbr.rel (%p269) target = $region20
        $region19: #{tpu_custom_call.1} parent=11 // pred_region
          _
        $region20: #{tpu_custom_call.1} parent=11 // pred_fallthru
          _
        // Predicated region
        $region21: #{tpu_custom_call.1} parent=11 // pred_check
          %p272 = pneg %p112
        $region22: #{tpu_custom_call.1} parent=11 // pred_check_branch
          %274 = sbr.rel (%p272) target = $region24
        $region23: #{tpu_custom_call.1} parent=11 // pred_region
          _
        $region24: #{tpu_custom_call.1} parent=11 // pred_fallthru
          _
        // Predicated region
        $region25: #{tpu_custom_call.1} parent=11 // pred_check
          %p275 = pneg %p133
        $region26: #{tpu_custom_call.1} parent=11 // pred_check_branch
          %277 = sbr.rel (%p275) target = $region28
        $region27: #{tpu_custom_call.1} parent=11 // pred_region
          _
        $region28: #{tpu_custom_call.1} parent=11 // pred_fallthru
          _
        // Predicated region
        $region29: #{tpu_custom_call.1} parent=11 // pred_check
          %p278 = pneg %p154
        $region30: #{tpu_custom_call.1} parent=11 // pred_check_branch
          %280 = sbr.rel (%p278) target = $region32
        $region31: #{tpu_custom_call.1} parent=11 // pred_region
          _
        $region32: #{tpu_custom_call.1} parent=11 // pred_fallthru
          _
        // Predicated region
        $region33: #{tpu_custom_call.1} parent=11 // pred_check
          %p281 = pneg %p175
        $region34: #{tpu_custom_call.1} parent=11 // pred_check_branch
          %283 = sbr.rel (%p281) target = $region36
        $region35: #{tpu_custom_call.1} parent=11 // pred_region
          %s285 = ssub.s32 128, 128
          %286 = vsyncadd [#allocation7], %s285
          %s288 = sshll.u32 [#allocation8], 4
          %s289 = int_to_ptr.vmem [resolvable:$true] %s288
          %291 = dma.hbm_to_vmem [thread:$0]  %s6, 128, %s289, [#allocation7]
        $region36: #{tpu_custom_call.1} parent=11 // pred_fallthru
          _
        // Predicated region
        $region37: #{tpu_custom_call.1} parent=11 // pred_check
          %p292 = pneg %p196
        $region38: #{tpu_custom_call.1} parent=11 // pred_check_branch
          %294 = sbr.rel (%p292) target = $region40
        $region39: #{tpu_custom_call.1} parent=11 // pred_region
          _
        $region40: #{tpu_custom_call.1} parent=11 // pred_fallthru
          _
        // Predicated region
        $region41: #{tpu_custom_call.1} parent=11 // pred_check
          %p295 = pneg %p217
        $region42: #{tpu_custom_call.1} parent=11 // pred_check_branch
          %297 = sbr.rel (%p295) target = $region44
        $region43: #{tpu_custom_call.1} parent=11 // pred_region
          %s299 = ssub.s32 256, 256
          %300 = vsyncadd [#allocation10], %s299
          %s301 = sshll.u32 [#allocation9], 4
          %s302 = int_to_ptr.vmem [resolvable:$true] %s301
          %307 = dma.hbm_to_vmem [thread:$0]  %s8, 256, %s302, [#allocation10], 128, 128, 8
        $region44: #{tpu_custom_call.1} parent=11 // pred_fallthru
          _
      $region12: #{tpu_custom_call.1} parent=5 // pred_fallthru
        _
      %p308 = scmp.lt.s32.totalorder %s23, 2
      // Predicated region
      $region45: #{tpu_custom_call.1} parent=5 // pred_check
        %p309 = pneg %p308
      $region46: #{tpu_custom_call.1} parent=5 // pred_check_branch
        %311 = sbr.rel (%p309) target = $region48
      $region47: #{tpu_custom_call.1} parent=5 // pred_region
        // Predicated region
        $region49: #{tpu_custom_call.1} parent=47 // pred_check
          %p312 = pneg %p43
        $region50: #{tpu_custom_call.1} parent=47 // pred_check_branch
          %314 = sbr.rel (%p312) target = $region52
        $region51: #{tpu_custom_call.1} parent=47 // pred_region
          %s315 = sand.u32 %s33, 1
          %s316 = scalar_lea.sflag [#allocation4], %s315
          %s317 = sand.u32 %s33, 1
          %s318 = smul.addr %s317, 192
          %s319 = scalar_lea.vmem [#allocation3], %s318
          %s321 = ssub.s32 3072, 3072
          %322 = vsyncadd %s316, %s321
          %s323 = smul.addr %s23, 24
          %s324 = smul.addr %s323, 128
          %s325 = scalar_lea.hbm %s0, %s324
          %s326 = sshll.u32 %s319, 4
          %s327 = int_to_ptr.vmem [resolvable:$true] %s326
          %332 = dma.hbm_to_vmem [thread:$0]  %s325, 3072, %s327, %s316, 1536, 1536, 96
        $region52: #{tpu_custom_call.1} parent=47 // pred_fallthru
          _
      $region48: #{tpu_custom_call.1} parent=5 // pred_fallthru
        _
      %p333 = scmp.le.s32.totalorder 1, %s23
      %p334 = scmp.lt.s32.totalorder %s23, 3
      %p335 = pnand %p333, %p334
      %p336 = pneg %p335
      // Predicated region
      $region53: #{tpu_custom_call.1} parent=5 // pred_check
        _
      $region54: #{tpu_custom_call.1} parent=5 // pred_check_branch
        %338 = sbr.rel (%p335) target = $region56
      $region55: #{tpu_custom_call.1} parent=5 // pred_region
        %s339 = ssub.s32 %s23, 1
        %s340 = sand.u32 %s36, 1
        %s341 = scalar_lea.sflag [#allocation4], %s340
        %s342 = sand.u32 %s36, 1
        %s343 = smul.addr %s342, 192
        %s344 = scalar_lea.vmem [#allocation3], %s343
        // Predicated region
        $region57: #{tpu_custom_call.1} parent=55 // pred_check
          %p345 = pneg %p49
        $region58: #{tpu_custom_call.1} parent=55 // pred_check_branch
          %347 = sbr.rel (%p345) target = $region60
        $region59: #{tpu_custom_call.1} parent=55 // pred_region
          %348 = dma.done %s341, 3072
        $region60: #{tpu_custom_call.1} parent=55 // pred_fallthru
          _
        // Predicated region
        $region61: #{tpu_custom_call.1} parent=55 // pred_check
          %p349 = pneg %p70
        $region62: #{tpu_custom_call.1} parent=55 // pred_check_branch
          %351 = sbr.rel (%p349) target = $region64
        $region63: #{tpu_custom_call.1} parent=55 // pred_region
          %352 = dma.done [#allocation7], 64
        $region64: #{tpu_custom_call.1} parent=55 // pred_fallthru
          _
        // Predicated region
        $region65: #{tpu_custom_call.1} parent=55 // pred_check
          %p353 = pneg %p175
        $region66: #{tpu_custom_call.1} parent=55 // pred_check_branch
          %355 = sbr.rel (%p353) target = $region68
        $region67: #{tpu_custom_call.1} parent=55 // pred_region
          %356 = dma.done [#allocation7], 128
        $region68: #{tpu_custom_call.1} parent=55 // pred_fallthru
          _
        // Predicated region
        $region69: #{tpu_custom_call.1} parent=55 // pred_check
          %p357 = pneg %p217
        $region70: #{tpu_custom_call.1} parent=55 // pred_check_branch
          %359 = sbr.rel (%p357) target = $region72
        $region71: #{tpu_custom_call.1} parent=55 // pred_region
          %360 = dma.done [#allocation10], 256
        $region72: #{tpu_custom_call.1} parent=55 // pred_fallthru
          _
        %s361 = sand.u32 %s36, 1
        %s362 = scalar_lea.sflag [#allocation4], %s361
        %s363 = sand.u32 %s36, 1
        %s364 = smul.addr %s363, 192
        %s365 = scalar_lea.vmem [#allocation3], %s364
        %p366 = pneg %p49
        %p367 = pneg %p46
        %p368 = pneg %p70
        %p369 = pneg %p67
        %p370 = pneg %p91
        %p371 = pneg %p88
        %p372 = pneg %p112
        %p373 = pneg %p109
        %p374 = pneg %p133
        %p375 = pneg %p130
        %p376 = pneg %p154
        %p377 = pneg %p151
        %p378 = pneg %p175
        %p379 = pneg %p172
        %p380 = pneg %p196
        %p381 = pneg %p193
        %p382 = pneg %p217
        %p383 = pneg %p214
        %p384 = pneg %p243
        %p385 = pneg %p240
        %s386 = sand.u32 %s230, 1
        %s387 = scalar_lea.sflag [#allocation5], %s386
        %s388 = sand.u32 %s230, 1
        %s389 = smul.addr %s388, 64
        %s390 = scalar_lea.vmem [#allocation11], %s389
        %391 = vst [vmem:[#allocation2 + $0xc0] sm:$0xff] 0.0
        %392 = vst [vmem:[#allocation2 + $0xc8] sm:$0xff] 0.0
        %393 = vst [vmem:[#allocation2 + $0xd0] sm:$0xff] 0.0
        %394 = vst [vmem:[#allocation2 + $0xd8] sm:$0xff] 0.0
        %395 = vst [vmem:[#allocation2 + $0x120] sm:$0xff] 0.0
        %396 = vst [vmem:[#allocation2 + $0x128] sm:$0xff] 0.0
        %397 = vst [vmem:[#allocation2 + $0x130] sm:$0xff] 0.0
        %398 = vst [vmem:[#allocation2 + $0x138] sm:$0xff] 0.0
        %399 = vst [vmem:[#allocation2 + $0x180] sm:$0xff] 0.0
        %400 = vst [vmem:[#allocation2 + $0x188] sm:$0xff] 0.0
        %401 = vst [vmem:[#allocation2 + $0x190] sm:$0xff] 0.0
        %402 = vst [vmem:[#allocation2 + $0x198] sm:$0xff] 0.0
        %403 = vst [vmem:[#allocation2 + $0x1e0] sm:$0xff] 0.0
        %404 = vst [vmem:[#allocation2 + $0x1e8] sm:$0xff] 0.0
        %405 = vst [vmem:[#allocation2 + $0x1f0] sm:$0xff] 0.0
        %406 = vst [vmem:[#allocation2 + $0x1f8] sm:$0xff] 0.0
        %407 = vst [vmem:[#allocation2 + $0x240] sm:$0xff] 0.0
        %408 = vst [vmem:[#allocation2 + $0x248] sm:$0xff] 0.0
        %409 = vst [vmem:[#allocation2 + $0x250] sm:$0xff] 0.0
        %410 = vst [vmem:[#allocation2 + $0x258] sm:$0xff] 0.0
        %411 = vst [vmem:[#allocation2 + $0x100] sm:$0xff] 0.0
        %412 = vst [vmem:[#allocation2 + $0x108] sm:$0xff] 0.0
        %413 = vst [vmem:[#allocation2 + $0x110] sm:$0xff] 0.0
        %414 = vst [vmem:[#allocation2 + $0x118] sm:$0xff] 0.0
        %415 = vst [vmem:[#allocation2 + $0x160] sm:$0xff] 0.0
        %416 = vst [vmem:[#allocation2 + $0x168] sm:$0xff] 0.0
        %417 = vst [vmem:[#allocation2 + $0x170] sm:$0xff] 0.0
        %418 = vst [vmem:[#allocation2 + $0x178] sm:$0xff] 0.0
        %419 = vst [vmem:[#allocation2 + $0x1c0] sm:$0xff] 0.0
        %420 = vst [vmem:[#allocation2 + $0x1c8] sm:$0xff] 0.0
        %421 = vst [vmem:[#allocation2 + $0x1d0] sm:$0xff] 0.0
        %422 = vst [vmem:[#allocation2 + $0x1d8] sm:$0xff] 0.0
        %423 = vst [vmem:[#allocation2 + $0x220] sm:$0xff] 0.0
        %424 = vst [vmem:[#allocation2 + $0x228] sm:$0xff] 0.0
        %425 = vst [vmem:[#allocation2 + $0x230] sm:$0xff] 0.0
        %426 = vst [vmem:[#allocation2 + $0x238] sm:$0xff] 0.0
        %427 = vst [vmem:[#allocation2 + $0x280] sm:$0xff] 0.0
        %428 = vst [vmem:[#allocation2 + $0x288] sm:$0xff] 0.0
        %429 = vst [vmem:[#allocation2 + $0x290] sm:$0xff] 0.0
        %430 = vst [vmem:[#allocation2 + $0x298] sm:$0xff] 0.0
        %v431 = vld [vmem:[%s344] sm:$0xff]
        %v432 = vld [vmem:[%s344 + $0x8] sm:$0xff]
        %v433 = vld [vmem:[%s344 + $0x10] sm:$0xff]
        %v434 = vld [vmem:[%s344 + $0x18] sm:$0xff]
        %v435 = vld [vmem:[%s344 + $0x20] sm:$0xff]
        %v436 = vld [vmem:[%s344 + $0x28] sm:$0xff]
        %v437 = vld [vmem:[%s344 + $0x30] sm:$0xff]
        %v438 = vld [vmem:[%s344 + $0x38] sm:$0xff]
        %v439 = vld [vmem:[%s344 + $0x40] sm:$0xff]
        %v440 = vld [vmem:[%s344 + $0x48] sm:$0xff]
        %v441 = vld [vmem:[%s344 + $0x50] sm:$0xff]
        %v442 = vld [vmem:[%s344 + $0x58] sm:$0xff]
        %v443 = vld [vmem:[%s344 + $0x60] sm:$0xff]
        %v444 = vld [vmem:[%s344 + $0x68] sm:$0xff]
        %v445 = vld [vmem:[%s344 + $0x70] sm:$0xff]
        %v446 = vld [vmem:[%s344 + $0x78] sm:$0xff]
        %v447 = vld [vmem:[%s344 + $0x80] sm:$0xff]
        %v448 = vld [vmem:[%s344 + $0x88] sm:$0xff]
        %v449 = vld [vmem:[%s344 + $0x90] sm:$0xff]
        %v450 = vld [vmem:[%s344 + $0x98] sm:$0xff]
        %v451 = vld [vmem:[%s344 + $0xa0] sm:$0xff]
        %v452 = vld [vmem:[%s344 + $0xa8] sm:$0xff]
        %v453 = vld [vmem:[%s344 + $0xb0] sm:$0xff]
        %v454 = vld [vmem:[%s344 + $0xb8] sm:$0xff]
        %455 = vst [vmem:[#allocation2] sm:$0xff] %v431
        %456 = vst [vmem:[#allocation2 + $0x8] sm:$0xff] %v432
        %457 = vst [vmem:[#allocation2 + $0x10] sm:$0xff] %v433
        %458 = vst [vmem:[#allocation2 + $0x18] sm:$0xff] %v434
        %459 = vst [vmem:[#allocation2 + $0x20] sm:$0xff] %v435
        %460 = vst [vmem:[#allocation2 + $0x28] sm:$0xff] %v436
        %461 = vst [vmem:[#allocation2 + $0x30] sm:$0xff] %v437
        %462 = vst [vmem:[#allocation2 + $0x38] sm:$0xff] %v438
        %463 = vst [vmem:[#allocation2 + $0x40] sm:$0xff] %v439
        %464 = vst [vmem:[#allocation2 + $0x48] sm:$0xff] %v440
        %465 = vst [vmem:[#allocation2 + $0x50] sm:$0xff] %v441
        %466 = vst [vmem:[#allocation2 + $0x58] sm:$0xff] %v442
        %467 = vst [vmem:[#allocation2 + $0x60] sm:$0xff] %v443
        %468 = vst [vmem:[#allocation2 + $0x68] sm:$0xff] %v444
        %469 = vst [vmem:[#allocation2 + $0x70] sm:$0xff] %v445
        %470 = vst [vmem:[#allocation2 + $0x78] sm:$0xff] %v446
        %471 = vst [vmem:[#allocation2 + $0x80] sm:$0xff] %v447
        %472 = vst [vmem:[#allocation2 + $0x88] sm:$0xff] %v448
        %473 = vst [vmem:[#allocation2 + $0x90] sm:$0xff] %v449
        %474 = vst [vmem:[#allocation2 + $0x98] sm:$0xff] %v450
        %475 = vst [vmem:[#allocation2 + $0xa0] sm:$0xff] %v451
        %476 = vst [vmem:[#allocation2 + $0xa8] sm:$0xff] %v452
        %477 = vst [vmem:[#allocation2 + $0xb0] sm:$0xff] %v453
        %478 = vst [vmem:[#allocation2 + $0xb8] sm:$0xff] %v454
        %v479 = vld [vmem:[#allocation6] sm:$0xf]
        %v480 = vld [vmem:[#allocation2 + $0x18] sm:$0xff]
        %v481 = vld [vmem:[#allocation2 + $0x20] sm:$0xff]
        %v482 = vld [vmem:[#allocation2 + $0x28] sm:$0xff]
        %v483 = vld [vmem:[#allocation2 + $0x30] sm:$0xff]
        %v484 = vld [vmem:[#allocation2 + $0x38] sm:$0xff]
        %v485 = vld [vmem:[#allocation2 + $0x78] sm:$0xff]
        %v486 = vld [vmem:[#allocation2 + $0x80] sm:$0xff]
        %v487 = vld [vmem:[#allocation2 + $0x88] sm:$0xff]
        %v488 = vld [vmem:[#allocation2 + $0x90] sm:$0xff]
        %v489 = vld [vmem:[#allocation2 + $0x98] sm:$0xff]
        %v490 = vld [vmem:[#allocation2 + $0x40] sm:$0xff]
        %v491 = vld [vmem:[#allocation2 + $0xa0] sm:$0xff]
        %502 = vrot.lane.b32.xlu0 %v480, 125
        %v503 = vpop.permute.xlu0 %502
        %504 = vrot.lane.b32.xlu0 %v481, 125
        %v505 = vpop.permute.xlu0 %504
        %506 = vrot.lane.b32.xlu0 %v482, 125
        %v507 = vpop.permute.xlu0 %506
        %508 = vrot.lane.b32.xlu0 %v483, 125
        %v509 = vpop.permute.xlu0 %508
        %510 = vrot.lane.b32.xlu0 %v484, 125
        %v511 = vpop.permute.xlu0 %510
        %512 = vrot.lane.b32.xlu0 %v485, 125
        %v513 = vpop.permute.xlu0 %512
        %514 = vrot.lane.b32.xlu0 %v486, 125
        %v515 = vpop.permute.xlu0 %514
        %516 = vrot.lane.b32.xlu0 %v487, 125
        %v517 = vpop.permute.xlu0 %516
        %518 = vrot.lane.b32.xlu0 %v488, 125
        %v519 = vpop.permute.xlu0 %518
        %520 = vrot.lane.b32.xlu0 %v489, 125
        %v521 = vpop.permute.xlu0 %520
        %vm522 = vcmask 1022976
        %v523 = vsel %vm522, %v503, %v505
        %v524 = vsel %vm522, %v505, %v507
        %v525 = vsel %vm522, %v507, %v509
        %v526 = vsel %vm522, %v509, %v511
        %v527 = vsel %vm522, %v513, %v515
        %v528 = vsel %vm522, %v515, %v517
        %v529 = vsel %vm522, %v517, %v519
        %v530 = vsel %vm522, %v519, %v521
        %531 = vrot.lane.b32.xlu0 %v480, 122
        %v532 = vpop.permute.xlu0 %531
        %533 = vrot.lane.b32.xlu0 %v481, 122
        %v534 = vpop.permute.xlu0 %533
        %535 = vrot.lane.b32.xlu0 %v482, 122
        %v536 = vpop.permute.xlu0 %535
        %537 = vrot.lane.b32.xlu0 %v483, 122
        %v538 = vpop.permute.xlu0 %537
        %539 = vrot.lane.b32.xlu0 %v484, 122
        %v540 = vpop.permute.xlu0 %539
        %541 = vrot.lane.b32.xlu0 %v485, 122
        %v542 = vpop.permute.xlu0 %541
        %543 = vrot.lane.b32.xlu0 %v486, 122
        %v544 = vpop.permute.xlu0 %543
        %545 = vrot.lane.b32.xlu0 %v487, 122
        %v546 = vpop.permute.xlu0 %545
        %547 = vrot.lane.b32.xlu0 %v488, 122
        %v548 = vpop.permute.xlu0 %547
        %549 = vrot.lane.b32.xlu0 %v489, 122
        %v550 = vpop.permute.xlu0 %549
        %vm551 = vcmask 998400
        %v552 = vsel %vm551, %v532, %v534
        %v553 = vsel %vm551, %v534, %v536
        %v554 = vsel %vm551, %v536, %v538
        %v555 = vsel %vm551, %v538, %v540
        %v556 = vsel %vm551, %v542, %v544
        %v557 = vsel %vm551, %v544, %v546
        %v558 = vsel %vm551, %v546, %v548
        %v559 = vsel %vm551, %v548, %v550
        %560 = vrot.lane.b32.xlu0 %v480, 32
        %v561 = vpop.permute.xlu0 %560
        %562 = vrot.lane.b32.xlu0 %v481, 32
        %v563 = vpop.permute.xlu0 %562
        %564 = vrot.lane.b32.xlu0 %v482, 32
        %v565 = vpop.permute.xlu0 %564
        %566 = vrot.lane.b32.xlu0 %v483, 32
        %v567 = vpop.permute.xlu0 %566
        %568 = vrot.lane.b32.xlu0 %v484, 32
        %v569 = vpop.permute.xlu0 %568
        %570 = vrot.lane.b32.xlu0 %v485, 32
        %v571 = vpop.permute.xlu0 %570
        %572 = vrot.lane.b32.xlu0 %v486, 32
        %v573 = vpop.permute.xlu0 %572
        %574 = vrot.lane.b32.xlu0 %v487, 32
        %v575 = vpop.permute.xlu0 %574
        %576 = vrot.lane.b32.xlu0 %v488, 32
        %v577 = vpop.permute.xlu0 %576
        %578 = vrot.lane.b32.xlu0 %v489, 32
        %v579 = vpop.permute.xlu0 %578
        %vm580 = vcmask 261120
        %v581 = vsel %vm580, %v561, %v563
        %v582 = vsel %vm580, %v563, %v565
        %v583 = vsel %vm580, %v565, %v567
        %v584 = vsel %vm580, %v567, %v569
        %v585 = vsel %vm580, %v571, %v573
        %v586 = vsel %vm580, %v573, %v575
        %v587 = vsel %vm580, %v575, %v577
        %v588 = vsel %vm580, %v577, %v579
        %589 = vrot.lane.b32.xlu0 %v481, 29
        %v590 = vpop.permute.xlu0 %589
        %591 = vrot.lane.b32.xlu0 %v482, 29
        %v592 = vpop.permute.xlu0 %591
        %593 = vrot.lane.b32.xlu0 %v483, 29
        %v594 = vpop.permute.xlu0 %593
        %595 = vrot.lane.b32.xlu0 %v484, 29
        %v596 = vpop.permute.xlu0 %595
        %597 = vrot.lane.b32.xlu0 %v486, 29
        %v598 = vpop.permute.xlu0 %597
        %599 = vrot.lane.b32.xlu0 %v487, 29
        %v600 = vpop.permute.xlu0 %599
        %601 = vrot.lane.b32.xlu0 %v488, 29
        %v602 = vpop.permute.xlu0 %601
        %603 = vrot.lane.b32.xlu0 %v489, 29
        %v604 = vpop.permute.xlu0 %603
        %vm605 = vcmask 236544
        %v606 = vsel %vm605, %v590, %v592
        %v607 = vsel %vm605, %v592, %v594
        %v608 = vsel %vm605, %v594, %v596
        %v609 = vsel %vm605, %v598, %v600
        %v610 = vsel %vm605, %v600, %v602
        %v611 = vsel %vm605, %v602, %v604
        %614 = vrot.lane.b32.xlu0 %v481, 26
        %v615 = vpop.permute.xlu0 %614
        %616 = vrot.lane.b32.xlu0 %v482, 26
        %v617 = vpop.permute.xlu0 %616
        %618 = vrot.lane.b32.xlu0 %v483, 26
        %v619 = vpop.permute.xlu0 %618
        %620 = vrot.lane.b32.xlu0 %v484, 26
        %v621 = vpop.permute.xlu0 %620
        %622 = vrot.lane.b32.xlu0 %v490, 26
        %v623 = vpop.permute.xlu0 %622
        %624 = vrot.lane.b32.xlu0 %v486, 26
        %v625 = vpop.permute.xlu0 %624
        %626 = vrot.lane.b32.xlu0 %v487, 26
        %v627 = vpop.permute.xlu0 %626
        %628 = vrot.lane.b32.xlu0 %v488, 26
        %v629 = vpop.permute.xlu0 %628
        %630 = vrot.lane.b32.xlu0 %v489, 26
        %v631 = vpop.permute.xlu0 %630
        %632 = vrot.lane.b32.xlu0 %v491, 26
        %v633 = vpop.permute.xlu0 %632
        %vm634 = vcmask 211968
        %v635 = vsel %vm634, %v615, %v617
        %v636 = vsel %vm634, %v617, %v619
        %v637 = vsel %vm634, %v619, %v621
        %v638 = vsel %vm634, %v621, %v623
        %v639 = vsel %vm634, %v625, %v627
        %v640 = vsel %vm634, %v627, %v629
        %v641 = vsel %vm634, %v629, %v631
        %v642 = vsel %vm634, %v631, %v633
        %643 = vrot.lane.b32.xlu0 %v481, 64
        %v644 = vpop.permute.xlu0 %643
        %645 = vrot.lane.b32.xlu0 %v482, 64
        %v646 = vpop.permute.xlu0 %645
        %647 = vrot.lane.b32.xlu0 %v483, 64
        %v648 = vpop.permute.xlu0 %647
        %649 = vrot.lane.b32.xlu0 %v484, 64
        %v650 = vpop.permute.xlu0 %649
        %651 = vrot.lane.b32.xlu0 %v490, 64
        %v652 = vpop.permute.xlu0 %651
        %653 = vrot.lane.b32.xlu0 %v486, 64
        %v654 = vpop.permute.xlu0 %653
        %655 = vrot.lane.b32.xlu0 %v487, 64
        %v656 = vpop.permute.xlu0 %655
        %657 = vrot.lane.b32.xlu0 %v488, 64
        %v658 = vpop.permute.xlu0 %657
        %659 = vrot.lane.b32.xlu0 %v489, 64
        %v660 = vpop.permute.xlu0 %659
        %661 = vrot.lane.b32.xlu0 %v491, 64
        %v662 = vpop.permute.xlu0 %661
        %vm663 = vcmask 523264
        %v664 = vsel %vm663, %v644, %v646
        %v665 = vsel %vm663, %v646, %v648
        %v666 = vsel %vm663, %v648, %v650
        %v667 = vsel %vm663, %v650, %v652
        %v668 = vsel %vm663, %v654, %v656
        %v669 = vsel %vm663, %v656, %v658
        %v670 = vsel %vm663, %v658, %v660
        %v671 = vsel %vm663, %v660, %v662
        %672 = vrot.lane.b32.xlu0 %v481, 61
        %v673 = vpop.permute.xlu0 %672
        %674 = vrot.lane.b32.xlu0 %v482, 61
        %v675 = vpop.permute.xlu0 %674
        %676 = vrot.lane.b32.xlu0 %v483, 61
        %v677 = vpop.permute.xlu0 %676
        %678 = vrot.lane.b32.xlu0 %v484, 61
        %v679 = vpop.permute.xlu0 %678
        %680 = vrot.lane.b32.xlu0 %v490, 61
        %v681 = vpop.permute.xlu0 %680
        %682 = vrot.lane.b32.xlu0 %v486, 61
        %v683 = vpop.permute.xlu0 %682
        %684 = vrot.lane.b32.xlu0 %v487, 61
        %v685 = vpop.permute.xlu0 %684
        %686 = vrot.lane.b32.xlu0 %v488, 61
        %v687 = vpop.permute.xlu0 %686
        %688 = vrot.lane.b32.xlu0 %v489, 61
        %v689 = vpop.permute.xlu0 %688
        %690 = vrot.lane.b32.xlu0 %v491, 61
        %v691 = vpop.permute.xlu0 %690
        %vm692 = vcmask 498688
        %v693 = vsel %vm692, %v673, %v675
        %v694 = vsel %vm692, %v675, %v677
        %v695 = vsel %vm692, %v677, %v679
        %v696 = vsel %vm692, %v679, %v681
        %v697 = vsel %vm692, %v683, %v685
        %v698 = vsel %vm692, %v685, %v687
        %v699 = vsel %vm692, %v687, %v689
        %v700 = vsel %vm692, %v689, %v691
        %701 = vrot.lane.b32.xlu0 %v481, 58
        %v702 = vpop.permute.xlu0 %701
        %703 = vrot.lane.b32.xlu0 %v482, 58
        %v704 = vpop.permute.xlu0 %703
        %705 = vrot.lane.b32.xlu0 %v483, 58
        %v706 = vpop.permute.xlu0 %705
        %707 = vrot.lane.b32.xlu0 %v484, 58
        %v708 = vpop.permute.xlu0 %707
        %709 = vrot.lane.b32.xlu0 %v490, 58
        %v710 = vpop.permute.xlu0 %709
        %711 = vrot.lane.b32.xlu0 %v486, 58
        %v712 = vpop.permute.xlu0 %711
        %713 = vrot.lane.b32.xlu0 %v487, 58
        %v714 = vpop.permute.xlu0 %713
        %715 = vrot.lane.b32.xlu0 %v488, 58
        %v716 = vpop.permute.xlu0 %715
        %717 = vrot.lane.b32.xlu0 %v489, 58
        %v718 = vpop.permute.xlu0 %717
        %719 = vrot.lane.b32.xlu0 %v491, 58
        %v720 = vpop.permute.xlu0 %719
        %vm721 = vcmask 474112
        %v722 = vsel %vm721, %v702, %v704
        %v723 = vsel %vm721, %v704, %v706
        %v724 = vsel %vm721, %v706, %v708
        %v725 = vsel %vm721, %v708, %v710
        %v726 = vsel %vm721, %v712, %v714
        %v727 = vsel %vm721, %v714, %v716
        %v728 = vsel %vm721, %v716, %v718
        %v729 = vsel %vm721, %v718, %v720
        %v730 = vld [vmem:[%s2] sm:$0xff]
        %v731 = vld [vmem:[%s2 + $0x8] sm:$0xff]
        %v732 = vld [vmem:[%s7] sm:$0xff]
        %734 = vset.pattern.permute.xlu0 0
        %735 = vperm.xlu0 %734, %v732
        %v736 = vpop.permute.xlu0 %735
        %738 = vrot.lane.b32.xlu0 %v480, 99
        %v739 = vpop.permute.xlu0 %738
        %740 = vrot.lane.b32.xlu0 %v481, 99
        %v741 = vpop.permute.xlu0 %740
        %742 = vrot.lane.b32.xlu0 %v482, 99
        %v743 = vpop.permute.xlu0 %742
        %744 = vrot.lane.b32.xlu0 %v483, 99
        %v745 = vpop.permute.xlu0 %744
        %746 = vrot.lane.b32.xlu0 %v484, 99
        %v747 = vpop.permute.xlu0 %746
        %748 = vrot.lane.b32.xlu0 %v485, 99
        %v749 = vpop.permute.xlu0 %748
        %750 = vrot.lane.b32.xlu0 %v486, 99
        %v751 = vpop.permute.xlu0 %750
        %752 = vrot.lane.b32.xlu0 %v487, 99
        %v753 = vpop.permute.xlu0 %752
        %754 = vrot.lane.b32.xlu0 %v488, 99
        %v755 = vpop.permute.xlu0 %754
        %756 = vrot.lane.b32.xlu0 %v489, 99
        %v757 = vpop.permute.xlu0 %756
        %758 = vrot.lane.b32.xlu0 %v523, 99
        %v759 = vpop.permute.xlu0 %758
        %760 = vrot.lane.b32.xlu0 %v524, 99
        %v761 = vpop.permute.xlu0 %760
        %762 = vrot.lane.b32.xlu0 %v525, 99
        %v763 = vpop.permute.xlu0 %762
        %764 = vrot.lane.b32.xlu0 %v526, 99
        %v765 = vpop.permute.xlu0 %764
        %766 = vrot.lane.b32.xlu0 %v511, 99
        %v767 = vpop.permute.xlu0 %766
        %768 = vrot.lane.b32.xlu0 %v527, 99
        %v769 = vpop.permute.xlu0 %768
        %770 = vrot.lane.b32.xlu0 %v528, 99
        %v771 = vpop.permute.xlu0 %770
        %772 = vrot.lane.b32.xlu0 %v529, 99
        %v773 = vpop.permute.xlu0 %772
        %774 = vrot.lane.b32.xlu0 %v530, 99
        %v775 = vpop.permute.xlu0 %774
        %776 = vrot.lane.b32.xlu0 %v521, 99
        %v777 = vpop.permute.xlu0 %776
        %778 = vrot.lane.b32.xlu0 %v552, 99
        %v779 = vpop.permute.xlu0 %778
        %780 = vrot.lane.b32.xlu0 %v553, 99
        %v781 = vpop.permute.xlu0 %780
        %782 = vrot.lane.b32.xlu0 %v554, 99
        %v783 = vpop.permute.xlu0 %782
        %784 = vrot.lane.b32.xlu0 %v555, 99
        %v785 = vpop.permute.xlu0 %784
        %786 = vrot.lane.b32.xlu0 %v540, 99
        %v787 = vpop.permute.xlu0 %786
        %788 = vrot.lane.b32.xlu0 %v556, 99
        %v789 = vpop.permute.xlu0 %788
        %790 = vrot.lane.b32.xlu0 %v557, 99
        %v791 = vpop.permute.xlu0 %790
        %792 = vrot.lane.b32.xlu0 %v558, 99
        %v793 = vpop.permute.xlu0 %792
        %794 = vrot.lane.b32.xlu0 %v559, 99
        %v795 = vpop.permute.xlu0 %794
        %796 = vrot.lane.b32.xlu0 %v550, 99
        %v797 = vpop.permute.xlu0 %796
        %798 = vrot.lane.b32.xlu0 %v581, 99
        %v799 = vpop.permute.xlu0 %798
        %800 = vrot.lane.b32.xlu0 %v582, 99
        %v801 = vpop.permute.xlu0 %800
        %802 = vrot.lane.b32.xlu0 %v583, 99
        %v803 = vpop.permute.xlu0 %802
        %804 = vrot.lane.b32.xlu0 %v584, 99
        %v805 = vpop.permute.xlu0 %804
        %806 = vrot.lane.b32.xlu0 %v569, 99
        %v807 = vpop.permute.xlu0 %806
        %808 = vrot.lane.b32.xlu0 %v585, 99
        %v809 = vpop.permute.xlu0 %808
        %810 = vrot.lane.b32.xlu0 %v586, 99
        %v811 = vpop.permute.xlu0 %810
        %812 = vrot.lane.b32.xlu0 %v587, 99
        %v813 = vpop.permute.xlu0 %812
        %814 = vrot.lane.b32.xlu0 %v588, 99
        %v815 = vpop.permute.xlu0 %814
        %816 = vrot.lane.b32.xlu0 %v579, 99
        %v817 = vpop.permute.xlu0 %816
        %818 = vrot.lane.b32.xlu0 %v590, 99
        %v819 = vpop.permute.xlu0 %818
        %820 = vrot.lane.b32.xlu0 %v606, 99
        %v821 = vpop.permute.xlu0 %820
        %822 = vrot.lane.b32.xlu0 %v607, 99
        %v823 = vpop.permute.xlu0 %822
        %824 = vrot.lane.b32.xlu0 %v608, 99
        %v825 = vpop.permute.xlu0 %824
        %826 = vrot.lane.b32.xlu0 %v596, 99
        %v827 = vpop.permute.xlu0 %826
        %828 = vrot.lane.b32.xlu0 %v598, 99
        %v829 = vpop.permute.xlu0 %828
        %830 = vrot.lane.b32.xlu0 %v609, 99
        %v831 = vpop.permute.xlu0 %830
        %832 = vrot.lane.b32.xlu0 %v610, 99
        %v833 = vpop.permute.xlu0 %832
        %834 = vrot.lane.b32.xlu0 %v611, 99
        %v835 = vpop.permute.xlu0 %834
        %836 = vrot.lane.b32.xlu0 %v604, 99
        %v837 = vpop.permute.xlu0 %836
        %838 = vrot.lane.b32.xlu0 %v615, 99
        %v839 = vpop.permute.xlu0 %838
        %840 = vrot.lane.b32.xlu0 %v635, 99
        %v841 = vpop.permute.xlu0 %840
        %842 = vrot.lane.b32.xlu0 %v636, 99
        %v843 = vpop.permute.xlu0 %842
        %844 = vrot.lane.b32.xlu0 %v637, 99
        %v845 = vpop.permute.xlu0 %844
        %846 = vrot.lane.b32.xlu0 %v638, 99
        %v847 = vpop.permute.xlu0 %846
        %848 = vrot.lane.b32.xlu0 %v625, 99
        %v849 = vpop.permute.xlu0 %848
        %850 = vrot.lane.b32.xlu0 %v639, 99
        %v851 = vpop.permute.xlu0 %850
        %852 = vrot.lane.b32.xlu0 %v640, 99
        %v853 = vpop.permute.xlu0 %852
        %854 = vrot.lane.b32.xlu0 %v641, 99
        %v855 = vpop.permute.xlu0 %854
        %856 = vrot.lane.b32.xlu0 %v642, 99
        %v857 = vpop.permute.xlu0 %856
        %858 = vrot.lane.b32.xlu0 %v664, 99
        %v859 = vpop.permute.xlu0 %858
        %860 = vrot.lane.b32.xlu0 %v665, 99
        %v861 = vpop.permute.xlu0 %860
        %862 = vrot.lane.b32.xlu0 %v666, 99
        %v863 = vpop.permute.xlu0 %862
        %864 = vrot.lane.b32.xlu0 %v667, 99
        %v865 = vpop.permute.xlu0 %864
        %866 = vrot.lane.b32.xlu0 %v652, 99
        %v867 = vpop.permute.xlu0 %866
        %868 = vrot.lane.b32.xlu0 %v668, 99
        %v869 = vpop.permute.xlu0 %868
        %870 = vrot.lane.b32.xlu0 %v669, 99
        %v871 = vpop.permute.xlu0 %870
        %872 = vrot.lane.b32.xlu0 %v670, 99
        %v873 = vpop.permute.xlu0 %872
        %874 = vrot.lane.b32.xlu0 %v671, 99
        %v875 = vpop.permute.xlu0 %874
        %876 = vrot.lane.b32.xlu0 %v662, 99
        %v877 = vpop.permute.xlu0 %876
        %878 = vrot.lane.b32.xlu0 %v693, 99
        %v879 = vpop.permute.xlu0 %878
        %880 = vrot.lane.b32.xlu0 %v694, 99
        %v881 = vpop.permute.xlu0 %880
        %882 = vrot.lane.b32.xlu0 %v695, 99
        %v883 = vpop.permute.xlu0 %882
        %884 = vrot.lane.b32.xlu0 %v696, 99
        %v885 = vpop.permute.xlu0 %884
        %886 = vrot.lane.b32.xlu0 %v681, 99
        %v887 = vpop.permute.xlu0 %886
        %888 = vrot.lane.b32.xlu0 %v697, 99
        %v889 = vpop.permute.xlu0 %888
        %890 = vrot.lane.b32.xlu0 %v698, 99
        %v891 = vpop.permute.xlu0 %890
        %892 = vrot.lane.b32.xlu0 %v699, 99
        %v893 = vpop.permute.xlu0 %892
        %894 = vrot.lane.b32.xlu0 %v700, 99
        %v895 = vpop.permute.xlu0 %894
        %896 = vrot.lane.b32.xlu0 %v691, 99
        %v897 = vpop.permute.xlu0 %896
        %898 = vrot.lane.b32.xlu0 %v722, 99
        %v899 = vpop.permute.xlu0 %898
        %900 = vrot.lane.b32.xlu0 %v723, 99
        %v901 = vpop.permute.xlu0 %900
        %902 = vrot.lane.b32.xlu0 %v724, 99
        %v903 = vpop.permute.xlu0 %902
        %904 = vrot.lane.b32.xlu0 %v725, 99
        %v905 = vpop.permute.xlu0 %904
        %906 = vrot.lane.b32.xlu0 %v710, 99
        %v907 = vpop.permute.xlu0 %906
        %908 = vrot.lane.b32.xlu0 %v726, 99
        %v909 = vpop.permute.xlu0 %908
        %910 = vrot.lane.b32.xlu0 %v727, 99
        %v911 = vpop.permute.xlu0 %910
        %912 = vrot.lane.b32.xlu0 %v728, 99
        %v913 = vpop.permute.xlu0 %912
        %914 = vrot.lane.b32.xlu0 %v729, 99
        %v915 = vpop.permute.xlu0 %914
        %916 = vrot.lane.b32.xlu0 %v720, 99
        %v917 = vpop.permute.xlu0 %916
        %vm918 = vcmask 809984
        %v919 = vsel %vm918, %v739, %v741
        %v920 = vsel %vm918, %v741, %v743
        %v921 = vsel %vm918, %v743, %v745
        %v922 = vsel %vm918, %v745, %v747
        %v923 = vsel %vm918, %v749, %v751
        %v924 = vsel %vm918, %v751, %v753
        %v925 = vsel %vm918, %v753, %v755
        %v926 = vsel %vm918, %v755, %v757
        %v927 = vsel %vm918, %v759, %v761
        %v928 = vsel %vm918, %v761, %v763
        %v929 = vsel %vm918, %v763, %v765
        %v930 = vsel %vm918, %v765, %v767
        %v931 = vsel %vm918, %v769, %v771
        %v932 = vsel %vm918, %v771, %v773
        %v933 = vsel %vm918, %v773, %v775
        %v934 = vsel %vm918, %v775, %v777
        %v935 = vsel %vm918, %v779, %v781
        %v936 = vsel %vm918, %v781, %v783
        %v937 = vsel %vm918, %v783, %v785
        %v938 = vsel %vm918, %v785, %v787
        %v939 = vsel %vm918, %v789, %v791
        %v940 = vsel %vm918, %v791, %v793
        %v941 = vsel %vm918, %v793, %v795
        %v942 = vsel %vm918, %v795, %v797
        %v943 = vsel %vm918, %v799, %v801
        %v944 = vsel %vm918, %v801, %v803
        %v945 = vsel %vm918, %v803, %v805
        %v946 = vsel %vm918, %v805, %v807
        %v947 = vsel %vm918, %v809, %v811
        %v948 = vsel %vm918, %v811, %v813
        %v949 = vsel %vm918, %v813, %v815
        %v950 = vsel %vm918, %v815, %v817
        %v951 = vsel %vm918, %v819, %v821
        %v952 = vsel %vm918, %v821, %v823
        %v953 = vsel %vm918, %v823, %v825
        %v954 = vsel %vm918, %v825, %v827
        %v955 = vsel %vm918, %v829, %v831
        %v956 = vsel %vm918, %v831, %v833
        %v957 = vsel %vm918, %v833, %v835
        %v958 = vsel %vm918, %v835, %v837
        %v959 = vsel %vm918, %v839, %v841
        %v960 = vsel %vm918, %v841, %v843
        %v961 = vsel %vm918, %v843, %v845
        %v962 = vsel %vm918, %v845, %v847
        %v963 = vsel %vm918, %v849, %v851
        %v964 = vsel %vm918, %v851, %v853
        %v965 = vsel %vm918, %v853, %v855
        %v966 = vsel %vm918, %v855, %v857
        %v967 = vsel %vm918, %v859, %v861
        %v968 = vsel %vm918, %v861, %v863
        %v969 = vsel %vm918, %v863, %v865
        %v970 = vsel %vm918, %v865, %v867
        %v971 = vsel %vm918, %v869, %v871
        %v972 = vsel %vm918, %v871, %v873
        %v973 = vsel %vm918, %v873, %v875
        %v974 = vsel %vm918, %v875, %v877
        %v975 = vsel %vm918, %v879, %v881
        %v976 = vsel %vm918, %v881, %v883
        %v977 = vsel %vm918, %v883, %v885
        %v978 = vsel %vm918, %v885, %v887
        %v979 = vsel %vm918, %v889, %v891
        %v980 = vsel %vm918, %v891, %v893
        %v981 = vsel %vm918, %v893, %v895
        %v982 = vsel %vm918, %v895, %v897
        %v983 = vsel %vm918, %v899, %v901
        %v984 = vsel %vm918, %v901, %v903
        %v985 = vsel %vm918, %v903, %v905
        %v986 = vsel %vm918, %v905, %v907
        %v987 = vsel %vm918, %v909, %v911
        %v988 = vsel %vm918, %v911, %v913
        %v989 = vsel %vm918, %v913, %v915
        %v990 = vsel %vm918, %v915, %v917
        %vm1063 = vcmask 130048
        %v1065 = vsel %vm1063, %v731, 0
        %1067 = vmatprep.subr.mxu0 %v980
        %1068 = vmatpush1.msra.mxu0 %v979
        %1069 = vmatprep.subr.mxu0 %v976
        %1070 = vmatpush1.msra.mxu0 %v975
        %1071 = vmatprep.subr.mxu0 %v972
        %1072 = vmatpush1.msra.mxu0 %v971
        %1073 = vmatprep.subr.mxu0 %v968
        %1074 = vmatpush1.msra.mxu0 %v967
        %1075 = vmatprep.subr.mxu0 %v964
        %1076 = vmatpush1.msra.mxu0 %v963
        %1077 = vmatprep.subr.mxu0 %v960
        %1078 = vmatpush1.msra.mxu0 %v959
        %1079 = vmatprep.subr.mxu0 %v956
        %1080 = vmatpush1.msra.mxu0 %v955
        %1081 = vmatprep.subr.mxu0 %v952
        %1082 = vmatpush1.msra.mxu0 %v951
        %1083 = vmatprep.subr.mxu0 %v948
        %1084 = vmatpush1.msra.mxu0 %v947
        %1085 = vmatprep.subr.mxu0 %v944
        %1086 = vmatpush1.msra.mxu0 %v943
        %1087 = vmatprep.subr.mxu0 %v940
        %1088 = vmatpush1.msra.mxu0 %v939
        %1089 = vmatprep.subr.mxu0 %v936
        %1090 = vmatpush1.msra.mxu0 %v935
        %1091 = vmatprep.subr.mxu0 %v932
        %1092 = vmatpush1.msra.mxu0 %v931
        %1093 = vmatprep.subr.mxu0 %v928
        %1094 = vmatpush1.msra.mxu0 %v927
        %1095 = vmatprep.subr.mxu0 %v924
        %1096 = vmatpush1.msra.mxu0 %v923
        %1097 = vmatprep.subr.mxu0 %v920
        %1098 = vmatpush1.msra.mxu0 %v919
        %1099 = vmatprep.subr.mxu0 0.0
        %1100 = vmatpush2.msra.mxu0 0.0
        %1101 = vmatprep.subr.mxu0 0.0
        %1102 = vmatpush2.msra.mxu0 0.0
        %1103 = vmatprep.subr.mxu0 0.0
        %1104 = vmatpush2.msra.mxu0 0.0
        %1105 = vmatprep.subr.mxu0 0.0
        %1106 = vmatpush2.msra.mxu0 0.0
        %1107 = vmatprep.subr.mxu0 0.0
        %1108 = vmatpush2.msra.mxu0 0.0
        %1109 = vmatprep.subr.mxu0 0.0
        %1110 = vmatpush2.msra.mxu0 0.0
        %1111 = vmatprep.subr.mxu0 0.0
        %1112 = vmatpush2.msra.mxu0 0.0
        %1113 = vmatprep.subr.mxu0 0.0
        %1114 = vmatpush2.msra.mxu0 0.0
        %1115 = vmatprep.subr.mxu0 0.0
        %1116 = vmatpush2.msra.mxu0 0.0
        %1117 = vmatprep.subr.mxu0 0.0
        %1118 = vmatpush2.msra.mxu0 0.0
        %1119 = vmatprep.subr.mxu0 0.0
        %1120 = vmatpush2.msra.mxu0 0.0
        %1121 = vmatprep.subr.mxu0 0.0
        %1122 = vmatpush2.msra.mxu0 0.0
        %1123 = vmatprep.subr.mxu0 0.0
        %1124 = vmatpush2.msra.mxu0 0.0
        %1125 = vmatprep.subr.mxu0 0.0
        %1126 = vmatpush2.msra.mxu0 0.0
        %1127 = vmatprep.subr.mxu0 %v988
        %1128 = vmatpush2.msra.mxu0 %v987
        %1129 = vmatprep.subr.mxu0 %v984
        %1130 = vmatpush2.msra.mxu0 %v983
        %1131 = vmatprep.mubr.f32.mxu0 %v1065
        %1132 = vmatmul.mubr.f32.gmra.mxu0 %v730
        %v1133 = vpop.f32.mrf.mxu0
        %v1134 = vadd.f32 %v736, %v1133
        %v1135 = vpop.f32.mrf.mxu0
        %v1136 = vadd.f32 %v736, %v1135
        %1137 = vdwg.mxu0
        %1138 = vmatprep.subr.mxu0 %v982
        %1139 = vmatpush1.msra.mxu0 %v981
        %1140 = vmatprep.subr.mxu0 %v978
        %1141 = vmatpush1.msra.mxu0 %v977
        %1142 = vmatprep.subr.mxu0 %v974
        %1143 = vmatpush1.msra.mxu0 %v973
        %1144 = vmatprep.subr.mxu0 %v970
        %1145 = vmatpush1.msra.mxu0 %v969
        %1146 = vmatprep.subr.mxu0 %v966
        %1147 = vmatpush1.msra.mxu0 %v965
        %1148 = vmatprep.subr.mxu0 %v962
        %1149 = vmatpush1.msra.mxu0 %v961
        %1150 = vmatprep.subr.mxu0 %v958
        %1151 = vmatpush1.msra.mxu0 %v957
        %1152 = vmatprep.subr.mxu0 %v954
        %1153 = vmatpush1.msra.mxu0 %v953
        %1154 = vmatprep.subr.mxu0 %v950
        %1155 = vmatpush1.msra.mxu0 %v949
        %1156 = vmatprep.subr.mxu0 %v946
        %1157 = vmatpush1.msra.mxu0 %v945
        %1158 = vmatprep.subr.mxu0 %v942
        %1159 = vmatpush1.msra.mxu0 %v941
        %1160 = vmatprep.subr.mxu0 %v938
        %1161 = vmatpush1.msra.mxu0 %v937
        %1162 = vmatprep.subr.mxu0 %v934
        %1163 = vmatpush1.msra.mxu0 %v933
        %1164 = vmatprep.subr.mxu0 %v930
        %1165 = vmatpush1.msra.mxu0 %v929
        %1166 = vmatprep.subr.mxu0 %v926
        %1167 = vmatpush1.msra.mxu0 %v925
        %1168 = vmatprep.subr.mxu0 %v922
        %1169 = vmatpush1.msra.mxu0 %v921
        %1170 = vmatprep.subr.mxu0 0.0
        %1171 = vmatpush2.msra.mxu0 0.0
        %1172 = vmatprep.subr.mxu0 0.0
        %1173 = vmatpush2.msra.mxu0 0.0
        %1174 = vmatprep.subr.mxu0 0.0
        %1175 = vmatpush2.msra.mxu0 0.0
        %1176 = vmatprep.subr.mxu0 0.0
        %1177 = vmatpush2.msra.mxu0 0.0
        %1178 = vmatprep.subr.mxu0 0.0
        %1179 = vmatpush2.msra.mxu0 0.0
        %1180 = vmatprep.subr.mxu0 0.0
        %1181 = vmatpush2.msra.mxu0 0.0
        %1182 = vmatprep.subr.mxu0 0.0
        %1183 = vmatpush2.msra.mxu0 0.0
        %1184 = vmatprep.subr.mxu0 0.0
        %1185 = vmatpush2.msra.mxu0 0.0
        %1186 = vmatprep.subr.mxu0 0.0
        %1187 = vmatpush2.msra.mxu0 0.0
        %1188 = vmatprep.subr.mxu0 0.0
        %1189 = vmatpush2.msra.mxu0 0.0
        %1190 = vmatprep.subr.mxu0 0.0
        %1191 = vmatpush2.msra.mxu0 0.0
        %1192 = vmatprep.subr.mxu0 0.0
        %1193 = vmatpush2.msra.mxu0 0.0
        %1194 = vmatprep.subr.mxu0 0.0
        %1195 = vmatpush2.msra.mxu0 0.0
        %1196 = vmatprep.subr.mxu0 0.0
        %1197 = vmatpush2.msra.mxu0 0.0
        %1198 = vmatprep.subr.mxu0 %v990
        %1199 = vmatpush2.msra.mxu0 %v989
        %1200 = vmatprep.subr.mxu0 %v986
        %1201 = vmatpush2.msra.mxu0 %v985
        %1202 = vmatprep.mubr.f32.mxu0 %v1065
        %1203 = vmatmul.mubr.f32.gmra.mxu0 %v730
        %v1204 = vpop.f32.mrf.mxu0
        %v1205 = vadd.f32 %v736, %v1204
        %v1206 = vpop.f32.mrf.mxu0
        %v1207 = vadd.f32 %v736, %v1206
        %1208 = vdwg.mxu0
        %v1209 = vmax.f32 %v1134, 0.0
        %v1210 = vmax.f32 %v1136, 0.0
        %v1211 = vmax.f32 %v1205, 0.0
        %v1212 = vmax.f32 %v1207, 0.0
        %v1214 = vlaneseq
        %v1215 = vshrl.u32 %v1214, 7
        %v1216 = vsub.s32 0, %v1215
        %v1217 = vrot.slane %v479, %v1216
        %v1218 = vlaneseq
        %v1219 = vshrl.u32 %v1218, 7
        %v1220 = vsub.s32 1, %v1219
        %v1221 = vrot.slane %v479, %v1220
        %v1222 = vlaneseq
        %v1223 = vshrl.u32 %v1222, 7
        %v1224 = vsub.s32 2, %v1223
        %v1225 = vrot.slane %v479, %v1224
        %v1226 = vlaneseq
        %v1227 = vshrl.u32 %v1226, 7
        %v1228 = vsub.s32 3, %v1227
        %v1229 = vrot.slane %v479, %v1228
        %v1234 = vmul.f32 %v1209, %v1217
        %v1235 = vmul.f32 %v1210, %v1221
        %v1236 = vmul.f32 %v1211, %v1225
        %v1237 = vmul.f32 %v1212, %v1229
        %1238 = vst [vmem:[#allocation2 + $0xe0] sm:$0xff] %v1234
        %1239 = vst [vmem:[#allocation2 + $0xe8] sm:$0xff] %v1235
        %1240 = vst [vmem:[#allocation2 + $0xf0] sm:$0xff] %v1236
        %1241 = vst [vmem:[#allocation2 + $0xf8] sm:$0xff] %v1237
        %v1242 = vld [vmem:[#allocation2 + $0x10] sm:$0xff]
        %v1243 = vld [vmem:[#allocation2 + $0x18] sm:$0xff]
        %v1244 = vld [vmem:[#allocation2 + $0x20] sm:$0xff]
        %v1245 = vld [vmem:[#allocation2 + $0x28] sm:$0xff]
        %v1246 = vld [vmem:[#allocation2 + $0x30] sm:$0xff]
        %v1247 = vld [vmem:[#allocation2 + $0x70] sm:$0xff]
        %v1248 = vld [vmem:[#allocation2 + $0x78] sm:$0xff]
        %v1249 = vld [vmem:[#allocation2 + $0x80] sm:$0xff]
        %v1250 = vld [vmem:[#allocation2 + $0x88] sm:$0xff]
        %v1251 = vld [vmem:[#allocation2 + $0x90] sm:$0xff]
        %v1252 = vld [vmem:[#allocation2 + $0xd0] sm:$0xff]
        %v1253 = vld [vmem:[#allocation2 + $0xd8] sm:$0xff]
        %v1254 = vld [vmem:[#allocation2 + $0xe0] sm:$0xff]
        %v1255 = vld [vmem:[#allocation2 + $0xe8] sm:$0xff]
        %v1256 = vld [vmem:[#allocation2 + $0xf0] sm:$0xff]
        %v1257 = vld [vmem:[#allocation2 + $0x38] sm:$0xff]
        %v1258 = vld [vmem:[#allocation2 + $0x98] sm:$0xff]
        %v1259 = vld [vmem:[#allocation2 + $0xf8] sm:$0xff]
        %v1260 = vld [vmem:[#allocation2 + $0x40] sm:$0xff]
        %v1261 = vld [vmem:[#allocation2 + $0xa0] sm:$0xff]
        %v1262 = vld [vmem:[#allocation2 + $0x100] sm:$0xff]
        %v1263 = vld [vmem:[#allocation2 + $0x48] sm:$0xff]
        %v1264 = vld [vmem:[#allocation2 + $0xa8] sm:$0xff]
        %v1265 = vld [vmem:[#allocation2 + $0x108] sm:$0xff]
        %1281 = vrot.lane.b32.xlu0 %v1242, 122
        %v1282 = vpop.permute.xlu0 %1281
        %1283 = vrot.lane.b32.xlu0 %v1243, 122
        %v1284 = vpop.permute.xlu0 %1283
        %1285 = vrot.lane.b32.xlu0 %v1244, 122
        %v1286 = vpop.permute.xlu0 %1285
        %1287 = vrot.lane.b32.xlu0 %v1245, 122
        %v1288 = vpop.permute.xlu0 %1287
        %1289 = vrot.lane.b32.xlu0 %v1246, 122
        %v1290 = vpop.permute.xlu0 %1289
        %1291 = vrot.lane.b32.xlu0 %v1247, 122
        %v1292 = vpop.permute.xlu0 %1291
        %1293 = vrot.lane.b32.xlu0 %v1248, 122
        %v1294 = vpop.permute.xlu0 %1293
        %1295 = vrot.lane.b32.xlu0 %v1249, 122
        %v1296 = vpop.permute.xlu0 %1295
        %1297 = vrot.lane.b32.xlu0 %v1250, 122
        %v1298 = vpop.permute.xlu0 %1297
        %1299 = vrot.lane.b32.xlu0 %v1251, 122
        %v1300 = vpop.permute.xlu0 %1299
        %1301 = vrot.lane.b32.xlu0 %v1252, 122
        %v1302 = vpop.permute.xlu0 %1301
        %1303 = vrot.lane.b32.xlu0 %v1253, 122
        %v1304 = vpop.permute.xlu0 %1303
        %1305 = vrot.lane.b32.xlu0 %v1254, 122
        %v1306 = vpop.permute.xlu0 %1305
        %1307 = vrot.lane.b32.xlu0 %v1255, 122
        %v1308 = vpop.permute.xlu0 %1307
        %1309 = vrot.lane.b32.xlu0 %v1256, 122
        %v1310 = vpop.permute.xlu0 %1309
        %v1311 = vsel %vm551, %v1282, %v1284
        %v1312 = vsel %vm551, %v1284, %v1286
        %v1313 = vsel %vm551, %v1286, %v1288
        %v1314 = vsel %vm551, %v1288, %v1290
        %v1315 = vsel %vm551, %v1292, %v1294
        %v1316 = vsel %vm551, %v1294, %v1296
        %v1317 = vsel %vm551, %v1296, %v1298
        %v1318 = vsel %vm551, %v1298, %v1300
        %v1319 = vsel %vm551, %v1302, %v1304
        %v1320 = vsel %vm551, %v1304, %v1306
        %v1321 = vsel %vm551, %v1306, %v1308
        %v1322 = vsel %vm551, %v1308, %v1310
        %1323 = vrot.lane.b32.xlu0 %v1242, 116
        %v1324 = vpop.permute.xlu0 %1323
        %1325 = vrot.lane.b32.xlu0 %v1243, 116
        %v1326 = vpop.permute.xlu0 %1325
        %1327 = vrot.lane.b32.xlu0 %v1244, 116
        %v1328 = vpop.permute.xlu0 %1327
        %1329 = vrot.lane.b32.xlu0 %v1245, 116
        %v1330 = vpop.permute.xlu0 %1329
        %1331 = vrot.lane.b32.xlu0 %v1246, 116
        %v1332 = vpop.permute.xlu0 %1331
        %1333 = vrot.lane.b32.xlu0 %v1247, 116
        %v1334 = vpop.permute.xlu0 %1333
        %1335 = vrot.lane.b32.xlu0 %v1248, 116
        %v1336 = vpop.permute.xlu0 %1335
        %1337 = vrot.lane.b32.xlu0 %v1249, 116
        %v1338 = vpop.permute.xlu0 %1337
        %1339 = vrot.lane.b32.xlu0 %v1250, 116
        %v1340 = vpop.permute.xlu0 %1339
        %1341 = vrot.lane.b32.xlu0 %v1251, 116
        %v1342 = vpop.permute.xlu0 %1341
        %1343 = vrot.lane.b32.xlu0 %v1252, 116
        %v1344 = vpop.permute.xlu0 %1343
        %1345 = vrot.lane.b32.xlu0 %v1253, 116
        %v1346 = vpop.permute.xlu0 %1345
        %1347 = vrot.lane.b32.xlu0 %v1254, 116
        %v1348 = vpop.permute.xlu0 %1347
        %1349 = vrot.lane.b32.xlu0 %v1255, 116
        %v1350 = vpop.permute.xlu0 %1349
        %1351 = vrot.lane.b32.xlu0 %v1256, 116
        %v1352 = vpop.permute.xlu0 %1351
        %vm1353 = vcmask 949248
        %v1354 = vsel %vm1353, %v1324, %v1326
        %v1355 = vsel %vm1353, %v1326, %v1328
        %v1356 = vsel %vm1353, %v1328, %v1330
        %v1357 = vsel %vm1353, %v1330, %v1332
        %v1358 = vsel %vm1353, %v1334, %v1336
        %v1359 = vsel %vm1353, %v1336, %v1338
        %v1360 = vsel %vm1353, %v1338, %v1340
        %v1361 = vsel %vm1353, %v1340, %v1342
        %v1362 = vsel %vm1353, %v1344, %v1346
        %v1363 = vsel %vm1353, %v1346, %v1348
        %v1364 = vsel %vm1353, %v1348, %v1350
        %v1365 = vsel %vm1353, %v1350, %v1352
        %1369 = vrot.lane.b32.xlu0 %v1243, 64
        %v1370 = vpop.permute.xlu0 %1369
        %1371 = vrot.lane.b32.xlu0 %v1244, 64
        %v1372 = vpop.permute.xlu0 %1371
        %1373 = vrot.lane.b32.xlu0 %v1245, 64
        %v1374 = vpop.permute.xlu0 %1373
        %1375 = vrot.lane.b32.xlu0 %v1246, 64
        %v1376 = vpop.permute.xlu0 %1375
        %1377 = vrot.lane.b32.xlu0 %v1257, 64
        %v1378 = vpop.permute.xlu0 %1377
        %1379 = vrot.lane.b32.xlu0 %v1248, 64
        %v1380 = vpop.permute.xlu0 %1379
        %1381 = vrot.lane.b32.xlu0 %v1249, 64
        %v1382 = vpop.permute.xlu0 %1381
        %1383 = vrot.lane.b32.xlu0 %v1250, 64
        %v1384 = vpop.permute.xlu0 %1383
        %1385 = vrot.lane.b32.xlu0 %v1251, 64
        %v1386 = vpop.permute.xlu0 %1385
        %1387 = vrot.lane.b32.xlu0 %v1258, 64
        %v1388 = vpop.permute.xlu0 %1387
        %1389 = vrot.lane.b32.xlu0 %v1253, 64
        %v1390 = vpop.permute.xlu0 %1389
        %1391 = vrot.lane.b32.xlu0 %v1254, 64
        %v1392 = vpop.permute.xlu0 %1391
        %1393 = vrot.lane.b32.xlu0 %v1255, 64
        %v1394 = vpop.permute.xlu0 %1393
        %1395 = vrot.lane.b32.xlu0 %v1256, 64
        %v1396 = vpop.permute.xlu0 %1395
        %1397 = vrot.lane.b32.xlu0 %v1259, 64
        %v1398 = vpop.permute.xlu0 %1397
        %v1399 = vsel %vm663, %v1370, %v1372
        %v1400 = vsel %vm663, %v1372, %v1374
        %v1401 = vsel %vm663, %v1374, %v1376
        %v1402 = vsel %vm663, %v1376, %v1378
        %v1403 = vsel %vm663, %v1380, %v1382
        %v1404 = vsel %vm663, %v1382, %v1384
        %v1405 = vsel %vm663, %v1384, %v1386
        %v1406 = vsel %vm663, %v1386, %v1388
        %v1407 = vsel %vm663, %v1390, %v1392
        %v1408 = vsel %vm663, %v1392, %v1394
        %v1409 = vsel %vm663, %v1394, %v1396
        %v1410 = vsel %vm663, %v1396, %v1398
        %1411 = vrot.lane.b32.xlu0 %v1244, 58
        %v1412 = vpop.permute.xlu0 %1411
        %1413 = vrot.lane.b32.xlu0 %v1245, 58
        %v1414 = vpop.permute.xlu0 %1413
        %1415 = vrot.lane.b32.xlu0 %v1246, 58
        %v1416 = vpop.permute.xlu0 %1415
        %1417 = vrot.lane.b32.xlu0 %v1257, 58
        %v1418 = vpop.permute.xlu0 %1417
        %1419 = vrot.lane.b32.xlu0 %v1249, 58
        %v1420 = vpop.permute.xlu0 %1419
        %1421 = vrot.lane.b32.xlu0 %v1250, 58
        %v1422 = vpop.permute.xlu0 %1421
        %1423 = vrot.lane.b32.xlu0 %v1251, 58
        %v1424 = vpop.permute.xlu0 %1423
        %1425 = vrot.lane.b32.xlu0 %v1258, 58
        %v1426 = vpop.permute.xlu0 %1425
        %1427 = vrot.lane.b32.xlu0 %v1254, 58
        %v1428 = vpop.permute.xlu0 %1427
        %1429 = vrot.lane.b32.xlu0 %v1255, 58
        %v1430 = vpop.permute.xlu0 %1429
        %1431 = vrot.lane.b32.xlu0 %v1256, 58
        %v1432 = vpop.permute.xlu0 %1431
        %1433 = vrot.lane.b32.xlu0 %v1259, 58
        %v1434 = vpop.permute.xlu0 %1433
        %v1435 = vsel %vm721, %v1412, %v1414
        %v1436 = vsel %vm721, %v1414, %v1416
        %v1437 = vsel %vm721, %v1416, %v1418
        %v1438 = vsel %vm721, %v1420, %v1422
        %v1439 = vsel %vm721, %v1422, %v1424
        %v1440 = vsel %vm721, %v1424, %v1426
        %v1441 = vsel %vm721, %v1428, %v1430
        %v1442 = vsel %vm721, %v1430, %v1432
        %v1443 = vsel %vm721, %v1432, %v1434
        %1447 = vrot.lane.b32.xlu0 %v1244, 52
        %v1448 = vpop.permute.xlu0 %1447
        %1449 = vrot.lane.b32.xlu0 %v1245, 52
        %v1450 = vpop.permute.xlu0 %1449
        %1451 = vrot.lane.b32.xlu0 %v1246, 52
        %v1452 = vpop.permute.xlu0 %1451
        %1453 = vrot.lane.b32.xlu0 %v1257, 52
        %v1454 = vpop.permute.xlu0 %1453
        %1455 = vrot.lane.b32.xlu0 %v1260, 52
        %v1456 = vpop.permute.xlu0 %1455
        %1457 = vrot.lane.b32.xlu0 %v1249, 52
        %v1458 = vpop.permute.xlu0 %1457
        %1459 = vrot.lane.b32.xlu0 %v1250, 52
        %v1460 = vpop.permute.xlu0 %1459
        %1461 = vrot.lane.b32.xlu0 %v1251, 52
        %v1462 = vpop.permute.xlu0 %1461
        %1463 = vrot.lane.b32.xlu0 %v1258, 52
        %v1464 = vpop.permute.xlu0 %1463
        %1465 = vrot.lane.b32.xlu0 %v1261, 52
        %v1466 = vpop.permute.xlu0 %1465
        %1467 = vrot.lane.b32.xlu0 %v1254, 52
        %v1468 = vpop.permute.xlu0 %1467
        %1469 = vrot.lane.b32.xlu0 %v1255, 52
        %v1470 = vpop.permute.xlu0 %1469
        %1471 = vrot.lane.b32.xlu0 %v1256, 52
        %v1472 = vpop.permute.xlu0 %1471
        %1473 = vrot.lane.b32.xlu0 %v1259, 52
        %v1474 = vpop.permute.xlu0 %1473
        %1475 = vrot.lane.b32.xlu0 %v1262, 52
        %v1476 = vpop.permute.xlu0 %1475
        %vm1477 = vcmask 424960
        %v1478 = vsel %vm1477, %v1448, %v1450
        %v1479 = vsel %vm1477, %v1450, %v1452
        %v1480 = vsel %vm1477, %v1452, %v1454
        %v1481 = vsel %vm1477, %v1454, %v1456
        %v1482 = vsel %vm1477, %v1458, %v1460
        %v1483 = vsel %vm1477, %v1460, %v1462
        %v1484 = vsel %vm1477, %v1462, %v1464
        %v1485 = vsel %vm1477, %v1464, %v1466
        %v1486 = vsel %vm1477, %v1468, %v1470
        %v1487 = vsel %vm1477, %v1470, %v1472
        %v1488 = vsel %vm1477, %v1472, %v1474
        %v1489 = vsel %vm1477, %v1474, %v1476
        %1493 = vrot.lane.b32.xlu0 %v1257, 122
        %v1494 = vpop.permute.xlu0 %1493
        %1495 = vrot.lane.b32.xlu0 %v1260, 122
        %v1496 = vpop.permute.xlu0 %1495
        %1497 = vrot.lane.b32.xlu0 %v1263, 122
        %v1498 = vpop.permute.xlu0 %1497
        %1499 = vrot.lane.b32.xlu0 %v1258, 122
        %v1500 = vpop.permute.xlu0 %1499
        %1501 = vrot.lane.b32.xlu0 %v1261, 122
        %v1502 = vpop.permute.xlu0 %1501
        %1503 = vrot.lane.b32.xlu0 %v1264, 122
        %v1504 = vpop.permute.xlu0 %1503
        %1505 = vrot.lane.b32.xlu0 %v1259, 122
        %v1506 = vpop.permute.xlu0 %1505
        %1507 = vrot.lane.b32.xlu0 %v1262, 122
        %v1508 = vpop.permute.xlu0 %1507
        %1509 = vrot.lane.b32.xlu0 %v1265, 122
        %v1510 = vpop.permute.xlu0 %1509
        %v1511 = vsel %vm551, %v1290, %v1494
        %v1512 = vsel %vm551, %v1494, %v1496
        %v1513 = vsel %vm551, %v1496, %v1498
        %v1514 = vsel %vm551, %v1300, %v1500
        %v1515 = vsel %vm551, %v1500, %v1502
        %v1516 = vsel %vm551, %v1502, %v1504
        %v1517 = vsel %vm551, %v1310, %v1506
        %v1518 = vsel %vm551, %v1506, %v1508
        %v1519 = vsel %vm551, %v1508, %v1510
        %1520 = vrot.lane.b32.xlu0 %v1257, 116
        %v1521 = vpop.permute.xlu0 %1520
        %1522 = vrot.lane.b32.xlu0 %v1260, 116
        %v1523 = vpop.permute.xlu0 %1522
        %1524 = vrot.lane.b32.xlu0 %v1263, 116
        %v1525 = vpop.permute.xlu0 %1524
        %1526 = vrot.lane.b32.xlu0 %v1258, 116
        %v1527 = vpop.permute.xlu0 %1526
        %1528 = vrot.lane.b32.xlu0 %v1261, 116
        %v1529 = vpop.permute.xlu0 %1528
        %1530 = vrot.lane.b32.xlu0 %v1264, 116
        %v1531 = vpop.permute.xlu0 %1530
        %1532 = vrot.lane.b32.xlu0 %v1259, 116
        %v1533 = vpop.permute.xlu0 %1532
        %1534 = vrot.lane.b32.xlu0 %v1262, 116
        %v1535 = vpop.permute.xlu0 %1534
        %1536 = vrot.lane.b32.xlu0 %v1265, 116
        %v1537 = vpop.permute.xlu0 %1536
        %v1538 = vsel %vm1353, %v1332, %v1521
        %v1539 = vsel %vm1353, %v1521, %v1523
        %v1540 = vsel %vm1353, %v1523, %v1525
        %v1541 = vsel %vm1353, %v1342, %v1527
        %v1542 = vsel %vm1353, %v1527, %v1529
        %v1543 = vsel %vm1353, %v1529, %v1531
        %v1544 = vsel %vm1353, %v1352, %v1533
        %v1545 = vsel %vm1353, %v1533, %v1535
        %v1546 = vsel %vm1353, %v1535, %v1537
        %v1547 = vld [vmem:[%s3] sm:$0xff]
        %v1548 = vld [vmem:[%s3 + $0x8] sm:$0xff]
        %v1549 = vld [vmem:[%s7 + $0x8] sm:$0xff]
        %1551 = vset.pattern.permute.xlu0 0
        %1552 = vperm.xlu0 %1551, %v1549
        %v1553 = vpop.permute.xlu0 %1552
        %1555 = vrot.lane.b32.xlu0 %v1242, 70
        %v1556 = vpop.permute.xlu0 %1555
        %1557 = vrot.lane.b32.xlu0 %v1243, 70
        %v1558 = vpop.permute.xlu0 %1557
        %1559 = vrot.lane.b32.xlu0 %v1244, 70
        %v1560 = vpop.permute.xlu0 %1559
        %1561 = vrot.lane.b32.xlu0 %v1245, 70
        %v1562 = vpop.permute.xlu0 %1561
        %1563 = vrot.lane.b32.xlu0 %v1246, 70
        %v1564 = vpop.permute.xlu0 %1563
        %1565 = vrot.lane.b32.xlu0 %v1247, 70
        %v1566 = vpop.permute.xlu0 %1565
        %1567 = vrot.lane.b32.xlu0 %v1248, 70
        %v1568 = vpop.permute.xlu0 %1567
        %1569 = vrot.lane.b32.xlu0 %v1249, 70
        %v1570 = vpop.permute.xlu0 %1569
        %1571 = vrot.lane.b32.xlu0 %v1250, 70
        %v1572 = vpop.permute.xlu0 %1571
        %1573 = vrot.lane.b32.xlu0 %v1251, 70
        %v1574 = vpop.permute.xlu0 %1573
        %1575 = vrot.lane.b32.xlu0 %v1252, 70
        %v1576 = vpop.permute.xlu0 %1575
        %1577 = vrot.lane.b32.xlu0 %v1253, 70
        %v1578 = vpop.permute.xlu0 %1577
        %1579 = vrot.lane.b32.xlu0 %v1254, 70
        %v1580 = vpop.permute.xlu0 %1579
        %1581 = vrot.lane.b32.xlu0 %v1255, 70
        %v1582 = vpop.permute.xlu0 %1581
        %1583 = vrot.lane.b32.xlu0 %v1256, 70
        %v1584 = vpop.permute.xlu0 %1583
        %1585 = vrot.lane.b32.xlu0 %v1311, 70
        %v1586 = vpop.permute.xlu0 %1585
        %1587 = vrot.lane.b32.xlu0 %v1312, 70
        %v1588 = vpop.permute.xlu0 %1587
        %1589 = vrot.lane.b32.xlu0 %v1313, 70
        %v1590 = vpop.permute.xlu0 %1589
        %1591 = vrot.lane.b32.xlu0 %v1314, 70
        %v1592 = vpop.permute.xlu0 %1591
        %1593 = vrot.lane.b32.xlu0 %v1290, 70
        %v1594 = vpop.permute.xlu0 %1593
        %1595 = vrot.lane.b32.xlu0 %v1315, 70
        %v1596 = vpop.permute.xlu0 %1595
        %1597 = vrot.lane.b32.xlu0 %v1316, 70
        %v1598 = vpop.permute.xlu0 %1597
        %1599 = vrot.lane.b32.xlu0 %v1317, 70
        %v1600 = vpop.permute.xlu0 %1599
        %1601 = vrot.lane.b32.xlu0 %v1318, 70
        %v1602 = vpop.permute.xlu0 %1601
        %1603 = vrot.lane.b32.xlu0 %v1300, 70
        %v1604 = vpop.permute.xlu0 %1603
        %1605 = vrot.lane.b32.xlu0 %v1319, 70
        %v1606 = vpop.permute.xlu0 %1605
        %1607 = vrot.lane.b32.xlu0 %v1320, 70
        %v1608 = vpop.permute.xlu0 %1607
        %1609 = vrot.lane.b32.xlu0 %v1321, 70
        %v1610 = vpop.permute.xlu0 %1609
        %1611 = vrot.lane.b32.xlu0 %v1322, 70
        %v1612 = vpop.permute.xlu0 %1611
        %1613 = vrot.lane.b32.xlu0 %v1310, 70
        %v1614 = vpop.permute.xlu0 %1613
        %1615 = vrot.lane.b32.xlu0 %v1354, 70
        %v1616 = vpop.permute.xlu0 %1615
        %1617 = vrot.lane.b32.xlu0 %v1355, 70
        %v1618 = vpop.permute.xlu0 %1617
        %1619 = vrot.lane.b32.xlu0 %v1356, 70
        %v1620 = vpop.permute.xlu0 %1619
        %1621 = vrot.lane.b32.xlu0 %v1357, 70
        %v1622 = vpop.permute.xlu0 %1621
        %1623 = vrot.lane.b32.xlu0 %v1332, 70
        %v1624 = vpop.permute.xlu0 %1623
        %1625 = vrot.lane.b32.xlu0 %v1358, 70
        %v1626 = vpop.permute.xlu0 %1625
        %1627 = vrot.lane.b32.xlu0 %v1359, 70
        %v1628 = vpop.permute.xlu0 %1627
        %1629 = vrot.lane.b32.xlu0 %v1360, 70
        %v1630 = vpop.permute.xlu0 %1629
        %1631 = vrot.lane.b32.xlu0 %v1361, 70
        %v1632 = vpop.permute.xlu0 %1631
        %1633 = vrot.lane.b32.xlu0 %v1342, 70
        %v1634 = vpop.permute.xlu0 %1633
        %1635 = vrot.lane.b32.xlu0 %v1362, 70
        %v1636 = vpop.permute.xlu0 %1635
        %1637 = vrot.lane.b32.xlu0 %v1363, 70
        %v1638 = vpop.permute.xlu0 %1637
        %1639 = vrot.lane.b32.xlu0 %v1364, 70
        %v1640 = vpop.permute.xlu0 %1639
        %1641 = vrot.lane.b32.xlu0 %v1365, 70
        %v1642 = vpop.permute.xlu0 %1641
        %1643 = vrot.lane.b32.xlu0 %v1352, 70
        %v1644 = vpop.permute.xlu0 %1643
        %1645 = vrot.lane.b32.xlu0 %v1399, 70
        %v1646 = vpop.permute.xlu0 %1645
        %1647 = vrot.lane.b32.xlu0 %v1400, 70
        %v1648 = vpop.permute.xlu0 %1647
        %1649 = vrot.lane.b32.xlu0 %v1401, 70
        %v1650 = vpop.permute.xlu0 %1649
        %1651 = vrot.lane.b32.xlu0 %v1402, 70
        %v1652 = vpop.permute.xlu0 %1651
        %1653 = vrot.lane.b32.xlu0 %v1378, 70
        %v1654 = vpop.permute.xlu0 %1653
        %1655 = vrot.lane.b32.xlu0 %v1403, 70
        %v1656 = vpop.permute.xlu0 %1655
        %1657 = vrot.lane.b32.xlu0 %v1404, 70
        %v1658 = vpop.permute.xlu0 %1657
        %1659 = vrot.lane.b32.xlu0 %v1405, 70
        %v1660 = vpop.permute.xlu0 %1659
        %1661 = vrot.lane.b32.xlu0 %v1406, 70
        %v1662 = vpop.permute.xlu0 %1661
        %1663 = vrot.lane.b32.xlu0 %v1388, 70
        %v1664 = vpop.permute.xlu0 %1663
        %1665 = vrot.lane.b32.xlu0 %v1407, 70
        %v1666 = vpop.permute.xlu0 %1665
        %1667 = vrot.lane.b32.xlu0 %v1408, 70
        %v1668 = vpop.permute.xlu0 %1667
        %1669 = vrot.lane.b32.xlu0 %v1409, 70
        %v1670 = vpop.permute.xlu0 %1669
        %1671 = vrot.lane.b32.xlu0 %v1410, 70
        %v1672 = vpop.permute.xlu0 %1671
        %1673 = vrot.lane.b32.xlu0 %v1398, 70
        %v1674 = vpop.permute.xlu0 %1673
        %1675 = vrot.lane.b32.xlu0 %v1412, 70
        %v1676 = vpop.permute.xlu0 %1675
        %1677 = vrot.lane.b32.xlu0 %v1435, 70
        %v1678 = vpop.permute.xlu0 %1677
        %1679 = vrot.lane.b32.xlu0 %v1436, 70
        %v1680 = vpop.permute.xlu0 %1679
        %1681 = vrot.lane.b32.xlu0 %v1437, 70
        %v1682 = vpop.permute.xlu0 %1681
        %1683 = vrot.lane.b32.xlu0 %v1418, 70
        %v1684 = vpop.permute.xlu0 %1683
        %1685 = vrot.lane.b32.xlu0 %v1420, 70
        %v1686 = vpop.permute.xlu0 %1685
        %1687 = vrot.lane.b32.xlu0 %v1438, 70
        %v1688 = vpop.permute.xlu0 %1687
        %1689 = vrot.lane.b32.xlu0 %v1439, 70
        %v1690 = vpop.permute.xlu0 %1689
        %1691 = vrot.lane.b32.xlu0 %v1440, 70
        %v1692 = vpop.permute.xlu0 %1691
        %1693 = vrot.lane.b32.xlu0 %v1426, 70
        %v1694 = vpop.permute.xlu0 %1693
        %1695 = vrot.lane.b32.xlu0 %v1428, 70
        %v1696 = vpop.permute.xlu0 %1695
        %1697 = vrot.lane.b32.xlu0 %v1441, 70
        %v1698 = vpop.permute.xlu0 %1697
        %1699 = vrot.lane.b32.xlu0 %v1442, 70
        %v1700 = vpop.permute.xlu0 %1699
        %1701 = vrot.lane.b32.xlu0 %v1443, 70
        %v1702 = vpop.permute.xlu0 %1701
        %1703 = vrot.lane.b32.xlu0 %v1434, 70
        %v1704 = vpop.permute.xlu0 %1703
        %1705 = vrot.lane.b32.xlu0 %v1448, 70
        %v1706 = vpop.permute.xlu0 %1705
        %1707 = vrot.lane.b32.xlu0 %v1478, 70
        %v1708 = vpop.permute.xlu0 %1707
        %1709 = vrot.lane.b32.xlu0 %v1479, 70
        %v1710 = vpop.permute.xlu0 %1709
        %1711 = vrot.lane.b32.xlu0 %v1480, 70
        %v1712 = vpop.permute.xlu0 %1711
        %1713 = vrot.lane.b32.xlu0 %v1481, 70
        %v1714 = vpop.permute.xlu0 %1713
        %1715 = vrot.lane.b32.xlu0 %v1458, 70
        %v1716 = vpop.permute.xlu0 %1715
        %1717 = vrot.lane.b32.xlu0 %v1482, 70
        %v1718 = vpop.permute.xlu0 %1717
        %1719 = vrot.lane.b32.xlu0 %v1483, 70
        %v1720 = vpop.permute.xlu0 %1719
        %1721 = vrot.lane.b32.xlu0 %v1484, 70
        %v1722 = vpop.permute.xlu0 %1721
        %1723 = vrot.lane.b32.xlu0 %v1485, 70
        %v1724 = vpop.permute.xlu0 %1723
        %1725 = vrot.lane.b32.xlu0 %v1468, 70
        %v1726 = vpop.permute.xlu0 %1725
        %1727 = vrot.lane.b32.xlu0 %v1486, 70
        %v1728 = vpop.permute.xlu0 %1727
        %1729 = vrot.lane.b32.xlu0 %v1487, 70
        %v1730 = vpop.permute.xlu0 %1729
        %1731 = vrot.lane.b32.xlu0 %v1488, 70
        %v1732 = vpop.permute.xlu0 %1731
        %1733 = vrot.lane.b32.xlu0 %v1489, 70
        %v1734 = vpop.permute.xlu0 %1733
        %1735 = vrot.lane.b32.xlu0 %v1257, 70
        %v1736 = vpop.permute.xlu0 %1735
        %1737 = vrot.lane.b32.xlu0 %v1260, 70
        %v1738 = vpop.permute.xlu0 %1737
        %1739 = vrot.lane.b32.xlu0 %v1263, 70
        %v1740 = vpop.permute.xlu0 %1739
        %1741 = vrot.lane.b32.xlu0 %v1258, 70
        %v1742 = vpop.permute.xlu0 %1741
        %1743 = vrot.lane.b32.xlu0 %v1261, 70
        %v1744 = vpop.permute.xlu0 %1743
        %1745 = vrot.lane.b32.xlu0 %v1264, 70
        %v1746 = vpop.permute.xlu0 %1745
        %1747 = vrot.lane.b32.xlu0 %v1259, 70
        %v1748 = vpop.permute.xlu0 %1747
        %1749 = vrot.lane.b32.xlu0 %v1262, 70
        %v1750 = vpop.permute.xlu0 %1749
        %1751 = vrot.lane.b32.xlu0 %v1265, 70
        %v1752 = vpop.permute.xlu0 %1751
        %1753 = vrot.lane.b32.xlu0 %v1511, 70
        %v1754 = vpop.permute.xlu0 %1753
        %1755 = vrot.lane.b32.xlu0 %v1512, 70
        %v1756 = vpop.permute.xlu0 %1755
        %1757 = vrot.lane.b32.xlu0 %v1513, 70
        %v1758 = vpop.permute.xlu0 %1757
        %1759 = vrot.lane.b32.xlu0 %v1498, 70
        %v1760 = vpop.permute.xlu0 %1759
        %1761 = vrot.lane.b32.xlu0 %v1514, 70
        %v1762 = vpop.permute.xlu0 %1761
        %1763 = vrot.lane.b32.xlu0 %v1515, 70
        %v1764 = vpop.permute.xlu0 %1763
        %1765 = vrot.lane.b32.xlu0 %v1516, 70
        %v1766 = vpop.permute.xlu0 %1765
        %1767 = vrot.lane.b32.xlu0 %v1504, 70
        %v1768 = vpop.permute.xlu0 %1767
        %1769 = vrot.lane.b32.xlu0 %v1517, 70
        %v1770 = vpop.permute.xlu0 %1769
        %1771 = vrot.lane.b32.xlu0 %v1518, 70
        %v1772 = vpop.permute.xlu0 %1771
        %1773 = vrot.lane.b32.xlu0 %v1519, 70
        %v1774 = vpop.permute.xlu0 %1773
        %1775 = vrot.lane.b32.xlu0 %v1510, 70
        %v1776 = vpop.permute.xlu0 %1775
        %1777 = vrot.lane.b32.xlu0 %v1538, 70
        %v1778 = vpop.permute.xlu0 %1777
        %1779 = vrot.lane.b32.xlu0 %v1539, 70
        %v1780 = vpop.permute.xlu0 %1779
        %1781 = vrot.lane.b32.xlu0 %v1540, 70
        %v1782 = vpop.permute.xlu0 %1781
        %1783 = vrot.lane.b32.xlu0 %v1525, 70
        %v1784 = vpop.permute.xlu0 %1783
        %1785 = vrot.lane.b32.xlu0 %v1541, 70
        %v1786 = vpop.permute.xlu0 %1785
        %1787 = vrot.lane.b32.xlu0 %v1542, 70
        %v1788 = vpop.permute.xlu0 %1787
        %1789 = vrot.lane.b32.xlu0 %v1543, 70
        %v1790 = vpop.permute.xlu0 %1789
        %1791 = vrot.lane.b32.xlu0 %v1531, 70
        %v1792 = vpop.permute.xlu0 %1791
        %1793 = vrot.lane.b32.xlu0 %v1544, 70
        %v1794 = vpop.permute.xlu0 %1793
        %1795 = vrot.lane.b32.xlu0 %v1545, 70
        %v1796 = vpop.permute.xlu0 %1795
        %1797 = vrot.lane.b32.xlu0 %v1546, 70
        %v1798 = vpop.permute.xlu0 %1797
        %1799 = vrot.lane.b32.xlu0 %v1537, 70
        %v1800 = vpop.permute.xlu0 %1799
        %vm1801 = vcmask 572416
        %v1802 = vsel %vm1801, %v1556, %v1558
        %v1803 = vsel %vm1801, %v1558, %v1560
        %v1804 = vsel %vm1801, %v1560, %v1562
        %v1805 = vsel %vm1801, %v1562, %v1564
        %v1806 = vsel %vm1801, %v1566, %v1568
        %v1807 = vsel %vm1801, %v1568, %v1570
        %v1808 = vsel %vm1801, %v1570, %v1572
        %v1809 = vsel %vm1801, %v1572, %v1574
        %v1810 = vsel %vm1801, %v1576, %v1578
        %v1811 = vsel %vm1801, %v1578, %v1580
        %v1812 = vsel %vm1801, %v1580, %v1582
        %v1813 = vsel %vm1801, %v1582, %v1584
        %v1814 = vsel %vm1801, %v1586, %v1588
        %v1815 = vsel %vm1801, %v1588, %v1590
        %v1816 = vsel %vm1801, %v1590, %v1592
        %v1817 = vsel %vm1801, %v1592, %v1594
        %v1818 = vsel %vm1801, %v1596, %v1598
        %v1819 = vsel %vm1801, %v1598, %v1600
        %v1820 = vsel %vm1801, %v1600, %v1602
        %v1821 = vsel %vm1801, %v1602, %v1604
        %v1822 = vsel %vm1801, %v1606, %v1608
        %v1823 = vsel %vm1801, %v1608, %v1610
        %v1824 = vsel %vm1801, %v1610, %v1612
        %v1825 = vsel %vm1801, %v1612, %v1614
        %v1826 = vsel %vm1801, %v1616, %v1618
        %v1827 = vsel %vm1801, %v1618, %v1620
        %v1828 = vsel %vm1801, %v1620, %v1622
        %v1829 = vsel %vm1801, %v1622, %v1624
        %v1830 = vsel %vm1801, %v1626, %v1628
        %v1831 = vsel %vm1801, %v1628, %v1630
        %v1832 = vsel %vm1801, %v1630, %v1632
        %v1833 = vsel %vm1801, %v1632, %v1634
        %v1834 = vsel %vm1801, %v1636, %v1638
        %v1835 = vsel %vm1801, %v1638, %v1640
        %v1836 = vsel %vm1801, %v1640, %v1642
        %v1837 = vsel %vm1801, %v1642, %v1644
        %v1838 = vsel %vm1801, %v1646, %v1648
        %v1839 = vsel %vm1801, %v1648, %v1650
        %v1840 = vsel %vm1801, %v1650, %v1652
        %v1841 = vsel %vm1801, %v1652, %v1654
        %v1842 = vsel %vm1801, %v1656, %v1658
        %v1843 = vsel %vm1801, %v1658, %v1660
        %v1844 = vsel %vm1801, %v1660, %v1662
        %v1845 = vsel %vm1801, %v1662, %v1664
        %v1846 = vsel %vm1801, %v1666, %v1668
        %v1847 = vsel %vm1801, %v1668, %v1670
        %v1848 = vsel %vm1801, %v1670, %v1672
        %v1849 = vsel %vm1801, %v1672, %v1674
        %v1850 = vsel %vm1801, %v1676, %v1678
        %v1851 = vsel %vm1801, %v1678, %v1680
        %v1852 = vsel %vm1801, %v1680, %v1682
        %v1853 = vsel %vm1801, %v1682, %v1684
        %v1854 = vsel %vm1801, %v1686, %v1688
        %v1855 = vsel %vm1801, %v1688, %v1690
        %v1856 = vsel %vm1801, %v1690, %v1692
        %v1857 = vsel %vm1801, %v1692, %v1694
        %v1858 = vsel %vm1801, %v1696, %v1698
        %v1859 = vsel %vm1801, %v1698, %v1700
        %v1860 = vsel %vm1801, %v1700, %v1702
        %v1861 = vsel %vm1801, %v1702, %v1704
        %v1862 = vsel %vm1801, %v1706, %v1708
        %v1863 = vsel %vm1801, %v1708, %v1710
        %v1864 = vsel %vm1801, %v1710, %v1712
        %v1865 = vsel %vm1801, %v1712, %v1714
        %v1866 = vsel %vm1801, %v1716, %v1718
        %v1867 = vsel %vm1801, %v1718, %v1720
        %v1868 = vsel %vm1801, %v1720, %v1722
        %v1869 = vsel %vm1801, %v1722, %v1724
        %v1870 = vsel %vm1801, %v1726, %v1728
        %v1871 = vsel %vm1801, %v1728, %v1730
        %v1872 = vsel %vm1801, %v1730, %v1732
        %v1873 = vsel %vm1801, %v1732, %v1734
        %v1874 = vsel %vm1801, %v1564, %v1736
        %v1875 = vsel %vm1801, %v1736, %v1738
        %v1876 = vsel %vm1801, %v1738, %v1740
        %v1877 = vsel %vm1801, %v1574, %v1742
        %v1878 = vsel %vm1801, %v1742, %v1744
        %v1879 = vsel %vm1801, %v1744, %v1746
        %v1880 = vsel %vm1801, %v1584, %v1748
        %v1881 = vsel %vm1801, %v1748, %v1750
        %v1882 = vsel %vm1801, %v1750, %v1752
        %v1883 = vsel %vm1801, %v1592, %v1754
        %v1884 = vsel %vm1801, %v1754, %v1756
        %v1885 = vsel %vm1801, %v1756, %v1758
        %v1886 = vsel %vm1801, %v1758, %v1760
        %v1887 = vsel %vm1801, %v1602, %v1762
        %v1888 = vsel %vm1801, %v1762, %v1764
        %v1889 = vsel %vm1801, %v1764, %v1766
        %v1890 = vsel %vm1801, %v1766, %v1768
        %v1891 = vsel %vm1801, %v1612, %v1770
        %v1892 = vsel %vm1801, %v1770, %v1772
        %v1893 = vsel %vm1801, %v1772, %v1774
        %v1894 = vsel %vm1801, %v1774, %v1776
        %v1895 = vsel %vm1801, %v1622, %v1778
        %v1896 = vsel %vm1801, %v1778, %v1780
        %v1897 = vsel %vm1801, %v1780, %v1782
        %v1898 = vsel %vm1801, %v1782, %v1784
        %v1899 = vsel %vm1801, %v1632, %v1786
        %v1900 = vsel %vm1801, %v1786, %v1788
        %v1901 = vsel %vm1801, %v1788, %v1790
        %v1902 = vsel %vm1801, %v1790, %v1792
        %v1903 = vsel %vm1801, %v1642, %v1794
        %v1904 = vsel %vm1801, %v1794, %v1796
        %v1905 = vsel %vm1801, %v1796, %v1798
        %v1906 = vsel %vm1801, %v1798, %v1800
        %vm2012 = vcmask 719872
        %v2014 = vsel %vm2012, %v1548, 0
        %2016 = vmatprep.subr.mxu0 %v1863
        %2017 = vmatpush1.msra.mxu0 %v1862
        %2018 = vmatprep.subr.mxu0 %v1859
        %2019 = vmatpush1.msra.mxu0 %v1858
        %2020 = vmatprep.subr.mxu0 %v1855
        %2021 = vmatpush1.msra.mxu0 %v1854
        %2022 = vmatprep.subr.mxu0 %v1851
        %2023 = vmatpush1.msra.mxu0 %v1850
        %2024 = vmatprep.subr.mxu0 %v1847
        %2025 = vmatpush1.msra.mxu0 %v1846
        %2026 = vmatprep.subr.mxu0 %v1843
        %2027 = vmatpush1.msra.mxu0 %v1842
        %2028 = vmatprep.subr.mxu0 %v1839
        %2029 = vmatpush1.msra.mxu0 %v1838
        %2030 = vmatprep.subr.mxu0 %v1835
        %2031 = vmatpush1.msra.mxu0 %v1834
        %2032 = vmatprep.subr.mxu0 %v1831
        %2033 = vmatpush1.msra.mxu0 %v1830
        %2034 = vmatprep.subr.mxu0 %v1827
        %2035 = vmatpush1.msra.mxu0 %v1826
        %2036 = vmatprep.subr.mxu0 %v1823
        %2037 = vmatpush1.msra.mxu0 %v1822
        %2038 = vmatprep.subr.mxu0 %v1819
        %2039 = vmatpush1.msra.mxu0 %v1818
        %2040 = vmatprep.subr.mxu0 %v1815
        %2041 = vmatpush1.msra.mxu0 %v1814
        %2042 = vmatprep.subr.mxu0 %v1811
        %2043 = vmatpush1.msra.mxu0 %v1810
        %2044 = vmatprep.subr.mxu0 %v1807
        %2045 = vmatpush1.msra.mxu0 %v1806
        %2046 = vmatprep.subr.mxu0 %v1803
        %2047 = vmatpush1.msra.mxu0 %v1802
        %2048 = vmatprep.subr.mxu0 0.0
        %2049 = vmatpush2.msra.mxu0 0.0
        %2050 = vmatprep.subr.mxu0 0.0
        %2051 = vmatpush2.msra.mxu0 0.0
        %2052 = vmatprep.subr.mxu0 0.0
        %2053 = vmatpush2.msra.mxu0 0.0
        %2054 = vmatprep.subr.mxu0 0.0
        %2055 = vmatpush2.msra.mxu0 0.0
        %2056 = vmatprep.subr.mxu0 0.0
        %2057 = vmatpush2.msra.mxu0 0.0
        %2058 = vmatprep.subr.mxu0 %v1904
        %2059 = vmatpush2.msra.mxu0 %v1903
        %2060 = vmatprep.subr.mxu0 %v1900
        %2061 = vmatpush2.msra.mxu0 %v1899
        %2062 = vmatprep.subr.mxu0 %v1896
        %2063 = vmatpush2.msra.mxu0 %v1895
        %2064 = vmatprep.subr.mxu0 %v1892
        %2065 = vmatpush2.msra.mxu0 %v1891
        %2066 = vmatprep.subr.mxu0 %v1888
        %2067 = vmatpush2.msra.mxu0 %v1887
        %2068 = vmatprep.subr.mxu0 %v1884
        %2069 = vmatpush2.msra.mxu0 %v1883
        %2070 = vmatprep.subr.mxu0 %v1880
        %2071 = vmatpush2.msra.mxu0 %v1813
        %2072 = vmatprep.subr.mxu0 %v1877
        %2073 = vmatpush2.msra.mxu0 %v1809
        %2074 = vmatprep.subr.mxu0 %v1874
        %2075 = vmatpush2.msra.mxu0 %v1805
        %2076 = vmatprep.subr.mxu0 %v1871
        %2077 = vmatpush2.msra.mxu0 %v1870
        %2078 = vmatprep.subr.mxu0 %v1867
        %2079 = vmatpush2.msra.mxu0 %v1866
        %2080 = vmatprep.mubr.f32.mxu0 %v2014
        %2081 = vmatmul.mubr.f32.gmra.mxu0 %v1547
        %v2082 = vpop.f32.mrf.mxu0
        %v2083 = vadd.f32 %v1553, %v2082
        %v2084 = vpop.f32.mrf.mxu0
        %v2085 = vadd.f32 %v1553, %v2084
        %2086 = vdwg.mxu0
        %2087 = vmatprep.subr.mxu0 %v1865
        %2088 = vmatpush1.msra.mxu0 %v1864
        %2089 = vmatprep.subr.mxu0 %v1861
        %2090 = vmatpush1.msra.mxu0 %v1860
        %2091 = vmatprep.subr.mxu0 %v1857
        %2092 = vmatpush1.msra.mxu0 %v1856
        %2093 = vmatprep.subr.mxu0 %v1853
        %2094 = vmatpush1.msra.mxu0 %v1852
        %2095 = vmatprep.subr.mxu0 %v1849
        %2096 = vmatpush1.msra.mxu0 %v1848
        %2097 = vmatprep.subr.mxu0 %v1845
        %2098 = vmatpush1.msra.mxu0 %v1844
        %2099 = vmatprep.subr.mxu0 %v1841
        %2100 = vmatpush1.msra.mxu0 %v1840
        %2101 = vmatprep.subr.mxu0 %v1837
        %2102 = vmatpush1.msra.mxu0 %v1836
        %2103 = vmatprep.subr.mxu0 %v1833
        %2104 = vmatpush1.msra.mxu0 %v1832
        %2105 = vmatprep.subr.mxu0 %v1829
        %2106 = vmatpush1.msra.mxu0 %v1828
        %2107 = vmatprep.subr.mxu0 %v1825
        %2108 = vmatpush1.msra.mxu0 %v1824
        %2109 = vmatprep.subr.mxu0 %v1821
        %2110 = vmatpush1.msra.mxu0 %v1820
        %2111 = vmatprep.subr.mxu0 %v1817
        %2112 = vmatpush1.msra.mxu0 %v1816
        %2113 = vmatprep.subr.mxu0 %v1813
        %2114 = vmatpush1.msra.mxu0 %v1812
        %2115 = vmatprep.subr.mxu0 %v1809
        %2116 = vmatpush1.msra.mxu0 %v1808
        %2117 = vmatprep.subr.mxu0 %v1805
        %2118 = vmatpush1.msra.mxu0 %v1804
        %2119 = vmatprep.subr.mxu0 0.0
        %2120 = vmatpush2.msra.mxu0 0.0
        %2121 = vmatprep.subr.mxu0 0.0
        %2122 = vmatpush2.msra.mxu0 0.0
        %2123 = vmatprep.subr.mxu0 0.0
        %2124 = vmatpush2.msra.mxu0 0.0
        %2125 = vmatprep.subr.mxu0 0.0
        %2126 = vmatpush2.msra.mxu0 0.0
        %2127 = vmatprep.subr.mxu0 0.0
        %2128 = vmatpush2.msra.mxu0 0.0
        %2129 = vmatprep.subr.mxu0 %v1906
        %2130 = vmatpush2.msra.mxu0 %v1905
        %2131 = vmatprep.subr.mxu0 %v1902
        %2132 = vmatpush2.msra.mxu0 %v1901
        %2133 = vmatprep.subr.mxu0 %v1898
        %2134 = vmatpush2.msra.mxu0 %v1897
        %2135 = vmatprep.subr.mxu0 %v1894
        %2136 = vmatpush2.msra.mxu0 %v1893
        %2137 = vmatprep.subr.mxu0 %v1890
        %2138 = vmatpush2.msra.mxu0 %v1889
        %2139 = vmatprep.subr.mxu0 %v1886
        %2140 = vmatpush2.msra.mxu0 %v1885
        %2141 = vmatprep.subr.mxu0 %v1882
        %2142 = vmatpush2.msra.mxu0 %v1881
        %2143 = vmatprep.subr.mxu0 %v1879
        %2144 = vmatpush2.msra.mxu0 %v1878
        %2145 = vmatprep.subr.mxu0 %v1876
        %2146 = vmatpush2.msra.mxu0 %v1875
        %2147 = vmatprep.subr.mxu0 %v1873
        %2148 = vmatpush2.msra.mxu0 %v1872
        %2149 = vmatprep.subr.mxu0 %v1869
        %2150 = vmatpush2.msra.mxu0 %v1868
        %2151 = vmatprep.mubr.f32.mxu0 %v2014
        %2152 = vmatmul.mubr.f32.gmra.mxu0 %v1547
        %v2153 = vpop.f32.mrf.mxu0
        %v2154 = vadd.f32 %v1553, %v2153
        %v2155 = vpop.f32.mrf.mxu0
        %v2156 = vadd.f32 %v1553, %v2155
        %2157 = vdwg.mxu0
        %v2158 = vmax.f32 %v2083, 0.0
        %v2159 = vmax.f32 %v2085, 0.0
        %v2160 = vmax.f32 %v2154, 0.0
        %v2161 = vmax.f32 %v2156, 0.0
        %v2162 = vmul.f32 %v2158, %v1217
        %v2163 = vmul.f32 %v2159, %v1221
        %v2164 = vmul.f32 %v2160, %v1225
        %v2165 = vmul.f32 %v2161, %v1229
        %2166 = vst [vmem:[#allocation2 + $0x140] sm:$0xff] %v2162
        %2167 = vst [vmem:[#allocation2 + $0x148] sm:$0xff] %v2163
        %2168 = vst [vmem:[#allocation2 + $0x150] sm:$0xff] %v2164
        %2169 = vst [vmem:[#allocation2 + $0x158] sm:$0xff] %v2165
        %v2170 = vld [vmem:[#allocation2] sm:$0xff]
        %v2171 = vld [vmem:[#allocation2 + $0x8] sm:$0xff]
        %v2172 = vld [vmem:[#allocation2 + $0x10] sm:$0xff]
        %v2173 = vld [vmem:[#allocation2 + $0x18] sm:$0xff]
        %v2174 = vld [vmem:[#allocation2 + $0x20] sm:$0xff]
        %v2175 = vld [vmem:[#allocation2 + $0x60] sm:$0xff]
        %v2176 = vld [vmem:[#allocation2 + $0x68] sm:$0xff]
        %v2177 = vld [vmem:[#allocation2 + $0x70] sm:$0xff]
        %v2178 = vld [vmem:[#allocation2 + $0x78] sm:$0xff]
        %v2179 = vld [vmem:[#allocation2 + $0x80] sm:$0xff]
        %v2180 = vld [vmem:[#allocation2 + $0xc0] sm:$0xff]
        %v2181 = vld [vmem:[#allocation2 + $0xc8] sm:$0xff]
        %v2182 = vld [vmem:[#allocation2 + $0xd0] sm:$0xff]
        %v2183 = vld [vmem:[#allocation2 + $0xd8] sm:$0xff]
        %v2184 = vld [vmem:[#allocation2 + $0xe0] sm:$0xff]
        %v2185 = vld [vmem:[#allocation2 + $0x120] sm:$0xff]
        %v2186 = vld [vmem:[#allocation2 + $0x128] sm:$0xff]
        %v2187 = vld [vmem:[#allocation2 + $0x130] sm:$0xff]
        %v2188 = vld [vmem:[#allocation2 + $0x138] sm:$0xff]
        %v2189 = vld [vmem:[#allocation2 + $0x140] sm:$0xff]
        %v2190 = vld [vmem:[#allocation2 + $0x28] sm:$0xff]
        %v2191 = vld [vmem:[#allocation2 + $0x88] sm:$0xff]
        %v2192 = vld [vmem:[#allocation2 + $0xe8] sm:$0xff]
        %v2193 = vld [vmem:[#allocation2 + $0x148] sm:$0xff]
        %v2194 = vld [vmem:[#allocation2 + $0x30] sm:$0xff]
        %v2195 = vld [vmem:[#allocation2 + $0x38] sm:$0xff]
        %v2196 = vld [vmem:[#allocation2 + $0x90] sm:$0xff]
        %v2197 = vld [vmem:[#allocation2 + $0x98] sm:$0xff]
        %v2198 = vld [vmem:[#allocation2 + $0xf0] sm:$0xff]
        %v2199 = vld [vmem:[#allocation2 + $0xf8] sm:$0xff]
        %v2200 = vld [vmem:[#allocation2 + $0x150] sm:$0xff]
        %v2201 = vld [vmem:[#allocation2 + $0x158] sm:$0xff]
        %v2202 = vld [vmem:[#allocation2 + $0x40] sm:$0xff]
        %v2203 = vld [vmem:[#allocation2 + $0xa0] sm:$0xff]
        %v2204 = vld [vmem:[#allocation2 + $0x100] sm:$0xff]
        %v2205 = vld [vmem:[#allocation2 + $0x160] sm:$0xff]
        %v2206 = vld [vmem:[#allocation2 + $0x48] sm:$0xff]
        %v2207 = vld [vmem:[#allocation2 + $0x50] sm:$0xff]
        %v2208 = vld [vmem:[#allocation2 + $0xa8] sm:$0xff]
        %v2209 = vld [vmem:[#allocation2 + $0xb0] sm:$0xff]
        %v2210 = vld [vmem:[#allocation2 + $0x108] sm:$0xff]
        %v2211 = vld [vmem:[#allocation2 + $0x110] sm:$0xff]
        %v2212 = vld [vmem:[#allocation2 + $0x168] sm:$0xff]
        %v2213 = vld [vmem:[#allocation2 + $0x170] sm:$0xff]
        %v2214 = vld [vmem:[#allocation2 + $0x58] sm:$0xff]
        %v2215 = vld [vmem:[#allocation2 + $0xb8] sm:$0xff]
        %v2216 = vld [vmem:[#allocation2 + $0x118] sm:$0xff]
        %v2217 = vld [vmem:[#allocation2 + $0x178] sm:$0xff]
        %2234 = vrot.lane.b32.xlu0 %v2171, 116
        %v2235 = vpop.permute.xlu0 %2234
        %2236 = vrot.lane.b32.xlu0 %v2172, 116
        %v2237 = vpop.permute.xlu0 %2236
        %2238 = vrot.lane.b32.xlu0 %v2173, 116
        %v2239 = vpop.permute.xlu0 %2238
        %2240 = vrot.lane.b32.xlu0 %v2174, 116
        %v2241 = vpop.permute.xlu0 %2240
        %2242 = vrot.lane.b32.xlu0 %v2176, 116
        %v2243 = vpop.permute.xlu0 %2242
        %2244 = vrot.lane.b32.xlu0 %v2177, 116
        %v2245 = vpop.permute.xlu0 %2244
        %2246 = vrot.lane.b32.xlu0 %v2178, 116
        %v2247 = vpop.permute.xlu0 %2246
        %2248 = vrot.lane.b32.xlu0 %v2179, 116
        %v2249 = vpop.permute.xlu0 %2248
        %2250 = vrot.lane.b32.xlu0 %v2181, 116
        %v2251 = vpop.permute.xlu0 %2250
        %2252 = vrot.lane.b32.xlu0 %v2182, 116
        %v2253 = vpop.permute.xlu0 %2252
        %2254 = vrot.lane.b32.xlu0 %v2183, 116
        %v2255 = vpop.permute.xlu0 %2254
        %2256 = vrot.lane.b32.xlu0 %v2184, 116
        %v2257 = vpop.permute.xlu0 %2256
        %2258 = vrot.lane.b32.xlu0 %v2186, 116
        %v2259 = vpop.permute.xlu0 %2258
        %2260 = vrot.lane.b32.xlu0 %v2187, 116
        %v2261 = vpop.permute.xlu0 %2260
        %2262 = vrot.lane.b32.xlu0 %v2188, 116
        %v2263 = vpop.permute.xlu0 %2262
        %2264 = vrot.lane.b32.xlu0 %v2189, 116
        %v2265 = vpop.permute.xlu0 %2264
        %v2266 = vsel %vm1353, %v2235, %v2237
        %v2267 = vsel %vm1353, %v2237, %v2239
        %v2268 = vsel %vm1353, %v2239, %v2241
        %v2269 = vsel %vm1353, %v2243, %v2245
        %v2270 = vsel %vm1353, %v2245, %v2247
        %v2271 = vsel %vm1353, %v2247, %v2249
        %v2272 = vsel %vm1353, %v2251, %v2253
        %v2273 = vsel %vm1353, %v2253, %v2255
        %v2274 = vsel %vm1353, %v2255, %v2257
        %v2275 = vsel %vm1353, %v2259, %v2261
        %v2276 = vsel %vm1353, %v2261, %v2263
        %v2277 = vsel %vm1353, %v2263, %v2265
        %2282 = vrot.lane.b32.xlu0 %v2171, 104
        %v2283 = vpop.permute.xlu0 %2282
        %2284 = vrot.lane.b32.xlu0 %v2172, 104
        %v2285 = vpop.permute.xlu0 %2284
        %2286 = vrot.lane.b32.xlu0 %v2173, 104
        %v2287 = vpop.permute.xlu0 %2286
        %2288 = vrot.lane.b32.xlu0 %v2174, 104
        %v2289 = vpop.permute.xlu0 %2288
        %2290 = vrot.lane.b32.xlu0 %v2190, 104
        %v2291 = vpop.permute.xlu0 %2290
        %2292 = vrot.lane.b32.xlu0 %v2176, 104
        %v2293 = vpop.permute.xlu0 %2292
        %2294 = vrot.lane.b32.xlu0 %v2177, 104
        %v2295 = vpop.permute.xlu0 %2294
        %2296 = vrot.lane.b32.xlu0 %v2178, 104
        %v2297 = vpop.permute.xlu0 %2296
        %2298 = vrot.lane.b32.xlu0 %v2179, 104
        %v2299 = vpop.permute.xlu0 %2298
        %2300 = vrot.lane.b32.xlu0 %v2191, 104
        %v2301 = vpop.permute.xlu0 %2300
        %2302 = vrot.lane.b32.xlu0 %v2181, 104
        %v2303 = vpop.permute.xlu0 %2302
        %2304 = vrot.lane.b32.xlu0 %v2182, 104
        %v2305 = vpop.permute.xlu0 %2304
        %2306 = vrot.lane.b32.xlu0 %v2183, 104
        %v2307 = vpop.permute.xlu0 %2306
        %2308 = vrot.lane.b32.xlu0 %v2184, 104
        %v2309 = vpop.permute.xlu0 %2308
        %2310 = vrot.lane.b32.xlu0 %v2192, 104
        %v2311 = vpop.permute.xlu0 %2310
        %2312 = vrot.lane.b32.xlu0 %v2186, 104
        %v2313 = vpop.permute.xlu0 %2312
        %2314 = vrot.lane.b32.xlu0 %v2187, 104
        %v2315 = vpop.permute.xlu0 %2314
        %2316 = vrot.lane.b32.xlu0 %v2188, 104
        %v2317 = vpop.permute.xlu0 %2316
        %2318 = vrot.lane.b32.xlu0 %v2189, 104
        %v2319 = vpop.permute.xlu0 %2318
        %2320 = vrot.lane.b32.xlu0 %v2193, 104
        %v2321 = vpop.permute.xlu0 %2320
        %vm2322 = vcmask 850944
        %v2323 = vsel %vm2322, %v2283, %v2285
        %v2324 = vsel %vm2322, %v2285, %v2287
        %v2325 = vsel %vm2322, %v2287, %v2289
        %v2326 = vsel %vm2322, %v2289, %v2291
        %v2327 = vsel %vm2322, %v2293, %v2295
        %v2328 = vsel %vm2322, %v2295, %v2297
        %v2329 = vsel %vm2322, %v2297, %v2299
        %v2330 = vsel %vm2322, %v2299, %v2301
        %v2331 = vsel %vm2322, %v2303, %v2305
        %v2332 = vsel %vm2322, %v2305, %v2307
        %v2333 = vsel %vm2322, %v2307, %v2309
        %v2334 = vsel %vm2322, %v2309, %v2311
        %v2335 = vsel %vm2322, %v2313, %v2315
        %v2336 = vsel %vm2322, %v2315, %v2317
        %v2337 = vsel %vm2322, %v2317, %v2319
        %v2338 = vsel %vm2322, %v2319, %v2321
        %2347 = vrot.lane.b32.xlu0 %v2190, 116
        %v2348 = vpop.permute.xlu0 %2347
        %2349 = vrot.lane.b32.xlu0 %v2194, 116
        %v2350 = vpop.permute.xlu0 %2349
        %2351 = vrot.lane.b32.xlu0 %v2195, 116
        %v2352 = vpop.permute.xlu0 %2351
        %2353 = vrot.lane.b32.xlu0 %v2191, 116
        %v2354 = vpop.permute.xlu0 %2353
        %2355 = vrot.lane.b32.xlu0 %v2196, 116
        %v2356 = vpop.permute.xlu0 %2355
        %2357 = vrot.lane.b32.xlu0 %v2197, 116
        %v2358 = vpop.permute.xlu0 %2357
        %2359 = vrot.lane.b32.xlu0 %v2192, 116
        %v2360 = vpop.permute.xlu0 %2359
        %2361 = vrot.lane.b32.xlu0 %v2198, 116
        %v2362 = vpop.permute.xlu0 %2361
        %2363 = vrot.lane.b32.xlu0 %v2199, 116
        %v2364 = vpop.permute.xlu0 %2363
        %2365 = vrot.lane.b32.xlu0 %v2193, 116
        %v2366 = vpop.permute.xlu0 %2365
        %2367 = vrot.lane.b32.xlu0 %v2200, 116
        %v2368 = vpop.permute.xlu0 %2367
        %2369 = vrot.lane.b32.xlu0 %v2201, 116
        %v2370 = vpop.permute.xlu0 %2369
        %v2371 = vsel %vm1353, %v2241, %v2348
        %v2372 = vsel %vm1353, %v2348, %v2350
        %v2373 = vsel %vm1353, %v2350, %v2352
        %v2374 = vsel %vm1353, %v2249, %v2354
        %v2375 = vsel %vm1353, %v2354, %v2356
        %v2376 = vsel %vm1353, %v2356, %v2358
        %v2377 = vsel %vm1353, %v2257, %v2360
        %v2378 = vsel %vm1353, %v2360, %v2362
        %v2379 = vsel %vm1353, %v2362, %v2364
        %v2380 = vsel %vm1353, %v2265, %v2366
        %v2381 = vsel %vm1353, %v2366, %v2368
        %v2382 = vsel %vm1353, %v2368, %v2370
        %2387 = vrot.lane.b32.xlu0 %v2194, 104
        %v2388 = vpop.permute.xlu0 %2387
        %2389 = vrot.lane.b32.xlu0 %v2195, 104
        %v2390 = vpop.permute.xlu0 %2389
        %2391 = vrot.lane.b32.xlu0 %v2202, 104
        %v2392 = vpop.permute.xlu0 %2391
        %2393 = vrot.lane.b32.xlu0 %v2196, 104
        %v2394 = vpop.permute.xlu0 %2393
        %2395 = vrot.lane.b32.xlu0 %v2197, 104
        %v2396 = vpop.permute.xlu0 %2395
        %2397 = vrot.lane.b32.xlu0 %v2203, 104
        %v2398 = vpop.permute.xlu0 %2397
        %2399 = vrot.lane.b32.xlu0 %v2198, 104
        %v2400 = vpop.permute.xlu0 %2399
        %2401 = vrot.lane.b32.xlu0 %v2199, 104
        %v2402 = vpop.permute.xlu0 %2401
        %2403 = vrot.lane.b32.xlu0 %v2204, 104
        %v2404 = vpop.permute.xlu0 %2403
        %2405 = vrot.lane.b32.xlu0 %v2200, 104
        %v2406 = vpop.permute.xlu0 %2405
        %2407 = vrot.lane.b32.xlu0 %v2201, 104
        %v2408 = vpop.permute.xlu0 %2407
        %2409 = vrot.lane.b32.xlu0 %v2205, 104
        %v2410 = vpop.permute.xlu0 %2409
        %v2411 = vsel %vm2322, %v2291, %v2388
        %v2412 = vsel %vm2322, %v2388, %v2390
        %v2413 = vsel %vm2322, %v2390, %v2392
        %v2414 = vsel %vm2322, %v2301, %v2394
        %v2415 = vsel %vm2322, %v2394, %v2396
        %v2416 = vsel %vm2322, %v2396, %v2398
        %v2417 = vsel %vm2322, %v2311, %v2400
        %v2418 = vsel %vm2322, %v2400, %v2402
        %v2419 = vsel %vm2322, %v2402, %v2404
        %v2420 = vsel %vm2322, %v2321, %v2406
        %v2421 = vsel %vm2322, %v2406, %v2408
        %v2422 = vsel %vm2322, %v2408, %v2410
        %2431 = vrot.lane.b32.xlu0 %v2202, 116
        %v2432 = vpop.permute.xlu0 %2431
        %2433 = vrot.lane.b32.xlu0 %v2206, 116
        %v2434 = vpop.permute.xlu0 %2433
        %2435 = vrot.lane.b32.xlu0 %v2207, 116
        %v2436 = vpop.permute.xlu0 %2435
        %2437 = vrot.lane.b32.xlu0 %v2203, 116
        %v2438 = vpop.permute.xlu0 %2437
        %2439 = vrot.lane.b32.xlu0 %v2208, 116
        %v2440 = vpop.permute.xlu0 %2439
        %2441 = vrot.lane.b32.xlu0 %v2209, 116
        %v2442 = vpop.permute.xlu0 %2441
        %2443 = vrot.lane.b32.xlu0 %v2204, 116
        %v2444 = vpop.permute.xlu0 %2443
        %2445 = vrot.lane.b32.xlu0 %v2210, 116
        %v2446 = vpop.permute.xlu0 %2445
        %2447 = vrot.lane.b32.xlu0 %v2211, 116
        %v2448 = vpop.permute.xlu0 %2447
        %2449 = vrot.lane.b32.xlu0 %v2205, 116
        %v2450 = vpop.permute.xlu0 %2449
        %2451 = vrot.lane.b32.xlu0 %v2212, 116
        %v2452 = vpop.permute.xlu0 %2451
        %2453 = vrot.lane.b32.xlu0 %v2213, 116
        %v2454 = vpop.permute.xlu0 %2453
        %v2455 = vsel %vm1353, %v2352, %v2432
        %v2456 = vsel %vm1353, %v2432, %v2434
        %v2457 = vsel %vm1353, %v2434, %v2436
        %v2458 = vsel %vm1353, %v2358, %v2438
        %v2459 = vsel %vm1353, %v2438, %v2440
        %v2460 = vsel %vm1353, %v2440, %v2442
        %v2461 = vsel %vm1353, %v2364, %v2444
        %v2462 = vsel %vm1353, %v2444, %v2446
        %v2463 = vsel %vm1353, %v2446, %v2448
        %v2464 = vsel %vm1353, %v2370, %v2450
        %v2465 = vsel %vm1353, %v2450, %v2452
        %v2466 = vsel %vm1353, %v2452, %v2454
        %2471 = vrot.lane.b32.xlu0 %v2206, 104
        %v2472 = vpop.permute.xlu0 %2471
        %2473 = vrot.lane.b32.xlu0 %v2207, 104
        %v2474 = vpop.permute.xlu0 %2473
        %2475 = vrot.lane.b32.xlu0 %v2214, 104
        %v2476 = vpop.permute.xlu0 %2475
        %2477 = vrot.lane.b32.xlu0 %v2208, 104
        %v2478 = vpop.permute.xlu0 %2477
        %2479 = vrot.lane.b32.xlu0 %v2209, 104
        %v2480 = vpop.permute.xlu0 %2479
        %2481 = vrot.lane.b32.xlu0 %v2215, 104
        %v2482 = vpop.permute.xlu0 %2481
        %2483 = vrot.lane.b32.xlu0 %v2210, 104
        %v2484 = vpop.permute.xlu0 %2483
        %2485 = vrot.lane.b32.xlu0 %v2211, 104
        %v2486 = vpop.permute.xlu0 %2485
        %2487 = vrot.lane.b32.xlu0 %v2216, 104
        %v2488 = vpop.permute.xlu0 %2487
        %2489 = vrot.lane.b32.xlu0 %v2212, 104
        %v2490 = vpop.permute.xlu0 %2489
        %2491 = vrot.lane.b32.xlu0 %v2213, 104
        %v2492 = vpop.permute.xlu0 %2491
        %2493 = vrot.lane.b32.xlu0 %v2217, 104
        %v2494 = vpop.permute.xlu0 %2493
        %v2495 = vsel %vm2322, %v2392, %v2472
        %v2496 = vsel %vm2322, %v2472, %v2474
        %v2497 = vsel %vm2322, %v2474, %v2476
        %v2498 = vsel %vm2322, %v2398, %v2478
        %v2499 = vsel %vm2322, %v2478, %v2480
        %v2500 = vsel %vm2322, %v2480, %v2482
        %v2501 = vsel %vm2322, %v2404, %v2484
        %v2502 = vsel %vm2322, %v2484, %v2486
        %v2503 = vsel %vm2322, %v2486, %v2488
        %v2504 = vsel %vm2322, %v2410, %v2490
        %v2505 = vsel %vm2322, %v2490, %v2492
        %v2506 = vsel %vm2322, %v2492, %v2494
        %v2507 = vld [vmem:[%s4] sm:$0xff]
        %v2508 = vld [vmem:[%s4 + $0x8] sm:$0xff]
        %v2509 = vld [vmem:[%s4 + $0x10] sm:$0xff]
        %v2510 = vld [vmem:[%s7 + $0x10] sm:$0xff]
        %2512 = vset.pattern.permute.xlu0 0
        %2513 = vperm.xlu0 %2512, %v2510
        %v2514 = vpop.permute.xlu0 %2513
        %2520 = vrot.lane.b32.xlu0 %v2170, 12
        %v2521 = vpop.permute.xlu0 %2520
        %2522 = vrot.lane.b32.xlu0 %v2171, 12
        %v2523 = vpop.permute.xlu0 %2522
        %2524 = vrot.lane.b32.xlu0 %v2172, 12
        %v2525 = vpop.permute.xlu0 %2524
        %2526 = vrot.lane.b32.xlu0 %v2173, 12
        %v2527 = vpop.permute.xlu0 %2526
        %2528 = vrot.lane.b32.xlu0 %v2174, 12
        %v2529 = vpop.permute.xlu0 %2528
        %2530 = vrot.lane.b32.xlu0 %v2175, 12
        %v2531 = vpop.permute.xlu0 %2530
        %2532 = vrot.lane.b32.xlu0 %v2176, 12
        %v2533 = vpop.permute.xlu0 %2532
        %2534 = vrot.lane.b32.xlu0 %v2177, 12
        %v2535 = vpop.permute.xlu0 %2534
        %2536 = vrot.lane.b32.xlu0 %v2178, 12
        %v2537 = vpop.permute.xlu0 %2536
        %2538 = vrot.lane.b32.xlu0 %v2179, 12
        %v2539 = vpop.permute.xlu0 %2538
        %2540 = vrot.lane.b32.xlu0 %v2180, 12
        %v2541 = vpop.permute.xlu0 %2540
        %2542 = vrot.lane.b32.xlu0 %v2181, 12
        %v2543 = vpop.permute.xlu0 %2542
        %2544 = vrot.lane.b32.xlu0 %v2182, 12
        %v2545 = vpop.permute.xlu0 %2544
        %2546 = vrot.lane.b32.xlu0 %v2183, 12
        %v2547 = vpop.permute.xlu0 %2546
        %2548 = vrot.lane.b32.xlu0 %v2184, 12
        %v2549 = vpop.permute.xlu0 %2548
        %2550 = vrot.lane.b32.xlu0 %v2185, 12
        %v2551 = vpop.permute.xlu0 %2550
        %2552 = vrot.lane.b32.xlu0 %v2186, 12
        %v2553 = vpop.permute.xlu0 %2552
        %2554 = vrot.lane.b32.xlu0 %v2187, 12
        %v2555 = vpop.permute.xlu0 %2554
        %2556 = vrot.lane.b32.xlu0 %v2188, 12
        %v2557 = vpop.permute.xlu0 %2556
        %2558 = vrot.lane.b32.xlu0 %v2189, 12
        %v2559 = vpop.permute.xlu0 %2558
        %2560 = vrot.lane.b32.xlu0 %v2235, 12
        %v2561 = vpop.permute.xlu0 %2560
        %2562 = vrot.lane.b32.xlu0 %v2266, 12
        %v2563 = vpop.permute.xlu0 %2562
        %2564 = vrot.lane.b32.xlu0 %v2267, 12
        %v2565 = vpop.permute.xlu0 %2564
        %2566 = vrot.lane.b32.xlu0 %v2268, 12
        %v2567 = vpop.permute.xlu0 %2566
        %2568 = vrot.lane.b32.xlu0 %v2241, 12
        %v2569 = vpop.permute.xlu0 %2568
        %2570 = vrot.lane.b32.xlu0 %v2243, 12
        %v2571 = vpop.permute.xlu0 %2570
        %2572 = vrot.lane.b32.xlu0 %v2269, 12
        %v2573 = vpop.permute.xlu0 %2572
        %2574 = vrot.lane.b32.xlu0 %v2270, 12
        %v2575 = vpop.permute.xlu0 %2574
        %2576 = vrot.lane.b32.xlu0 %v2271, 12
        %v2577 = vpop.permute.xlu0 %2576
        %2578 = vrot.lane.b32.xlu0 %v2249, 12
        %v2579 = vpop.permute.xlu0 %2578
        %2580 = vrot.lane.b32.xlu0 %v2251, 12
        %v2581 = vpop.permute.xlu0 %2580
        %2582 = vrot.lane.b32.xlu0 %v2272, 12
        %v2583 = vpop.permute.xlu0 %2582
        %2584 = vrot.lane.b32.xlu0 %v2273, 12
        %v2585 = vpop.permute.xlu0 %2584
        %2586 = vrot.lane.b32.xlu0 %v2274, 12
        %v2587 = vpop.permute.xlu0 %2586
        %2588 = vrot.lane.b32.xlu0 %v2257, 12
        %v2589 = vpop.permute.xlu0 %2588
        %2590 = vrot.lane.b32.xlu0 %v2259, 12
        %v2591 = vpop.permute.xlu0 %2590
        %2592 = vrot.lane.b32.xlu0 %v2275, 12
        %v2593 = vpop.permute.xlu0 %2592
        %2594 = vrot.lane.b32.xlu0 %v2276, 12
        %v2595 = vpop.permute.xlu0 %2594
        %2596 = vrot.lane.b32.xlu0 %v2277, 12
        %v2597 = vpop.permute.xlu0 %2596
        %2598 = vrot.lane.b32.xlu0 %v2265, 12
        %v2599 = vpop.permute.xlu0 %2598
        %2600 = vrot.lane.b32.xlu0 %v2283, 12
        %v2601 = vpop.permute.xlu0 %2600
        %2602 = vrot.lane.b32.xlu0 %v2323, 12
        %v2603 = vpop.permute.xlu0 %2602
        %2604 = vrot.lane.b32.xlu0 %v2324, 12
        %v2605 = vpop.permute.xlu0 %2604
        %2606 = vrot.lane.b32.xlu0 %v2325, 12
        %v2607 = vpop.permute.xlu0 %2606
        %2608 = vrot.lane.b32.xlu0 %v2326, 12
        %v2609 = vpop.permute.xlu0 %2608
        %2610 = vrot.lane.b32.xlu0 %v2293, 12
        %v2611 = vpop.permute.xlu0 %2610
        %2612 = vrot.lane.b32.xlu0 %v2327, 12
        %v2613 = vpop.permute.xlu0 %2612
        %2614 = vrot.lane.b32.xlu0 %v2328, 12
        %v2615 = vpop.permute.xlu0 %2614
        %2616 = vrot.lane.b32.xlu0 %v2329, 12
        %v2617 = vpop.permute.xlu0 %2616
        %2618 = vrot.lane.b32.xlu0 %v2330, 12
        %v2619 = vpop.permute.xlu0 %2618
        %2620 = vrot.lane.b32.xlu0 %v2303, 12
        %v2621 = vpop.permute.xlu0 %2620
        %2622 = vrot.lane.b32.xlu0 %v2331, 12
        %v2623 = vpop.permute.xlu0 %2622
        %2624 = vrot.lane.b32.xlu0 %v2332, 12
        %v2625 = vpop.permute.xlu0 %2624
        %2626 = vrot.lane.b32.xlu0 %v2333, 12
        %v2627 = vpop.permute.xlu0 %2626
        %2628 = vrot.lane.b32.xlu0 %v2334, 12
        %v2629 = vpop.permute.xlu0 %2628
        %2630 = vrot.lane.b32.xlu0 %v2313, 12
        %v2631 = vpop.permute.xlu0 %2630
        %2632 = vrot.lane.b32.xlu0 %v2335, 12
        %v2633 = vpop.permute.xlu0 %2632
        %2634 = vrot.lane.b32.xlu0 %v2336, 12
        %v2635 = vpop.permute.xlu0 %2634
        %2636 = vrot.lane.b32.xlu0 %v2337, 12
        %v2637 = vpop.permute.xlu0 %2636
        %2638 = vrot.lane.b32.xlu0 %v2338, 12
        %v2639 = vpop.permute.xlu0 %2638
        %2640 = vrot.lane.b32.xlu0 %v2190, 12
        %v2641 = vpop.permute.xlu0 %2640
        %2642 = vrot.lane.b32.xlu0 %v2194, 12
        %v2643 = vpop.permute.xlu0 %2642
        %2644 = vrot.lane.b32.xlu0 %v2195, 12
        %v2645 = vpop.permute.xlu0 %2644
        %2646 = vrot.lane.b32.xlu0 %v2191, 12
        %v2647 = vpop.permute.xlu0 %2646
        %2648 = vrot.lane.b32.xlu0 %v2196, 12
        %v2649 = vpop.permute.xlu0 %2648
        %2650 = vrot.lane.b32.xlu0 %v2197, 12
        %v2651 = vpop.permute.xlu0 %2650
        %2652 = vrot.lane.b32.xlu0 %v2192, 12
        %v2653 = vpop.permute.xlu0 %2652
        %2654 = vrot.lane.b32.xlu0 %v2198, 12
        %v2655 = vpop.permute.xlu0 %2654
        %2656 = vrot.lane.b32.xlu0 %v2199, 12
        %v2657 = vpop.permute.xlu0 %2656
        %2658 = vrot.lane.b32.xlu0 %v2193, 12
        %v2659 = vpop.permute.xlu0 %2658
        %2660 = vrot.lane.b32.xlu0 %v2200, 12
        %v2661 = vpop.permute.xlu0 %2660
        %2662 = vrot.lane.b32.xlu0 %v2201, 12
        %v2663 = vpop.permute.xlu0 %2662
        %2664 = vrot.lane.b32.xlu0 %v2371, 12
        %v2665 = vpop.permute.xlu0 %2664
        %2666 = vrot.lane.b32.xlu0 %v2372, 12
        %v2667 = vpop.permute.xlu0 %2666
        %2668 = vrot.lane.b32.xlu0 %v2373, 12
        %v2669 = vpop.permute.xlu0 %2668
        %2670 = vrot.lane.b32.xlu0 %v2352, 12
        %v2671 = vpop.permute.xlu0 %2670
        %2672 = vrot.lane.b32.xlu0 %v2374, 12
        %v2673 = vpop.permute.xlu0 %2672
        %2674 = vrot.lane.b32.xlu0 %v2375, 12
        %v2675 = vpop.permute.xlu0 %2674
        %2676 = vrot.lane.b32.xlu0 %v2376, 12
        %v2677 = vpop.permute.xlu0 %2676
        %2678 = vrot.lane.b32.xlu0 %v2358, 12
        %v2679 = vpop.permute.xlu0 %2678
        %2680 = vrot.lane.b32.xlu0 %v2377, 12
        %v2681 = vpop.permute.xlu0 %2680
        %2682 = vrot.lane.b32.xlu0 %v2378, 12
        %v2683 = vpop.permute.xlu0 %2682
        %2684 = vrot.lane.b32.xlu0 %v2379, 12
        %v2685 = vpop.permute.xlu0 %2684
        %2686 = vrot.lane.b32.xlu0 %v2364, 12
        %v2687 = vpop.permute.xlu0 %2686
        %2688 = vrot.lane.b32.xlu0 %v2380, 12
        %v2689 = vpop.permute.xlu0 %2688
        %2690 = vrot.lane.b32.xlu0 %v2381, 12
        %v2691 = vpop.permute.xlu0 %2690
        %2692 = vrot.lane.b32.xlu0 %v2382, 12
        %v2693 = vpop.permute.xlu0 %2692
        %2694 = vrot.lane.b32.xlu0 %v2370, 12
        %v2695 = vpop.permute.xlu0 %2694
        %2696 = vrot.lane.b32.xlu0 %v2289, 12
        %v2697 = vpop.permute.xlu0 %2696
        %2698 = vrot.lane.b32.xlu0 %v2411, 12
        %v2699 = vpop.permute.xlu0 %2698
        %2700 = vrot.lane.b32.xlu0 %v2412, 12
        %v2701 = vpop.permute.xlu0 %2700
        %2702 = vrot.lane.b32.xlu0 %v2413, 12
        %v2703 = vpop.permute.xlu0 %2702
        %2704 = vrot.lane.b32.xlu0 %v2299, 12
        %v2705 = vpop.permute.xlu0 %2704
        %2706 = vrot.lane.b32.xlu0 %v2414, 12
        %v2707 = vpop.permute.xlu0 %2706
        %2708 = vrot.lane.b32.xlu0 %v2415, 12
        %v2709 = vpop.permute.xlu0 %2708
        %2710 = vrot.lane.b32.xlu0 %v2416, 12
        %v2711 = vpop.permute.xlu0 %2710
        %2712 = vrot.lane.b32.xlu0 %v2309, 12
        %v2713 = vpop.permute.xlu0 %2712
        %2714 = vrot.lane.b32.xlu0 %v2417, 12
        %v2715 = vpop.permute.xlu0 %2714
        %2716 = vrot.lane.b32.xlu0 %v2418, 12
        %v2717 = vpop.permute.xlu0 %2716
        %2718 = vrot.lane.b32.xlu0 %v2419, 12
        %v2719 = vpop.permute.xlu0 %2718
        %2720 = vrot.lane.b32.xlu0 %v2319, 12
        %v2721 = vpop.permute.xlu0 %2720
        %2722 = vrot.lane.b32.xlu0 %v2420, 12
        %v2723 = vpop.permute.xlu0 %2722
        %2724 = vrot.lane.b32.xlu0 %v2421, 12
        %v2725 = vpop.permute.xlu0 %2724
        %2726 = vrot.lane.b32.xlu0 %v2422, 12
        %v2727 = vpop.permute.xlu0 %2726
        %2728 = vrot.lane.b32.xlu0 %v2202, 12
        %v2729 = vpop.permute.xlu0 %2728
        %2730 = vrot.lane.b32.xlu0 %v2206, 12
        %v2731 = vpop.permute.xlu0 %2730
        %2732 = vrot.lane.b32.xlu0 %v2207, 12
        %v2733 = vpop.permute.xlu0 %2732
        %2734 = vrot.lane.b32.xlu0 %v2203, 12
        %v2735 = vpop.permute.xlu0 %2734
        %2736 = vrot.lane.b32.xlu0 %v2208, 12
        %v2737 = vpop.permute.xlu0 %2736
        %2738 = vrot.lane.b32.xlu0 %v2209, 12
        %v2739 = vpop.permute.xlu0 %2738
        %2740 = vrot.lane.b32.xlu0 %v2204, 12
        %v2741 = vpop.permute.xlu0 %2740
        %2742 = vrot.lane.b32.xlu0 %v2210, 12
        %v2743 = vpop.permute.xlu0 %2742
        %2744 = vrot.lane.b32.xlu0 %v2211, 12
        %v2745 = vpop.permute.xlu0 %2744
        %2746 = vrot.lane.b32.xlu0 %v2205, 12
        %v2747 = vpop.permute.xlu0 %2746
        %2748 = vrot.lane.b32.xlu0 %v2212, 12
        %v2749 = vpop.permute.xlu0 %2748
        %2750 = vrot.lane.b32.xlu0 %v2213, 12
        %v2751 = vpop.permute.xlu0 %2750
        %2752 = vrot.lane.b32.xlu0 %v2455, 12
        %v2753 = vpop.permute.xlu0 %2752
        %2754 = vrot.lane.b32.xlu0 %v2456, 12
        %v2755 = vpop.permute.xlu0 %2754
        %2756 = vrot.lane.b32.xlu0 %v2457, 12
        %v2757 = vpop.permute.xlu0 %2756
        %2758 = vrot.lane.b32.xlu0 %v2436, 12
        %v2759 = vpop.permute.xlu0 %2758
        %2760 = vrot.lane.b32.xlu0 %v2458, 12
        %v2761 = vpop.permute.xlu0 %2760
        %2762 = vrot.lane.b32.xlu0 %v2459, 12
        %v2763 = vpop.permute.xlu0 %2762
        %2764 = vrot.lane.b32.xlu0 %v2460, 12
        %v2765 = vpop.permute.xlu0 %2764
        %2766 = vrot.lane.b32.xlu0 %v2442, 12
        %v2767 = vpop.permute.xlu0 %2766
        %2768 = vrot.lane.b32.xlu0 %v2461, 12
        %v2769 = vpop.permute.xlu0 %2768
        %2770 = vrot.lane.b32.xlu0 %v2462, 12
        %v2771 = vpop.permute.xlu0 %2770
        %2772 = vrot.lane.b32.xlu0 %v2463, 12
        %v2773 = vpop.permute.xlu0 %2772
        %2774 = vrot.lane.b32.xlu0 %v2448, 12
        %v2775 = vpop.permute.xlu0 %2774
        %2776 = vrot.lane.b32.xlu0 %v2464, 12
        %v2777 = vpop.permute.xlu0 %2776
        %2778 = vrot.lane.b32.xlu0 %v2465, 12
        %v2779 = vpop.permute.xlu0 %2778
        %2780 = vrot.lane.b32.xlu0 %v2466, 12
        %v2781 = vpop.permute.xlu0 %2780
        %2782 = vrot.lane.b32.xlu0 %v2454, 12
        %v2783 = vpop.permute.xlu0 %2782
        %2784 = vrot.lane.b32.xlu0 %v2390, 12
        %v2785 = vpop.permute.xlu0 %2784
        %2786 = vrot.lane.b32.xlu0 %v2495, 12
        %v2787 = vpop.permute.xlu0 %2786
        %2788 = vrot.lane.b32.xlu0 %v2496, 12
        %v2789 = vpop.permute.xlu0 %2788
        %2790 = vrot.lane.b32.xlu0 %v2497, 12
        %v2791 = vpop.permute.xlu0 %2790
        %2792 = vrot.lane.b32.xlu0 %v2396, 12
        %v2793 = vpop.permute.xlu0 %2792
        %2794 = vrot.lane.b32.xlu0 %v2498, 12
        %v2795 = vpop.permute.xlu0 %2794
        %2796 = vrot.lane.b32.xlu0 %v2499, 12
        %v2797 = vpop.permute.xlu0 %2796
        %2798 = vrot.lane.b32.xlu0 %v2500, 12
        %v2799 = vpop.permute.xlu0 %2798
        %2800 = vrot.lane.b32.xlu0 %v2402, 12
        %v2801 = vpop.permute.xlu0 %2800
        %2802 = vrot.lane.b32.xlu0 %v2501, 12
        %v2803 = vpop.permute.xlu0 %2802
        %2804 = vrot.lane.b32.xlu0 %v2502, 12
        %v2805 = vpop.permute.xlu0 %2804
        %2806 = vrot.lane.b32.xlu0 %v2503, 12
        %v2807 = vpop.permute.xlu0 %2806
        %2808 = vrot.lane.b32.xlu0 %v2408, 12
        %v2809 = vpop.permute.xlu0 %2808
        %2810 = vrot.lane.b32.xlu0 %v2504, 12
        %v2811 = vpop.permute.xlu0 %2810
        %2812 = vrot.lane.b32.xlu0 %v2505, 12
        %v2813 = vpop.permute.xlu0 %2812
        %2814 = vrot.lane.b32.xlu0 %v2506, 12
        %v2815 = vpop.permute.xlu0 %2814
        %vm2816 = vcmask 97280
        %v2817 = vsel %vm2816, %v2521, %v2523
        %v2818 = vsel %vm2816, %v2523, %v2525
        %v2819 = vsel %vm2816, %v2525, %v2527
        %v2820 = vsel %vm2816, %v2527, %v2529
        %v2821 = vsel %vm2816, %v2531, %v2533
        %v2822 = vsel %vm2816, %v2533, %v2535
        %v2823 = vsel %vm2816, %v2535, %v2537
        %v2824 = vsel %vm2816, %v2537, %v2539
        %v2825 = vsel %vm2816, %v2541, %v2543
        %v2826 = vsel %vm2816, %v2543, %v2545
        %v2827 = vsel %vm2816, %v2545, %v2547
        %v2828 = vsel %vm2816, %v2547, %v2549
        %v2829 = vsel %vm2816, %v2551, %v2553
        %v2830 = vsel %vm2816, %v2553, %v2555
        %v2831 = vsel %vm2816, %v2555, %v2557
        %v2832 = vsel %vm2816, %v2557, %v2559
        %v2833 = vsel %vm2816, %v2561, %v2563
        %v2834 = vsel %vm2816, %v2563, %v2565
        %v2835 = vsel %vm2816, %v2565, %v2567
        %v2836 = vsel %vm2816, %v2567, %v2569
        %v2837 = vsel %vm2816, %v2571, %v2573
        %v2838 = vsel %vm2816, %v2573, %v2575
        %v2839 = vsel %vm2816, %v2575, %v2577
        %v2840 = vsel %vm2816, %v2577, %v2579
        %v2841 = vsel %vm2816, %v2581, %v2583
        %v2842 = vsel %vm2816, %v2583, %v2585
        %v2843 = vsel %vm2816, %v2585, %v2587
        %v2844 = vsel %vm2816, %v2587, %v2589
        %v2845 = vsel %vm2816, %v2591, %v2593
        %v2846 = vsel %vm2816, %v2593, %v2595
        %v2847 = vsel %vm2816, %v2595, %v2597
        %v2848 = vsel %vm2816, %v2597, %v2599
        %v2849 = vsel %vm2816, %v2601, %v2603
        %v2850 = vsel %vm2816, %v2603, %v2605
        %v2851 = vsel %vm2816, %v2605, %v2607
        %v2852 = vsel %vm2816, %v2607, %v2609
        %v2853 = vsel %vm2816, %v2611, %v2613
        %v2854 = vsel %vm2816, %v2613, %v2615
        %v2855 = vsel %vm2816, %v2615, %v2617
        %v2856 = vsel %vm2816, %v2617, %v2619
        %v2857 = vsel %vm2816, %v2621, %v2623
        %v2858 = vsel %vm2816, %v2623, %v2625
        %v2859 = vsel %vm2816, %v2625, %v2627
        %v2860 = vsel %vm2816, %v2627, %v2629
        %v2861 = vsel %vm2816, %v2631, %v2633
        %v2862 = vsel %vm2816, %v2633, %v2635
        %v2863 = vsel %vm2816, %v2635, %v2637
        %v2864 = vsel %vm2816, %v2637, %v2639
        %v2865 = vsel %vm2816, %v2529, %v2641
        %v2866 = vsel %vm2816, %v2641, %v2643
        %v2867 = vsel %vm2816, %v2643, %v2645
        %v2868 = vsel %vm2816, %v2539, %v2647
        %v2869 = vsel %vm2816, %v2647, %v2649
        %v2870 = vsel %vm2816, %v2649, %v2651
        %v2871 = vsel %vm2816, %v2549, %v2653
        %v2872 = vsel %vm2816, %v2653, %v2655
        %v2873 = vsel %vm2816, %v2655, %v2657
        %v2874 = vsel %vm2816, %v2559, %v2659
        %v2875 = vsel %vm2816, %v2659, %v2661
        %v2876 = vsel %vm2816, %v2661, %v2663
        %v2877 = vsel %vm2816, %v2569, %v2665
        %v2878 = vsel %vm2816, %v2665, %v2667
        %v2879 = vsel %vm2816, %v2667, %v2669
        %v2880 = vsel %vm2816, %v2669, %v2671
        %v2881 = vsel %vm2816, %v2579, %v2673
        %v2882 = vsel %vm2816, %v2673, %v2675
        %v2883 = vsel %vm2816, %v2675, %v2677
        %v2884 = vsel %vm2816, %v2677, %v2679
        %v2885 = vsel %vm2816, %v2589, %v2681
        %v2886 = vsel %vm2816, %v2681, %v2683
        %v2887 = vsel %vm2816, %v2683, %v2685
        %v2888 = vsel %vm2816, %v2685, %v2687
        %v2889 = vsel %vm2816, %v2599, %v2689
        %v2890 = vsel %vm2816, %v2689, %v2691
        %v2891 = vsel %vm2816, %v2691, %v2693
        %v2892 = vsel %vm2816, %v2693, %v2695
        %v2893 = vsel %vm2816, %v2697, %v2609
        %v2894 = vsel %vm2816, %v2609, %v2699
        %v2895 = vsel %vm2816, %v2699, %v2701
        %v2896 = vsel %vm2816, %v2701, %v2703
        %v2897 = vsel %vm2816, %v2705, %v2619
        %v2898 = vsel %vm2816, %v2619, %v2707
        %v2899 = vsel %vm2816, %v2707, %v2709
        %v2900 = vsel %vm2816, %v2709, %v2711
        %v2901 = vsel %vm2816, %v2713, %v2629
        %v2902 = vsel %vm2816, %v2629, %v2715
        %v2903 = vsel %vm2816, %v2715, %v2717
        %v2904 = vsel %vm2816, %v2717, %v2719
        %v2905 = vsel %vm2816, %v2721, %v2639
        %v2906 = vsel %vm2816, %v2639, %v2723
        %v2907 = vsel %vm2816, %v2723, %v2725
        %v2908 = vsel %vm2816, %v2725, %v2727
        %v2909 = vsel %vm2816, %v2645, %v2729
        %v2910 = vsel %vm2816, %v2729, %v2731
        %v2911 = vsel %vm2816, %v2731, %v2733
        %v2912 = vsel %vm2816, %v2651, %v2735
        %v2913 = vsel %vm2816, %v2735, %v2737
        %v2914 = vsel %vm2816, %v2737, %v2739
        %v2915 = vsel %vm2816, %v2657, %v2741
        %v2916 = vsel %vm2816, %v2741, %v2743
        %v2917 = vsel %vm2816, %v2743, %v2745
        %v2918 = vsel %vm2816, %v2663, %v2747
        %v2919 = vsel %vm2816, %v2747, %v2749
        %v2920 = vsel %vm2816, %v2749, %v2751
        %v2921 = vsel %vm2816, %v2671, %v2753
        %v2922 = vsel %vm2816, %v2753, %v2755
        %v2923 = vsel %vm2816, %v2755, %v2757
        %v2924 = vsel %vm2816, %v2757, %v2759
        %v2925 = vsel %vm2816, %v2679, %v2761
        %v2926 = vsel %vm2816, %v2761, %v2763
        %v2927 = vsel %vm2816, %v2763, %v2765
        %v2928 = vsel %vm2816, %v2765, %v2767
        %v2929 = vsel %vm2816, %v2687, %v2769
        %v2930 = vsel %vm2816, %v2769, %v2771
        %v2931 = vsel %vm2816, %v2771, %v2773
        %v2932 = vsel %vm2816, %v2773, %v2775
        %v2933 = vsel %vm2816, %v2695, %v2777
        %v2934 = vsel %vm2816, %v2777, %v2779
        %v2935 = vsel %vm2816, %v2779, %v2781
        %v2936 = vsel %vm2816, %v2781, %v2783
        %v2937 = vsel %vm2816, %v2785, %v2703
        %v2938 = vsel %vm2816, %v2703, %v2787
        %v2939 = vsel %vm2816, %v2787, %v2789
        %v2940 = vsel %vm2816, %v2789, %v2791
        %v2941 = vsel %vm2816, %v2793, %v2711
        %v2942 = vsel %vm2816, %v2711, %v2795
        %v2943 = vsel %vm2816, %v2795, %v2797
        %v2944 = vsel %vm2816, %v2797, %v2799
        %v2945 = vsel %vm2816, %v2801, %v2719
        %v2946 = vsel %vm2816, %v2719, %v2803
        %v2947 = vsel %vm2816, %v2803, %v2805
        %v2948 = vsel %vm2816, %v2805, %v2807
        %v2949 = vsel %vm2816, %v2809, %v2727
        %v2950 = vsel %vm2816, %v2727, %v2811
        %v2951 = vsel %vm2816, %v2811, %v2813
        %v2952 = vsel %vm2816, %v2813, %v2815
        %v3090 = vsel %vm580, %v2509, 0
        %3092 = vmatprep.subr.mxu0 %v2874
        %3093 = vmatpush1.msra.mxu0 %v2832
        %3094 = vmatprep.subr.mxu0 %v2871
        %3095 = vmatpush1.msra.mxu0 %v2828
        %3096 = vmatprep.subr.mxu0 %v2868
        %3097 = vmatpush1.msra.mxu0 %v2824
        %3098 = vmatprep.subr.mxu0 %v2865
        %3099 = vmatpush1.msra.mxu0 %v2820
        %3100 = vmatprep.subr.mxu0 %v2862
        %3101 = vmatpush1.msra.mxu0 %v2861
        %3102 = vmatprep.subr.mxu0 %v2858
        %3103 = vmatpush1.msra.mxu0 %v2857
        %3104 = vmatprep.subr.mxu0 %v2854
        %3105 = vmatpush1.msra.mxu0 %v2853
        %3106 = vmatprep.subr.mxu0 %v2850
        %3107 = vmatpush1.msra.mxu0 %v2849
        %3108 = vmatprep.subr.mxu0 %v2846
        %3109 = vmatpush1.msra.mxu0 %v2845
        %3110 = vmatprep.subr.mxu0 %v2842
        %3111 = vmatpush1.msra.mxu0 %v2841
        %3112 = vmatprep.subr.mxu0 %v2838
        %3113 = vmatpush1.msra.mxu0 %v2837
        %3114 = vmatprep.subr.mxu0 %v2834
        %3115 = vmatpush1.msra.mxu0 %v2833
        %3116 = vmatprep.subr.mxu0 %v2830
        %3117 = vmatpush1.msra.mxu0 %v2829
        %3118 = vmatprep.subr.mxu0 %v2826
        %3119 = vmatpush1.msra.mxu0 %v2825
        %3120 = vmatprep.subr.mxu0 %v2822
        %3121 = vmatpush1.msra.mxu0 %v2821
        %3122 = vmatprep.subr.mxu0 %v2818
        %3123 = vmatpush1.msra.mxu0 %v2817
        %3124 = vmatprep.subr.mxu0 %v2934
        %3125 = vmatpush2.msra.mxu0 %v2933
        %3126 = vmatprep.subr.mxu0 %v2930
        %3127 = vmatpush2.msra.mxu0 %v2929
        %3128 = vmatprep.subr.mxu0 %v2926
        %3129 = vmatpush2.msra.mxu0 %v2925
        %3130 = vmatprep.subr.mxu0 %v2922
        %3131 = vmatpush2.msra.mxu0 %v2921
        %3132 = vmatprep.subr.mxu0 %v2918
        %3133 = vmatpush2.msra.mxu0 %v2876
        %3134 = vmatprep.subr.mxu0 %v2915
        %3135 = vmatpush2.msra.mxu0 %v2873
        %3136 = vmatprep.subr.mxu0 %v2912
        %3137 = vmatpush2.msra.mxu0 %v2870
        %3138 = vmatprep.subr.mxu0 %v2909
        %3139 = vmatpush2.msra.mxu0 %v2867
        %3140 = vmatprep.subr.mxu0 %v2906
        %3141 = vmatpush2.msra.mxu0 %v2905
        %3142 = vmatprep.subr.mxu0 %v2902
        %3143 = vmatpush2.msra.mxu0 %v2901
        %3144 = vmatprep.subr.mxu0 %v2898
        %3145 = vmatpush2.msra.mxu0 %v2897
        %3146 = vmatprep.subr.mxu0 %v2894
        %3147 = vmatpush2.msra.mxu0 %v2893
        %3148 = vmatprep.subr.mxu0 %v2890
        %3149 = vmatpush2.msra.mxu0 %v2889
        %3150 = vmatprep.subr.mxu0 %v2886
        %3151 = vmatpush2.msra.mxu0 %v2885
        %3152 = vmatprep.subr.mxu0 %v2882
        %3153 = vmatpush2.msra.mxu0 %v2881
        %3154 = vmatprep.subr.mxu0 %v2878
        %3155 = vmatpush2.msra.mxu0 %v2877
        %3156 = vmatprep.mubr.f32.mxu0 %v2508
        %3157 = vmatmul.mubr.f32.gmra.mxu0 %v2507
        %v3158 = vpop.f32.mrf.mxu0
        %v3159 = vadd.f32 %v2514, %v3158
        %v3160 = vpop.f32.mrf.mxu0
        %v3161 = vadd.f32 %v2514, %v3160
        %3162 = vdwg.mxu0
        %3163 = vmatprep.subr.mxu0 0.0
        %3164 = vmatpush1.msra.mxu0 0.0
        %3165 = vmatprep.subr.mxu0 0.0
        %3166 = vmatpush1.msra.mxu0 0.0
        %3167 = vmatprep.subr.mxu0 0.0
        %3168 = vmatpush1.msra.mxu0 0.0
        %3169 = vmatprep.subr.mxu0 0.0
        %3170 = vmatpush1.msra.mxu0 0.0
        %3171 = vmatprep.subr.mxu0 0.0
        %3172 = vmatpush1.msra.mxu0 0.0
        %3173 = vmatprep.subr.mxu0 0.0
        %3174 = vmatpush1.msra.mxu0 0.0
        %3175 = vmatprep.subr.mxu0 0.0
        %3176 = vmatpush1.msra.mxu0 0.0
        %3177 = vmatprep.subr.mxu0 0.0
        %3178 = vmatpush1.msra.mxu0 0.0
        %3179 = vmatprep.subr.mxu0 0.0
        %3180 = vmatpush1.msra.mxu0 0.0
        %3181 = vmatprep.subr.mxu0 0.0
        %3182 = vmatpush1.msra.mxu0 0.0
        %3183 = vmatprep.subr.mxu0 0.0
        %3184 = vmatpush1.msra.mxu0 0.0
        %3185 = vmatprep.subr.mxu0 0.0
        %3186 = vmatpush1.msra.mxu0 0.0
        %3187 = vmatprep.subr.mxu0 %v2950
        %3188 = vmatpush1.msra.mxu0 %v2949
        %3189 = vmatprep.subr.mxu0 %v2946
        %3190 = vmatpush1.msra.mxu0 %v2945
        %3191 = vmatprep.subr.mxu0 %v2942
        %3192 = vmatpush1.msra.mxu0 %v2941
        %3193 = vmatprep.subr.mxu0 %v2938
        %3194 = vmatpush1.msra.mxu0 %v2937
        %3195 = vmatprep.subr.mxu0 0.0
        %3196 = vmatpush2.msra.mxu0 0.0
        %3197 = vmatprep.subr.mxu0 0.0
        %3198 = vmatpush2.msra.mxu0 0.0
        %3199 = vmatprep.subr.mxu0 0.0
        %3200 = vmatpush2.msra.mxu0 0.0
        %3201 = vmatprep.subr.mxu0 0.0
        %3202 = vmatpush2.msra.mxu0 0.0
        %3203 = vmatprep.subr.mxu0 0.0
        %3204 = vmatpush2.msra.mxu0 0.0
        %3205 = vmatprep.subr.mxu0 0.0
        %3206 = vmatpush2.msra.mxu0 0.0
        %3207 = vmatprep.subr.mxu0 0.0
        %3208 = vmatpush2.msra.mxu0 0.0
        %3209 = vmatprep.subr.mxu0 0.0
        %3210 = vmatpush2.msra.mxu0 0.0
        %3211 = vmatprep.subr.mxu0 0.0
        %3212 = vmatpush2.msra.mxu0 0.0
        %3213 = vmatprep.subr.mxu0 0.0
        %3214 = vmatpush2.msra.mxu0 0.0
        %3215 = vmatprep.subr.mxu0 0.0
        %3216 = vmatpush2.msra.mxu0 0.0
        %3217 = vmatprep.subr.mxu0 0.0
        %3218 = vmatpush2.msra.mxu0 0.0
        %3219 = vmatprep.subr.mxu0 0.0
        %3220 = vmatpush2.msra.mxu0 0.0
        %3221 = vmatprep.subr.mxu0 0.0
        %3222 = vmatpush2.msra.mxu0 0.0
        %3223 = vmatprep.subr.mxu0 0.0
        %3224 = vmatpush2.msra.mxu0 0.0
        %3225 = vmatprep.subr.mxu0 0.0
        %3226 = vmatpush2.msra.mxu0 0.0
        %3227 = vmatprep.mubr.f32.mxu0 0.0
        %3228 = vmatmul.mubr.f32.gmra.mxu0 %v3090
        %v3229 = vpop.f32.mrf.mxu0
        %v3230 = vadd.f32 %v3159, %v3229
        %v3231 = vpop.f32.mrf.mxu0
        %v3232 = vadd.f32 %v3161, %v3231
        %3233 = vdwg.mxu0
        %3234 = vmatprep.subr.mxu0 %v2876
        %3235 = vmatpush1.msra.mxu0 %v2875
        %3236 = vmatprep.subr.mxu0 %v2873
        %3237 = vmatpush1.msra.mxu0 %v2872
        %3238 = vmatprep.subr.mxu0 %v2870
        %3239 = vmatpush1.msra.mxu0 %v2869
        %3240 = vmatprep.subr.mxu0 %v2867
        %3241 = vmatpush1.msra.mxu0 %v2866
        %3242 = vmatprep.subr.mxu0 %v2864
        %3243 = vmatpush1.msra.mxu0 %v2863
        %3244 = vmatprep.subr.mxu0 %v2860
        %3245 = vmatpush1.msra.mxu0 %v2859
        %3246 = vmatprep.subr.mxu0 %v2856
        %3247 = vmatpush1.msra.mxu0 %v2855
        %3248 = vmatprep.subr.mxu0 %v2852
        %3249 = vmatpush1.msra.mxu0 %v2851
        %3250 = vmatprep.subr.mxu0 %v2848
        %3251 = vmatpush1.msra.mxu0 %v2847
        %3252 = vmatprep.subr.mxu0 %v2844
        %3253 = vmatpush1.msra.mxu0 %v2843
        %3254 = vmatprep.subr.mxu0 %v2840
        %3255 = vmatpush1.msra.mxu0 %v2839
        %3256 = vmatprep.subr.mxu0 %v2836
        %3257 = vmatpush1.msra.mxu0 %v2835
        %3258 = vmatprep.subr.mxu0 %v2832
        %3259 = vmatpush1.msra.mxu0 %v2831
        %3260 = vmatprep.subr.mxu0 %v2828
        %3261 = vmatpush1.msra.mxu0 %v2827
        %3262 = vmatprep.subr.mxu0 %v2824
        %3263 = vmatpush1.msra.mxu0 %v2823
        %3264 = vmatprep.subr.mxu0 %v2820
        %3265 = vmatpush1.msra.mxu0 %v2819
        %3266 = vmatprep.subr.mxu0 %v2936
        %3267 = vmatpush2.msra.mxu0 %v2935
        %3268 = vmatprep.subr.mxu0 %v2932
        %3269 = vmatpush2.msra.mxu0 %v2931
        %3270 = vmatprep.subr.mxu0 %v2928
        %3271 = vmatpush2.msra.mxu0 %v2927
        %3272 = vmatprep.subr.mxu0 %v2924
        %3273 = vmatpush2.msra.mxu0 %v2923
        %3274 = vmatprep.subr.mxu0 %v2920
        %3275 = vmatpush2.msra.mxu0 %v2919
        %3276 = vmatprep.subr.mxu0 %v2917
        %3277 = vmatpush2.msra.mxu0 %v2916
        %3278 = vmatprep.subr.mxu0 %v2914
        %3279 = vmatpush2.msra.mxu0 %v2913
        %3280 = vmatprep.subr.mxu0 %v2911
        %3281 = vmatpush2.msra.mxu0 %v2910
        %3282 = vmatprep.subr.mxu0 %v2908
        %3283 = vmatpush2.msra.mxu0 %v2907
        %3284 = vmatprep.subr.mxu0 %v2904
        %3285 = vmatpush2.msra.mxu0 %v2903
        %3286 = vmatprep.subr.mxu0 %v2900
        %3287 = vmatpush2.msra.mxu0 %v2899
        %3288 = vmatprep.subr.mxu0 %v2896
        %3289 = vmatpush2.msra.mxu0 %v2895
        %3290 = vmatprep.subr.mxu0 %v2892
        %3291 = vmatpush2.msra.mxu0 %v2891
        %3292 = vmatprep.subr.mxu0 %v2888
        %3293 = vmatpush2.msra.mxu0 %v2887
        %3294 = vmatprep.subr.mxu0 %v2884
        %3295 = vmatpush2.msra.mxu0 %v2883
        %3296 = vmatprep.subr.mxu0 %v2880
        %3297 = vmatpush2.msra.mxu0 %v2879
        %3298 = vmatprep.mubr.f32.mxu0 %v2508
        %3299 = vmatmul.mubr.f32.gmra.mxu0 %v2507
        %v3300 = vpop.f32.mrf.mxu0
        %v3301 = vadd.f32 %v2514, %v3300
        %v3302 = vpop.f32.mrf.mxu0
        %v3303 = vadd.f32 %v2514, %v3302
        %3304 = vdwg.mxu0
        %3305 = vmatprep.subr.mxu0 0.0
        %3306 = vmatpush1.msra.mxu0 0.0
        %3307 = vmatprep.subr.mxu0 0.0
        %3308 = vmatpush1.msra.mxu0 0.0
        %3309 = vmatprep.subr.mxu0 0.0
        %3310 = vmatpush1.msra.mxu0 0.0
        %3311 = vmatprep.subr.mxu0 0.0
        %3312 = vmatpush1.msra.mxu0 0.0
        %3313 = vmatprep.subr.mxu0 0.0
        %3314 = vmatpush1.msra.mxu0 0.0
        %3315 = vmatprep.subr.mxu0 0.0
        %3316 = vmatpush1.msra.mxu0 0.0
        %3317 = vmatprep.subr.mxu0 0.0
        %3318 = vmatpush1.msra.mxu0 0.0
        %3319 = vmatprep.subr.mxu0 0.0
        %3320 = vmatpush1.msra.mxu0 0.0
        %3321 = vmatprep.subr.mxu0 0.0
        %3322 = vmatpush1.msra.mxu0 0.0
        %3323 = vmatprep.subr.mxu0 0.0
        %3324 = vmatpush1.msra.mxu0 0.0
        %3325 = vmatprep.subr.mxu0 0.0
        %3326 = vmatpush1.msra.mxu0 0.0
        %3327 = vmatprep.subr.mxu0 0.0
        %3328 = vmatpush1.msra.mxu0 0.0
        %3329 = vmatprep.subr.mxu0 %v2952
        %3330 = vmatpush1.msra.mxu0 %v2951
        %3331 = vmatprep.subr.mxu0 %v2948
        %3332 = vmatpush1.msra.mxu0 %v2947
        %3333 = vmatprep.subr.mxu0 %v2944
        %3334 = vmatpush1.msra.mxu0 %v2943
        %3335 = vmatprep.subr.mxu0 %v2940
        %3336 = vmatpush1.msra.mxu0 %v2939
        %3337 = vmatprep.subr.mxu0 0.0
        %3338 = vmatpush2.msra.mxu0 0.0
        %3339 = vmatprep.subr.mxu0 0.0
        %3340 = vmatpush2.msra.mxu0 0.0
        %3341 = vmatprep.subr.mxu0 0.0
        %3342 = vmatpush2.msra.mxu0 0.0
        %3343 = vmatprep.subr.mxu0 0.0
        %3344 = vmatpush2.msra.mxu0 0.0
        %3345 = vmatprep.subr.mxu0 0.0
        %3346 = vmatpush2.msra.mxu0 0.0
        %3347 = vmatprep.subr.mxu0 0.0
        %3348 = vmatpush2.msra.mxu0 0.0
        %3349 = vmatprep.subr.mxu0 0.0
        %3350 = vmatpush2.msra.mxu0 0.0
        %3351 = vmatprep.subr.mxu0 0.0
        %3352 = vmatpush2.msra.mxu0 0.0
        %3353 = vmatprep.subr.mxu0 0.0
        %3354 = vmatpush2.msra.mxu0 0.0
        %3355 = vmatprep.subr.mxu0 0.0
        %3356 = vmatpush2.msra.mxu0 0.0
        %3357 = vmatprep.subr.mxu0 0.0
        %3358 = vmatpush2.msra.mxu0 0.0
        %3359 = vmatprep.subr.mxu0 0.0
        %3360 = vmatpush2.msra.mxu0 0.0
        %3361 = vmatprep.subr.mxu0 0.0
        %3362 = vmatpush2.msra.mxu0 0.0
        %3363 = vmatprep.subr.mxu0 0.0
        %3364 = vmatpush2.msra.mxu0 0.0
        %3365 = vmatprep.subr.mxu0 0.0
        %3366 = vmatpush2.msra.mxu0 0.0
        %3367 = vmatprep.subr.mxu0 0.0
        %3368 = vmatpush2.msra.mxu0 0.0
        %3369 = vmatprep.mubr.f32.mxu0 0.0
        %3370 = vmatmul.mubr.f32.gmra.mxu0 %v3090
        %v3371 = vpop.f32.mrf.mxu0
        %v3372 = vadd.f32 %v3301, %v3371
        %v3373 = vpop.f32.mrf.mxu0
        %v3374 = vadd.f32 %v3303, %v3373
        %3375 = vdwg.mxu0
        %v3376 = vmax.f32 %v3230, 0.0
        %v3377 = vmax.f32 %v3232, 0.0
        %v3378 = vmax.f32 %v3372, 0.0
        %v3379 = vmax.f32 %v3374, 0.0
        %3380 = vst [vmem:[#allocation2 + $0x1a0] sm:$0xff] %v3376
        %3381 = vst [vmem:[#allocation2 + $0x1a8] sm:$0xff] %v3377
        %3382 = vst [vmem:[#allocation2 + $0x1b0] sm:$0xff] %v3378
        %3383 = vst [vmem:[#allocation2 + $0x1b8] sm:$0xff] %v3379
        %v3384 = vld [vmem:[#allocation2 + $0x20] sm:$0xff]
        %v3385 = vld [vmem:[#allocation2 + $0x28] sm:$0xff]
        %v3386 = vld [vmem:[#allocation2 + $0x30] sm:$0xff]
        %v3387 = vld [vmem:[#allocation2 + $0x38] sm:$0xff]
        %v3388 = vld [vmem:[#allocation2 + $0x80] sm:$0xff]
        %v3389 = vld [vmem:[#allocation2 + $0x88] sm:$0xff]
        %v3390 = vld [vmem:[#allocation2 + $0x90] sm:$0xff]
        %v3391 = vld [vmem:[#allocation2 + $0x98] sm:$0xff]
        %v3392 = vld [vmem:[#allocation2 + $0xe0] sm:$0xff]
        %v3393 = vld [vmem:[#allocation2 + $0xe8] sm:$0xff]
        %v3394 = vld [vmem:[#allocation2 + $0xf0] sm:$0xff]
        %v3395 = vld [vmem:[#allocation2 + $0xf8] sm:$0xff]
        %v3396 = vld [vmem:[#allocation2 + $0x140] sm:$0xff]
        %v3397 = vld [vmem:[#allocation2 + $0x148] sm:$0xff]
        %v3398 = vld [vmem:[#allocation2 + $0x150] sm:$0xff]
        %v3399 = vld [vmem:[#allocation2 + $0x158] sm:$0xff]
        %v3400 = vld [vmem:[#allocation2 + $0x1a0] sm:$0xff]
        %v3401 = vld [vmem:[#allocation2 + $0x1a8] sm:$0xff]
        %v3402 = vld [vmem:[#allocation2 + $0x1b0] sm:$0xff]
        %v3403 = vld [vmem:[#allocation2 + $0x1b8] sm:$0xff]
        %v3404 = vld [vmem:[%s5] sm:$0xff]
        %v3405 = vld [vmem:[%s7 + $0x18] sm:$0xff]
        %3407 = vset.pattern.permute.xlu0 0
        %3408 = vperm.xlu0 %3407, %v3405
        %v3409 = vpop.permute.xlu0 %3408
        %vm3411 = vcmask 326656
        %v3413 = vsel %vm3411, %v3404, 0
        %3415 = vmatprep.subr.mxu0 0.0
        %3416 = vmatpush1.msra.mxu0 0.0
        %3417 = vmatprep.subr.mxu0 0.0
        %3418 = vmatpush1.msra.mxu0 0.0
        %3419 = vmatprep.subr.mxu0 0.0
        %3420 = vmatpush1.msra.mxu0 0.0
        %3421 = vmatprep.subr.mxu0 0.0
        %3422 = vmatpush1.msra.mxu0 0.0
        %3423 = vmatprep.subr.mxu0 0.0
        %3424 = vmatpush1.msra.mxu0 0.0
        %3425 = vmatprep.subr.mxu0 0.0
        %3426 = vmatpush1.msra.mxu0 0.0
        %3427 = vmatprep.subr.mxu0 0.0
        %3428 = vmatpush1.msra.mxu0 0.0
        %3429 = vmatprep.subr.mxu0 0.0
        %3430 = vmatpush1.msra.mxu0 0.0
        %3431 = vmatprep.subr.mxu0 0.0
        %3432 = vmatpush1.msra.mxu0 0.0
        %3433 = vmatprep.subr.mxu0 0.0
        %3434 = vmatpush1.msra.mxu0 0.0
        %3435 = vmatprep.subr.mxu0 0.0
        %3436 = vmatpush1.msra.mxu0 0.0
        %3437 = vmatprep.subr.mxu0 %v3401
        %3438 = vmatpush1.msra.mxu0 %v3400
        %3439 = vmatprep.subr.mxu0 %v3397
        %3440 = vmatpush1.msra.mxu0 %v3396
        %3441 = vmatprep.subr.mxu0 %v3393
        %3442 = vmatpush1.msra.mxu0 %v3392
        %3443 = vmatprep.subr.mxu0 %v3389
        %3444 = vmatpush1.msra.mxu0 %v3388
        %3445 = vmatprep.subr.mxu0 %v3385
        %3446 = vmatpush1.msra.mxu0 %v3384
        %3447 = vmatprep.subr.mxu0 0.0
        %3448 = vmatpush2.msra.mxu0 0.0
        %3449 = vmatprep.subr.mxu0 0.0
        %3450 = vmatpush2.msra.mxu0 0.0
        %3451 = vmatprep.subr.mxu0 0.0
        %3452 = vmatpush2.msra.mxu0 0.0
        %3453 = vmatprep.subr.mxu0 0.0
        %3454 = vmatpush2.msra.mxu0 0.0
        %3455 = vmatprep.subr.mxu0 0.0
        %3456 = vmatpush2.msra.mxu0 0.0
        %3457 = vmatprep.subr.mxu0 0.0
        %3458 = vmatpush2.msra.mxu0 0.0
        %3459 = vmatprep.subr.mxu0 0.0
        %3460 = vmatpush2.msra.mxu0 0.0
        %3461 = vmatprep.subr.mxu0 0.0
        %3462 = vmatpush2.msra.mxu0 0.0
        %3463 = vmatprep.subr.mxu0 0.0
        %3464 = vmatpush2.msra.mxu0 0.0
        %3465 = vmatprep.subr.mxu0 0.0
        %3466 = vmatpush2.msra.mxu0 0.0
        %3467 = vmatprep.subr.mxu0 0.0
        %3468 = vmatpush2.msra.mxu0 0.0
        %3469 = vmatprep.subr.mxu0 0.0
        %3470 = vmatpush2.msra.mxu0 0.0
        %3471 = vmatprep.subr.mxu0 0.0
        %3472 = vmatpush2.msra.mxu0 0.0
        %3473 = vmatprep.subr.mxu0 0.0
        %3474 = vmatpush2.msra.mxu0 0.0
        %3475 = vmatprep.subr.mxu0 0.0
        %3476 = vmatpush2.msra.mxu0 0.0
        %3477 = vmatprep.subr.mxu0 0.0
        %3478 = vmatpush2.msra.mxu0 0.0
        %3479 = vmatprep.mubr.f32.mxu0 0.0
        %3480 = vmatmul.mubr.f32.gmra.mxu0 %v3413
        %v3481 = vpop.f32.mrf.mxu0
        %v3482 = vadd.f32 %v3409, %v3481
        %v3483 = vpop.f32.mrf.mxu0
        %v3484 = vadd.f32 %v3409, %v3483
        %3485 = vdwg.mxu0
        %3486 = vmatprep.subr.mxu0 0.0
        %3487 = vmatpush1.msra.mxu0 0.0
        %3488 = vmatprep.subr.mxu0 0.0
        %3489 = vmatpush1.msra.mxu0 0.0
        %3490 = vmatprep.subr.mxu0 0.0
        %3491 = vmatpush1.msra.mxu0 0.0
        %3492 = vmatprep.subr.mxu0 0.0
        %3493 = vmatpush1.msra.mxu0 0.0
        %3494 = vmatprep.subr.mxu0 0.0
        %3495 = vmatpush1.msra.mxu0 0.0
        %3496 = vmatprep.subr.mxu0 0.0
        %3497 = vmatpush1.msra.mxu0 0.0
        %3498 = vmatprep.subr.mxu0 0.0
        %3499 = vmatpush1.msra.mxu0 0.0
        %3500 = vmatprep.subr.mxu0 0.0
        %3501 = vmatpush1.msra.mxu0 0.0
        %3502 = vmatprep.subr.mxu0 0.0
        %3503 = vmatpush1.msra.mxu0 0.0
        %3504 = vmatprep.subr.mxu0 0.0
        %3505 = vmatpush1.msra.mxu0 0.0
        %3506 = vmatprep.subr.mxu0 0.0
        %3507 = vmatpush1.msra.mxu0 0.0
        %3508 = vmatprep.subr.mxu0 %v3403
        %3509 = vmatpush1.msra.mxu0 %v3402
        %3510 = vmatprep.subr.mxu0 %v3399
        %3511 = vmatpush1.msra.mxu0 %v3398
        %3512 = vmatprep.subr.mxu0 %v3395
        %3513 = vmatpush1.msra.mxu0 %v3394
        %3514 = vmatprep.subr.mxu0 %v3391
        %3515 = vmatpush1.msra.mxu0 %v3390
        %3516 = vmatprep.subr.mxu0 %v3387
        %3517 = vmatpush1.msra.mxu0 %v3386
        %3518 = vmatprep.subr.mxu0 0.0
        %3519 = vmatpush2.msra.mxu0 0.0
        %3520 = vmatprep.subr.mxu0 0.0
        %3521 = vmatpush2.msra.mxu0 0.0
        %3522 = vmatprep.subr.mxu0 0.0
        %3523 = vmatpush2.msra.mxu0 0.0
        %3524 = vmatprep.subr.mxu0 0.0
        %3525 = vmatpush2.msra.mxu0 0.0
        %3526 = vmatprep.subr.mxu0 0.0
        %3527 = vmatpush2.msra.mxu0 0.0
        %3528 = vmatprep.subr.mxu0 0.0
        %3529 = vmatpush2.msra.mxu0 0.0
        %3530 = vmatprep.subr.mxu0 0.0
        %3531 = vmatpush2.msra.mxu0 0.0
        %3532 = vmatprep.subr.mxu0 0.0
        %3533 = vmatpush2.msra.mxu0 0.0
        %3534 = vmatprep.subr.mxu0 0.0
        %3535 = vmatpush2.msra.mxu0 0.0
        %3536 = vmatprep.subr.mxu0 0.0
        %3537 = vmatpush2.msra.mxu0 0.0
        %3538 = vmatprep.subr.mxu0 0.0
        %3539 = vmatpush2.msra.mxu0 0.0
        %3540 = vmatprep.subr.mxu0 0.0
        %3541 = vmatpush2.msra.mxu0 0.0
        %3542 = vmatprep.subr.mxu0 0.0
        %3543 = vmatpush2.msra.mxu0 0.0
        %3544 = vmatprep.subr.mxu0 0.0
        %3545 = vmatpush2.msra.mxu0 0.0
        %3546 = vmatprep.subr.mxu0 0.0
        %3547 = vmatpush2.msra.mxu0 0.0
        %3548 = vmatprep.subr.mxu0 0.0
        %3549 = vmatpush2.msra.mxu0 0.0
        %3550 = vmatprep.mubr.f32.mxu0 0.0
        %3551 = vmatmul.mubr.f32.gmra.mxu0 %v3413
        %v3552 = vpop.f32.mrf.mxu0
        %v3553 = vadd.f32 %v3409, %v3552
        %v3554 = vpop.f32.mrf.mxu0
        %v3555 = vadd.f32 %v3409, %v3554
        %3556 = vdwg.mxu0
        %v3557 = vmax.f32 %v3482, 0.0
        %v3558 = vmax.f32 %v3484, 0.0
        %v3559 = vmax.f32 %v3553, 0.0
        %v3560 = vmax.f32 %v3555, 0.0
        %3561 = vst [vmem:[#allocation2 + $0x200] sm:$0xff] %v3557
        %3562 = vst [vmem:[#allocation2 + $0x208] sm:$0xff] %v3558
        %3563 = vst [vmem:[#allocation2 + $0x210] sm:$0xff] %v3559
        %3564 = vst [vmem:[#allocation2 + $0x218] sm:$0xff] %v3560
        %v3565 = vld [vmem:[#allocation2 + $0x20] sm:$0xff]
        %v3566 = vld [vmem:[#allocation2 + $0x28] sm:$0xff]
        %v3567 = vld [vmem:[#allocation2 + $0x30] sm:$0xff]
        %v3568 = vld [vmem:[#allocation2 + $0x38] sm:$0xff]
        %v3569 = vld [vmem:[#allocation2 + $0x80] sm:$0xff]
        %v3570 = vld [vmem:[#allocation2 + $0x88] sm:$0xff]
        %v3571 = vld [vmem:[#allocation2 + $0x90] sm:$0xff]
        %v3572 = vld [vmem:[#allocation2 + $0x98] sm:$0xff]
        %v3573 = vld [vmem:[#allocation2 + $0xe0] sm:$0xff]
        %v3574 = vld [vmem:[#allocation2 + $0xe8] sm:$0xff]
        %v3575 = vld [vmem:[#allocation2 + $0xf0] sm:$0xff]
        %v3576 = vld [vmem:[#allocation2 + $0xf8] sm:$0xff]
        %v3577 = vld [vmem:[#allocation2 + $0x140] sm:$0xff]
        %v3578 = vld [vmem:[#allocation2 + $0x148] sm:$0xff]
        %v3579 = vld [vmem:[#allocation2 + $0x150] sm:$0xff]
        %v3580 = vld [vmem:[#allocation2 + $0x158] sm:$0xff]
        %v3581 = vld [vmem:[#allocation2 + $0x1a0] sm:$0xff]
        %v3582 = vld [vmem:[#allocation2 + $0x1a8] sm:$0xff]
        %v3583 = vld [vmem:[#allocation2 + $0x1b0] sm:$0xff]
        %v3584 = vld [vmem:[#allocation2 + $0x1b8] sm:$0xff]
        %v3585 = vld [vmem:[#allocation2 + $0x200] sm:$0xff]
        %v3586 = vld [vmem:[#allocation2 + $0x208] sm:$0xff]
        %v3587 = vld [vmem:[#allocation2 + $0x210] sm:$0xff]
        %v3588 = vld [vmem:[#allocation2 + $0x218] sm:$0xff]
        %v3589 = vld [vmem:[#allocation8] sm:$0xff]
        %v3590 = vld [vmem:[%s7 + $0x20] sm:$0xff]
        %3592 = vset.pattern.permute.xlu0 0
        %3593 = vperm.xlu0 %3592, %v3590
        %v3594 = vpop.permute.xlu0 %3593
        %vm3596 = vcmask 392192
        %v3598 = vsel %vm3596, %v3589, 0
        %3600 = vmatprep.subr.mxu0 0.0
        %3601 = vmatpush1.msra.mxu0 0.0
        %3602 = vmatprep.subr.mxu0 0.0
        %3603 = vmatpush1.msra.mxu0 0.0
        %3604 = vmatprep.subr.mxu0 0.0
        %3605 = vmatpush1.msra.mxu0 0.0
        %3606 = vmatprep.subr.mxu0 0.0
        %3607 = vmatpush1.msra.mxu0 0.0
        %3608 = vmatprep.subr.mxu0 0.0
        %3609 = vmatpush1.msra.mxu0 0.0
        %3610 = vmatprep.subr.mxu0 0.0
        %3611 = vmatpush1.msra.mxu0 0.0
        %3612 = vmatprep.subr.mxu0 0.0
        %3613 = vmatpush1.msra.mxu0 0.0
        %3614 = vmatprep.subr.mxu0 0.0
        %3615 = vmatpush1.msra.mxu0 0.0
        %3616 = vmatprep.subr.mxu0 0.0
        %3617 = vmatpush1.msra.mxu0 0.0
        %3618 = vmatprep.subr.mxu0 0.0
        %3619 = vmatpush1.msra.mxu0 0.0
        %3620 = vmatprep.subr.mxu0 %v3586
        %3621 = vmatpush1.msra.mxu0 %v3585
        %3622 = vmatprep.subr.mxu0 %v3582
        %3623 = vmatpush1.msra.mxu0 %v3581
        %3624 = vmatprep.subr.mxu0 %v3578
        %3625 = vmatpush1.msra.mxu0 %v3577
        %3626 = vmatprep.subr.mxu0 %v3574
        %3627 = vmatpush1.msra.mxu0 %v3573
        %3628 = vmatprep.subr.mxu0 %v3570
        %3629 = vmatpush1.msra.mxu0 %v3569
        %3630 = vmatprep.subr.mxu0 %v3566
        %3631 = vmatpush1.msra.mxu0 %v3565
        %3632 = vmatprep.subr.mxu0 0.0
        %3633 = vmatpush2.msra.mxu0 0.0
        %3634 = vmatprep.subr.mxu0 0.0
        %3635 = vmatpush2.msra.mxu0 0.0
        %3636 = vmatprep.subr.mxu0 0.0
        %3637 = vmatpush2.msra.mxu0 0.0
        %3638 = vmatprep.subr.mxu0 0.0
        %3639 = vmatpush2.msra.mxu0 0.0
        %3640 = vmatprep.subr.mxu0 0.0
        %3641 = vmatpush2.msra.mxu0 0.0
        %3642 = vmatprep.subr.mxu0 0.0
        %3643 = vmatpush2.msra.mxu0 0.0
        %3644 = vmatprep.subr.mxu0 0.0
        %3645 = vmatpush2.msra.mxu0 0.0
        %3646 = vmatprep.subr.mxu0 0.0
        %3647 = vmatpush2.msra.mxu0 0.0
        %3648 = vmatprep.subr.mxu0 0.0
        %3649 = vmatpush2.msra.mxu0 0.0
        %3650 = vmatprep.subr.mxu0 0.0
        %3651 = vmatpush2.msra.mxu0 0.0
        %3652 = vmatprep.subr.mxu0 0.0
        %3653 = vmatpush2.msra.mxu0 0.0
        %3654 = vmatprep.subr.mxu0 0.0
        %3655 = vmatpush2.msra.mxu0 0.0
        %3656 = vmatprep.subr.mxu0 0.0
        %3657 = vmatpush2.msra.mxu0 0.0
        %3658 = vmatprep.subr.mxu0 0.0
        %3659 = vmatpush2.msra.mxu0 0.0
        %3660 = vmatprep.subr.mxu0 0.0
        %3661 = vmatpush2.msra.mxu0 0.0
        %3662 = vmatprep.subr.mxu0 0.0
        %3663 = vmatpush2.msra.mxu0 0.0
        %3664 = vmatprep.mubr.f32.mxu0 0.0
        %3665 = vmatmul.mubr.f32.gmra.mxu0 %v3598
        %v3666 = vpop.f32.mrf.mxu0
        %v3667 = vadd.f32 %v3594, %v3666
        %v3668 = vpop.f32.mrf.mxu0
        %v3669 = vadd.f32 %v3594, %v3668
        %3670 = vdwg.mxu0
        %3671 = vmatprep.subr.mxu0 0.0
        %3672 = vmatpush1.msra.mxu0 0.0
        %3673 = vmatprep.subr.mxu0 0.0
        %3674 = vmatpush1.msra.mxu0 0.0
        %3675 = vmatprep.subr.mxu0 0.0
        %3676 = vmatpush1.msra.mxu0 0.0
        %3677 = vmatprep.subr.mxu0 0.0
        %3678 = vmatpush1.msra.mxu0 0.0
        %3679 = vmatprep.subr.mxu0 0.0
        %3680 = vmatpush1.msra.mxu0 0.0
        %3681 = vmatprep.subr.mxu0 0.0
        %3682 = vmatpush1.msra.mxu0 0.0
        %3683 = vmatprep.subr.mxu0 0.0
        %3684 = vmatpush1.msra.mxu0 0.0
        %3685 = vmatprep.subr.mxu0 0.0
        %3686 = vmatpush1.msra.mxu0 0.0
        %3687 = vmatprep.subr.mxu0 0.0
        %3688 = vmatpush1.msra.mxu0 0.0
        %3689 = vmatprep.subr.mxu0 0.0
        %3690 = vmatpush1.msra.mxu0 0.0
        %3691 = vmatprep.subr.mxu0 %v3588
        %3692 = vmatpush1.msra.mxu0 %v3587
        %3693 = vmatprep.subr.mxu0 %v3584
        %3694 = vmatpush1.msra.mxu0 %v3583
        %3695 = vmatprep.subr.mxu0 %v3580
        %3696 = vmatpush1.msra.mxu0 %v3579
        %3697 = vmatprep.subr.mxu0 %v3576
        %3698 = vmatpush1.msra.mxu0 %v3575
        %3699 = vmatprep.subr.mxu0 %v3572
        %3700 = vmatpush1.msra.mxu0 %v3571
        %3701 = vmatprep.subr.mxu0 %v3568
        %3702 = vmatpush1.msra.mxu0 %v3567
        %3703 = vmatprep.subr.mxu0 0.0
        %3704 = vmatpush2.msra.mxu0 0.0
        %3705 = vmatprep.subr.mxu0 0.0
        %3706 = vmatpush2.msra.mxu0 0.0
        %3707 = vmatprep.subr.mxu0 0.0
        %3708 = vmatpush2.msra.mxu0 0.0
        %3709 = vmatprep.subr.mxu0 0.0
        %3710 = vmatpush2.msra.mxu0 0.0
        %3711 = vmatprep.subr.mxu0 0.0
        %3712 = vmatpush2.msra.mxu0 0.0
        %3713 = vmatprep.subr.mxu0 0.0
        %3714 = vmatpush2.msra.mxu0 0.0
        %3715 = vmatprep.subr.mxu0 0.0
        %3716 = vmatpush2.msra.mxu0 0.0
        %3717 = vmatprep.subr.mxu0 0.0
        %3718 = vmatpush2.msra.mxu0 0.0
        %3719 = vmatprep.subr.mxu0 0.0
        %3720 = vmatpush2.msra.mxu0 0.0
        %3721 = vmatprep.subr.mxu0 0.0
        %3722 = vmatpush2.msra.mxu0 0.0
        %3723 = vmatprep.subr.mxu0 0.0
        %3724 = vmatpush2.msra.mxu0 0.0
        %3725 = vmatprep.subr.mxu0 0.0
        %3726 = vmatpush2.msra.mxu0 0.0
        %3727 = vmatprep.subr.mxu0 0.0
        %3728 = vmatpush2.msra.mxu0 0.0
        %3729 = vmatprep.subr.mxu0 0.0
        %3730 = vmatpush2.msra.mxu0 0.0
        %3731 = vmatprep.subr.mxu0 0.0
        %3732 = vmatpush2.msra.mxu0 0.0
        %3733 = vmatprep.subr.mxu0 0.0
        %3734 = vmatpush2.msra.mxu0 0.0
        %3735 = vmatprep.mubr.f32.mxu0 0.0
        %3736 = vmatmul.mubr.f32.gmra.mxu0 %v3598
        %v3737 = vpop.f32.mrf.mxu0
        %v3738 = vadd.f32 %v3594, %v3737
        %v3739 = vpop.f32.mrf.mxu0
        %v3740 = vadd.f32 %v3594, %v3739
        %3741 = vdwg.mxu0
        %v3742 = vmax.f32 %v3667, 0.0
        %v3743 = vmax.f32 %v3669, 0.0
        %v3744 = vmax.f32 %v3738, 0.0
        %v3745 = vmax.f32 %v3740, 0.0
        %3746 = vst [vmem:[#allocation2 + $0x260] sm:$0xff] %v3742
        %3747 = vst [vmem:[#allocation2 + $0x268] sm:$0xff] %v3743
        %3748 = vst [vmem:[#allocation2 + $0x270] sm:$0xff] %v3744
        %3749 = vst [vmem:[#allocation2 + $0x278] sm:$0xff] %v3745
        %v3750 = vld [vmem:[%s7 + $0x28] sm:$0xff]
        %v3751 = vld [vmem:[%s7 + $0x30] sm:$0xff]
        %v3752 = vld [vmem:[#allocation9] sm:$0xff]
        %v3753 = vld [vmem:[#allocation9 + $0x8] sm:$0xff]
        %v3754 = vld [vmem:[#allocation2 + $0x20] sm:$0xff]
        %v3755 = vld [vmem:[#allocation2 + $0x28] sm:$0xff]
        %v3756 = vld [vmem:[#allocation2 + $0x30] sm:$0xff]
        %v3757 = vld [vmem:[#allocation2 + $0x38] sm:$0xff]
        %v3758 = vld [vmem:[#allocation2 + $0x80] sm:$0xff]
        %v3759 = vld [vmem:[#allocation2 + $0x88] sm:$0xff]
        %v3760 = vld [vmem:[#allocation2 + $0x90] sm:$0xff]
        %v3761 = vld [vmem:[#allocation2 + $0x98] sm:$0xff]
        %v3762 = vld [vmem:[#allocation2 + $0xe0] sm:$0xff]
        %v3763 = vld [vmem:[#allocation2 + $0xe8] sm:$0xff]
        %v3764 = vld [vmem:[#allocation2 + $0xf0] sm:$0xff]
        %v3765 = vld [vmem:[#allocation2 + $0xf8] sm:$0xff]
        %v3766 = vld [vmem:[#allocation2 + $0x140] sm:$0xff]
        %v3767 = vld [vmem:[#allocation2 + $0x148] sm:$0xff]
        %v3768 = vld [vmem:[#allocation2 + $0x150] sm:$0xff]
        %v3769 = vld [vmem:[#allocation2 + $0x158] sm:$0xff]
        %v3770 = vld [vmem:[#allocation2 + $0x1a0] sm:$0xff]
        %v3771 = vld [vmem:[#allocation2 + $0x1a8] sm:$0xff]
        %v3772 = vld [vmem:[#allocation2 + $0x1b0] sm:$0xff]
        %v3773 = vld [vmem:[#allocation2 + $0x1b8] sm:$0xff]
        %v3774 = vld [vmem:[#allocation2 + $0x200] sm:$0xff]
        %v3775 = vld [vmem:[#allocation2 + $0x208] sm:$0xff]
        %v3776 = vld [vmem:[#allocation2 + $0x210] sm:$0xff]
        %v3777 = vld [vmem:[#allocation2 + $0x218] sm:$0xff]
        %v3778 = vld [vmem:[#allocation2 + $0x260] sm:$0xff]
        %v3779 = vld [vmem:[#allocation2 + $0x268] sm:$0xff]
        %v3780 = vld [vmem:[#allocation2 + $0x270] sm:$0xff]
        %v3781 = vld [vmem:[#allocation2 + $0x278] sm:$0xff]
        %3783 = vset.pattern.permute.xlu0 0
        %3784 = vperm.xlu0 %3783, %v3750
        %v3785 = vpop.permute.xlu0 %3784
        %3788 = vset.pattern.permute.xlu0 0
        %3789 = vperm.xlu0 %3788, %v3751
        %v3790 = vpop.permute.xlu0 %3789
        %vm3792 = vcmask 457728
        %v3794 = vsel %vm3792, %v3752, 0
        %v3797 = vsel %vm3792, %v3753, 0
        %3799 = vmatprep.subr.mxu0 0.0
        %3800 = vmatpush1.msra.mxu0 0.0
        %3801 = vmatprep.subr.mxu0 0.0
        %3802 = vmatpush1.msra.mxu0 0.0
        %3803 = vmatprep.subr.mxu0 0.0
        %3804 = vmatpush1.msra.mxu0 0.0
        %3805 = vmatprep.subr.mxu0 0.0
        %3806 = vmatpush1.msra.mxu0 0.0
        %3807 = vmatprep.subr.mxu0 0.0
        %3808 = vmatpush1.msra.mxu0 0.0
        %3809 = vmatprep.subr.mxu0 0.0
        %3810 = vmatpush1.msra.mxu0 0.0
        %3811 = vmatprep.subr.mxu0 0.0
        %3812 = vmatpush1.msra.mxu0 0.0
        %3813 = vmatprep.subr.mxu0 0.0
        %3814 = vmatpush1.msra.mxu0 0.0
        %3815 = vmatprep.subr.mxu0 0.0
        %3816 = vmatpush1.msra.mxu0 0.0
        %3817 = vmatprep.subr.mxu0 %v3779
        %3818 = vmatpush1.msra.mxu0 %v3778
        %3819 = vmatprep.subr.mxu0 %v3775
        %3820 = vmatpush1.msra.mxu0 %v3774
        %3821 = vmatprep.subr.mxu0 %v3771
        %3822 = vmatpush1.msra.mxu0 %v3770
        %3823 = vmatprep.subr.mxu0 %v3767
        %3824 = vmatpush1.msra.mxu0 %v3766
        %3825 = vmatprep.subr.mxu0 %v3763
        %3826 = vmatpush1.msra.mxu0 %v3762
        %3827 = vmatprep.subr.mxu0 %v3759
        %3828 = vmatpush1.msra.mxu0 %v3758
        %3829 = vmatprep.subr.mxu0 %v3755
        %3830 = vmatpush1.msra.mxu0 %v3754
        %3831 = vmatprep.subr.mxu0 0.0
        %3832 = vmatpush2.msra.mxu0 0.0
        %3833 = vmatprep.subr.mxu0 0.0
        %3834 = vmatpush2.msra.mxu0 0.0
        %3835 = vmatprep.subr.mxu0 0.0
        %3836 = vmatpush2.msra.mxu0 0.0
        %3837 = vmatprep.subr.mxu0 0.0
        %3838 = vmatpush2.msra.mxu0 0.0
        %3839 = vmatprep.subr.mxu0 0.0
        %3840 = vmatpush2.msra.mxu0 0.0
        %3841 = vmatprep.subr.mxu0 0.0
        %3842 = vmatpush2.msra.mxu0 0.0
        %3843 = vmatprep.subr.mxu0 0.0
        %3844 = vmatpush2.msra.mxu0 0.0
        %3845 = vmatprep.subr.mxu0 0.0
        %3846 = vmatpush2.msra.mxu0 0.0
        %3847 = vmatprep.subr.mxu0 0.0
        %3848 = vmatpush2.msra.mxu0 0.0
        %3849 = vmatprep.subr.mxu0 0.0
        %3850 = vmatpush2.msra.mxu0 0.0
        %3851 = vmatprep.subr.mxu0 0.0
        %3852 = vmatpush2.msra.mxu0 0.0
        %3853 = vmatprep.subr.mxu0 0.0
        %3854 = vmatpush2.msra.mxu0 0.0
        %3855 = vmatprep.subr.mxu0 0.0
        %3856 = vmatpush2.msra.mxu0 0.0
        %3857 = vmatprep.subr.mxu0 0.0
        %3858 = vmatpush2.msra.mxu0 0.0
        %3859 = vmatprep.subr.mxu0 0.0
        %3860 = vmatpush2.msra.mxu0 0.0
        %3861 = vmatprep.subr.mxu0 0.0
        %3862 = vmatpush2.msra.mxu0 0.0
        %3863 = vmatprep.mubr.f32.mxu0 0.0
        %3864 = vmatmul.mubr.f32.gmra.mxu0 %v3794
        %v3865 = vpop.f32.mrf.mxu0
        %v3866 = vadd.f32 %v3785, %v3865
        %v3867 = vpop.f32.mrf.mxu0
        %v3868 = vadd.f32 %v3785, %v3867
        %3869 = vmatprep.mubr.f32.mxu0 0.0
        %3870 = vmatmul.mubr.f32.gmra.mxu0 %v3797
        %v3871 = vpop.f32.mrf.mxu0
        %v3872 = vadd.f32 %v3790, %v3871
        %v3873 = vpop.f32.mrf.mxu0
        %v3874 = vadd.f32 %v3790, %v3873
        %3875 = vdwg.mxu0
        %3876 = vmatprep.subr.mxu0 0.0
        %3877 = vmatpush1.msra.mxu0 0.0
        %3878 = vmatprep.subr.mxu0 0.0
        %3879 = vmatpush1.msra.mxu0 0.0
        %3880 = vmatprep.subr.mxu0 0.0
        %3881 = vmatpush1.msra.mxu0 0.0
        %3882 = vmatprep.subr.mxu0 0.0
        %3883 = vmatpush1.msra.mxu0 0.0
        %3884 = vmatprep.subr.mxu0 0.0
        %3885 = vmatpush1.msra.mxu0 0.0
        %3886 = vmatprep.subr.mxu0 0.0
        %3887 = vmatpush1.msra.mxu0 0.0
        %3888 = vmatprep.subr.mxu0 0.0
        %3889 = vmatpush1.msra.mxu0 0.0
        %3890 = vmatprep.subr.mxu0 0.0
        %3891 = vmatpush1.msra.mxu0 0.0
        %3892 = vmatprep.subr.mxu0 0.0
        %3893 = vmatpush1.msra.mxu0 0.0
        %3894 = vmatprep.subr.mxu0 %v3781
        %3895 = vmatpush1.msra.mxu0 %v3780
        %3896 = vmatprep.subr.mxu0 %v3777
        %3897 = vmatpush1.msra.mxu0 %v3776
        %3898 = vmatprep.subr.mxu0 %v3773
        %3899 = vmatpush1.msra.mxu0 %v3772
        %3900 = vmatprep.subr.mxu0 %v3769
        %3901 = vmatpush1.msra.mxu0 %v3768
        %3902 = vmatprep.subr.mxu0 %v3765
        %3903 = vmatpush1.msra.mxu0 %v3764
        %3904 = vmatprep.subr.mxu0 %v3761
        %3905 = vmatpush1.msra.mxu0 %v3760
        %3906 = vmatprep.subr.mxu0 %v3757
        %3907 = vmatpush1.msra.mxu0 %v3756
        %3908 = vmatprep.subr.mxu0 0.0
        %3909 = vmatpush2.msra.mxu0 0.0
        %3910 = vmatprep.subr.mxu0 0.0
        %3911 = vmatpush2.msra.mxu0 0.0
        %3912 = vmatprep.subr.mxu0 0.0
        %3913 = vmatpush2.msra.mxu0 0.0
        %3914 = vmatprep.subr.mxu0 0.0
        %3915 = vmatpush2.msra.mxu0 0.0
        %3916 = vmatprep.subr.mxu0 0.0
        %3917 = vmatpush2.msra.mxu0 0.0
        %3918 = vmatprep.subr.mxu0 0.0
        %3919 = vmatpush2.msra.mxu0 0.0
        %3920 = vmatprep.subr.mxu0 0.0
        %3921 = vmatpush2.msra.mxu0 0.0
        %3922 = vmatprep.subr.mxu0 0.0
        %3923 = vmatpush2.msra.mxu0 0.0
        %3924 = vmatprep.subr.mxu0 0.0
        %3925 = vmatpush2.msra.mxu0 0.0
        %3926 = vmatprep.subr.mxu0 0.0
        %3927 = vmatpush2.msra.mxu0 0.0
        %3928 = vmatprep.subr.mxu0 0.0
        %3929 = vmatpush2.msra.mxu0 0.0
        %3930 = vmatprep.subr.mxu0 0.0
        %3931 = vmatpush2.msra.mxu0 0.0
        %3932 = vmatprep.subr.mxu0 0.0
        %3933 = vmatpush2.msra.mxu0 0.0
        %3934 = vmatprep.subr.mxu0 0.0
        %3935 = vmatpush2.msra.mxu0 0.0
        %3936 = vmatprep.subr.mxu0 0.0
        %3937 = vmatpush2.msra.mxu0 0.0
        %3938 = vmatprep.subr.mxu0 0.0
        %3939 = vmatpush2.msra.mxu0 0.0
        %3940 = vmatprep.mubr.f32.mxu0 0.0
        %3941 = vmatmul.mubr.f32.gmra.mxu0 %v3794
        %v3942 = vpop.f32.mrf.mxu0
        %v3943 = vadd.f32 %v3785, %v3942
        %v3944 = vpop.f32.mrf.mxu0
        %v3945 = vadd.f32 %v3785, %v3944
        %3946 = vmatprep.mubr.f32.mxu0 0.0
        %3947 = vmatmul.mubr.f32.gmra.mxu0 %v3797
        %v3948 = vpop.f32.mrf.mxu0
        %v3949 = vadd.f32 %v3790, %v3948
        %v3950 = vpop.f32.mrf.mxu0
        %v3951 = vadd.f32 %v3790, %v3950
        %3952 = vdwg.mxu0
        %v3953 = vmax.f32 %v3866, 0.0
        %v3954 = vmax.f32 %v3868, 0.0
        %v3955 = vmax.f32 %v3943, 0.0
        %v3956 = vmax.f32 %v3945, 0.0
        %v3957 = vmax.f32 %v3872, 0.0
        %v3958 = vmax.f32 %v3874, 0.0
        %v3959 = vmax.f32 %v3949, 0.0
        %v3960 = vmax.f32 %v3951, 0.0
        %3961 = vst [vmem:[%s390] sm:$0xff] %v3953
        %3962 = vst [vmem:[%s390 + $0x8] sm:$0xff] %v3954
        %3963 = vst [vmem:[%s390 + $0x10] sm:$0xff] %v3955
        %3964 = vst [vmem:[%s390 + $0x18] sm:$0xff] %v3956
        %3965 = vst [vmem:[%s390 + $0x20] sm:$0xff] %v3957
        %3966 = vst [vmem:[%s390 + $0x28] sm:$0xff] %v3958
        %3967 = vst [vmem:[%s390 + $0x30] sm:$0xff] %v3959
        %3968 = vst [vmem:[%s390 + $0x38] sm:$0xff] %v3960
        %s3969 = sand.u32 %s230, 1
        %s3970 = scalar_lea.sflag [#allocation5], %s3969
        %s3971 = sand.u32 %s230, 1
        %s3972 = smul.addr %s3971, 64
        %s3973 = scalar_lea.vmem [#allocation11], %s3972
        // Predicated region
        $region73: #{tpu_custom_call.1} parent=55 // pred_check
          %p3974 = pneg %p240
        $region74: #{tpu_custom_call.1} parent=55 // pred_check_branch
          %3976 = sbr.rel (%p3974) target = $region76
        $region75: #{tpu_custom_call.1} parent=55 // pred_region
          %s3978 = ssub.s32 1024, 1024
          %3979 = vsyncadd %s3970, %s3978
          %s3980 = smul.addr %s28, 8
          %s3981 = smul.addr %s3980, 128
          %s3982 = scalar_lea.hbm %s9, %s3981
          %s3983 = sshll.u32 %s3973, 4
          %s3984 = int_to_ptr.vmem [resolvable:$true] %s3983
          %3989 = dma.vmem_to_hbm [thread:$0]  %s3984, 1024, %s3982, %s3970, 512, 512, 32
        $region76: #{tpu_custom_call.1} parent=55 // pred_fallthru
          _
      $region56: #{tpu_custom_call.1} parent=5 // pred_fallthru
        _
      %p3990 = scmp.le.s32.totalorder 2, %s23
      // Predicated region
      $region77: #{tpu_custom_call.1} parent=5 // pred_check
        %p3991 = pneg %p3990
      $region78: #{tpu_custom_call.1} parent=5 // pred_check_branch
        %3993 = sbr.rel (%p3991) target = $region80
      $region79: #{tpu_custom_call.1} parent=5 // pred_region
        %s3994 = ssub.s32 %s23, 2
        // Predicated region
        $region81: #{tpu_custom_call.1} parent=79 // pred_check
          %p3995 = pneg %p246
        $region82: #{tpu_custom_call.1} parent=79 // pred_check_branch
          %3997 = sbr.rel (%p3995) target = $region84
        $region83: #{tpu_custom_call.1} parent=79 // pred_region
          %s3998 = sand.u32 %s231, 1
          %s3999 = scalar_lea.sflag [#allocation5], %s3998
          %s4000 = sand.u32 %s231, 1
          %s4001 = smul.addr %s4000, 64
          %s4002 = scalar_lea.vmem [#allocation11], %s4001
          %4003 = dma.done %s3999, 1024
        $region84: #{tpu_custom_call.1} parent=79 // pred_fallthru
          _
      $region80: #{tpu_custom_call.1} parent=5 // pred_fallthru
        _
    $region6: #{tpu_custom_call.1} parent=1 // loop_footer
      %s27 = sadd.s32 1, %s23
    $region7: #{tpu_custom_call.1} parent=1 // loop_footer_branch
      %22 = sbr.rel target = $region3
    $region8: #{tpu_custom_call.1} parent=1 // loop_exit
      _
    %4004 = vsyncpa [#allocation4], 1
    %s4005 = scalar_lea.sflag [#allocation4], 1
    %4006 = vsyncpa %s4005, 1
    %4007 = vsyncpa [#allocation7], 1
    %4008 = vsyncpa [#allocation10], 1
    %4009 = vsyncpa [#allocation5], 1
    %s4010 = scalar_lea.sflag [#allocation5], 1
    %4011 = vsyncpa %s4010, 1

</llo_original>
